<compile_context>
chip_gen: v7x
topology: tpu7x:2x2x1
jax: 0.10.0
libtpu: 0.0.40
codegen_flags: <defaults>
</compile_context>

<pallas_src>
import jax
import jax.numpy as jnp
from jax.experimental import pallas as pl
from jax.experimental.pallas import tpu as pltpu

# ---------------- small synthetic CLIP vision config ----------------
IMAGE_SIZE = 16
PATCH_SIZE = 8
CHANNELS = 3
HIDDEN = 32
HEADS = 4
HEAD_DIM = HIDDEN // HEADS
INTERMEDIATE = 64
NUM_LAYERS = 3
SELECT_LAYER = -2            # args.mm_vision_select_layer
SELECT_FEATURE = "patch"     # args.mm_vision_select_feature
NUM_PATCHES = (IMAGE_SIZE // PATCH_SIZE) ** 2
SEQ = NUM_PATCHES + 1
PATCH_DIM = CHANNELS * PATCH_SIZE * PATCH_SIZE
LN_EPS = 1e-5

# hidden_states has NUM_LAYERS+1 entries (index 0 = embeddings). Only this many
# encoder layers are needed to produce hidden_states[SELECT_LAYER].
LAYERS_USED = (NUM_LAYERS + 1 + SELECT_LAYER) if SELECT_LAYER < 0 else SELECT_LAYER
OUT_ROWS = NUM_PATCHES if SELECT_FEATURE == "patch" else SEQ


# ---------------- fused Pallas kernel ----------------
def _ln(x, g, b):
    # x: (S, D); g, b: (1, D)
    mu = jnp.mean(x, axis=-1, keepdims=True)
    var = jnp.mean((x - mu) ** 2, axis=-1, keepdims=True)
    return (x - mu) * jax.lax.rsqrt(var + LN_EPS) * g + b


def _split_heads(x):
    # (S, HIDDEN) -> (HEADS, S, HEAD_DIM) via static lane slices stacked along the
    # (cheap) major axis -- avoids a lane-splitting reshape.
    return jnp.concatenate(
        [x[None, :, h * HEAD_DIM:(h + 1) * HEAD_DIM] for h in range(HEADS)], axis=0)


def fused_tower_kernel(tokens_ref, w_patch_ref, pos_cls_ref, pre_g_ref, pre_b_ref,
                       ln1_g_ref, ln1_b_ref, wqkv_ref, bqkv_ref, wo_ref, bo_ref,
                       ln2_g_ref, ln2_b_ref, w1_ref, b1_ref, w2_ref, b2_ref,
                       out_ref):
    # ---- embeddings: one dense matmul + one LayerNorm, single store path ----
    tokens = tokens_ref[0]                                  # (SEQ, PATCH_DIM); row 0 = zeros (CLS slot)
    emb = jnp.dot(tokens, w_patch_ref[...],
                  preferred_element_type=jnp.float32) + pos_cls_ref[...]   # CLS folded into pos row 0
    h = _ln(emb, pre_g_ref[...], pre_b_ref[...])            # CLIP pre-LayerNorm -> hidden_states[0]

    scale = HEAD_DIM ** -0.5
    for l in range(LAYERS_USED):                            # only layers whose output is used
        # ---- self-attention block (pre-LN, fused QKV, batched heads) ----
        x = _ln(h, ln1_g_ref[l], ln1_b_ref[l])
        qkv = jnp.dot(x, wqkv_ref[l], preferred_element_type=jnp.float32) + bqkv_ref[l]
        q = qkv[:, 0:HIDDEN] * scale
        k = qkv[:, HIDDEN:2 * HIDDEN]
        v = qkv[:, 2 * HIDDEN:3 * HIDDEN]
        qh, kh, vh = _split_heads(q), _split_heads(k), _split_heads(v)   # (H, S, hd)

        s = jnp.einsum("hqd,hkd->hqk", qh, kh, preferred_element_type=jnp.float32)
        s = s - jnp.max(s, axis=-1, keepdims=True)
        p = jnp.exp(s)
        p = p * pl.reciprocal(jnp.sum(p, axis=-1, keepdims=True), approx=True)
        ctx = jnp.einsum("hqk,hkd->hqd", p, vh, preferred_element_type=jnp.float32)
        ctx2d = jnp.concatenate([ctx[hh] for hh in range(HEADS)], axis=-1)           # (S, D)

        h = h + jnp.dot(ctx2d, wo_ref[l], preferred_element_type=jnp.float32) + bo_ref[l]

        # ---- MLP block (pre-LN, quick_gelu) ----
        x = _ln(h, ln2_g_ref[l], ln2_b_ref[l])
        m = jnp.dot(x, w1_ref[l], preferred_element_type=jnp.float32) + b1_ref[l]
        m = m * jax.nn.sigmoid(1.702 * m)                   # quick_gelu
        h = h + jnp.dot(m, w2_ref[l], preferred_element_type=jnp.float32) + b2_ref[l]

    sel = h[1:, :] if SELECT_FEATURE == "patch" else h
    out_ref[...] = sel[None]


# ---------------- pallas_call wrapper ----------------
def _const_spec(shape):
    n = len(shape)
    return pl.BlockSpec(shape, lambda b, _n=n: (0,) * _n)


def _pack_kernel_params(params):
    """Fold/stack the per-layer params into a few VMEM-resident arrays for the kernel."""
    ep = params["embed"]
    layers = params["layers"][:LAYERS_USED]

    def stack(fn):
        return jnp.stack([fn(lp) for lp in layers], axis=0)

    # CLS embedding folded into row 0 of the positional table (row-0 pixels are zero).
    pos_cls = ep["pos"].at[0].add(ep["cls"][0])

    ln1_g = stack(lambda lp: lp["ln1_g"][None, :])                                   # (L, 1, H)
    ln1_b = stack(lambda lp: lp["ln1_b"][None, :])
    wqkv = stack(lambda lp: jnp.concatenate([lp["wq"], lp["wk"], lp["wv"]], axis=1))  # (L, H, 3H)
    bqkv = stack(lambda lp: jnp.concatenate([lp["bq"], lp["bk"], lp["bv"]], axis=0)[None, :])
    wo = stack(lambda lp: lp["wo"])
    bo = stack(lambda lp: lp["bo"][None, :])
    ln2_g = stack(lambda lp: lp["ln2_g"][None, :])
    ln2_b = stack(lambda lp: lp["ln2_b"][None, :])
    w1 = stack(lambda lp: lp["w1"])
    b1 = stack(lambda lp: lp["b1"][None, :])
    w2 = stack(lambda lp: lp["w2"])
    b2 = stack(lambda lp: lp["b2"][None, :])

    return [ep["w_patch"], pos_cls, ep["pre_g"], ep["pre_b"],
            ln1_g, ln1_b, wqkv, bqkv, wo, bo, ln2_g, ln2_b, w1, b1, w2, b2]


def _forward_batch(images, params):
    patches = patchify(images.astype(jnp.float32))                      # (B, Np, C*P*P)
    B = patches.shape[0]
    # Prepend a zero row (CLS slot) so the embed matmul covers all SEQ rows at once.
    tokens = jnp.concatenate(
        [jnp.zeros((B, 1, PATCH_DIM), jnp.float32), patches], axis=1)   # (B, SEQ, C*P*P)

    kparams = _pack_kernel_params(params)
    ins = [tokens] + kparams
    in_specs = [pl.BlockSpec((1, SEQ, PATCH_DIM), lambda b: (b, 0, 0))] + \
               [_const_spec(x.shape) for x in kparams]

    return pl.pallas_call(
        fused_tower_kernel,
        out_shape=jax.ShapeDtypeStruct((B, OUT_ROWS, HIDDEN), jnp.float32),
        grid=(B,),
        in_specs=in_specs,
        out_specs=pl.BlockSpec((1, OUT_ROWS, HIDDEN), lambda b: (b, 0, 0)),
        compiler_params=pltpu.CompilerParams(dimension_semantics=("parallel",)),
    )(*ins)


# ---------------- glue: patchify, params, forward ----------------
def patchify(images):
    # NCHW -> (B, num_patches, C*P*P), flattened in (C, Ph, Pw) order to match the
    # flattening of the PyTorch conv weight (D, C, P, P).
    B, C, H, W = images.shape
    P = PATCH_SIZE
    x = images.reshape(B, C, H // P, P, W // P, P)
    x = x.transpose(0, 2, 4, 1, 3, 5)                       # (B, Hp, Wp, C, P, P)
    return x.reshape(B, (H // P) * (W // P), C * P * P)


def init_params(key):
    kit = iter(jax.random.split(key, 8 + 16 * NUM_LAYERS))

    def nrm(shape, scale=0.02):
        return (scale * jax.random.normal(next(kit), shape)).astype(jnp.float32)

    conv_w = nrm((HIDDEN, CHANNELS, PATCH_SIZE, PATCH_SIZE))   # PyTorch Conv2d weight layout
    embed = dict(
        w_patch=conv_w.reshape(HIDDEN, PATCH_DIM).T,           # (C*P*P, D), conv as matmul
        cls=nrm((1, HIDDEN)),
        pos=nrm((SEQ, HIDDEN)),
        pre_g=(1.0 + nrm((1, HIDDEN))),
        pre_b=nrm((1, HIDDEN)),
    )
    layers = []
    for _ in range(NUM_LAYERS):
        layers.append(dict(
            wq=nrm((HIDDEN, HIDDEN)), bq=nrm((HIDDEN,)),
            wk=nrm((HIDDEN, HIDDEN)), bk=nrm((HIDDEN,)),
            wv=nrm((HIDDEN, HIDDEN)), bv=nrm((HIDDEN,)),
            wo=nrm((HIDDEN, HIDDEN)), bo=nrm((HIDDEN,)),
            ln1_g=(1.0 + nrm((HIDDEN,))), ln1_b=nrm((HIDDEN,)),
            ln2_g=(1.0 + nrm((HIDDEN,))), ln2_b=nrm((HIDDEN,)),
            w1=nrm((HIDDEN, INTERMEDIATE)), b1=nrm((INTERMEDIATE,)),
            w2=nrm((INTERMEDIATE, HIDDEN)), b2=nrm((HIDDEN,)),
        ))
    return dict(embed=embed, layers=layers)


def clip_vision_tower_forward(images, params, text=None):
    # TODO(synk): 'quecc' compression path (CLIP text tower + LLM tokenizer / hidden-state
    # gather on `text`) has no clean in-kernel equivalent here and is not implemented.
    if isinstance(images, (list, tuple)):
        batch = jnp.concatenate([img[None].astype(jnp.float32) for img in images], axis=0)
        feats = _forward_batch(batch, params)               # one batched kernel chain
        return [feats[i:i + 1].astype(images[i].dtype) for i in range(len(images))]
    feats = _forward_batch(images, params)
    return feats.astype(images.dtype)


# ---------------- independent pure-JAX reference (HF-CLIP style math) ----------------
def _ref_layer_norm(x, g, b):                               # g, b: (D,)
    mu = x.mean(axis=-1, keepdims=True)
    var = ((x - mu) ** 2).mean(axis=-1, keepdims=True)
    return (x - mu) / jnp.sqrt(var + LN_EPS) * g + b


def reference_forward(images, params):
    patches = patchify(images.astype(jnp.float32))
    B = patches.shape[0]
    ep = params["embed"]
    pe = jnp.einsum("bnp,pd->bnd", patches, ep["w_patch"])
    cls_tok = jnp.broadcast_to(ep["cls"][None], (B, 1, HIDDEN))
    h = jnp.concatenate([cls_tok, pe], axis=1) + ep["pos"][None]
    h = _ref_layer_norm(h, ep["pre_g"][0], ep["pre_b"][0])
    states = [h]
    scale = HEAD_DIM ** -0.5
    for lp in params["layers"]:                              # ALL layers, as in the module
        x = _ref_layer_norm(h, lp["ln1_g"], lp["ln1_b"])
        q = (x @ lp["wq"] + lp["bq"]) * scale
        k = x @ lp["wk"] + lp["bk"]
        v = x @ lp["wv"] + lp["bv"]
        heads = []
        for hh in range(HEADS):
            sl = slice(hh * HEAD_DIM, (hh + 1) * HEAD_DIM)
            s = jnp.einsum("bqd,bkd->bqk", q[..., sl], k[..., sl])
            pr = jax.nn.softmax(s, axis=-1)
            heads.append(jnp.einsum("bqk,bkd->bqd", pr, v[..., sl]))
        ctx = jnp.concatenate(heads, axis=-1)
        h = h + (ctx @ lp["wo"] + lp["bo"])
        x = _ref_layer_norm(h, lp["ln2_g"], lp["ln2_b"])
        m = x @ lp["w1"] + lp["b1"]
        m = m * jax.nn.sigmoid(1.702 * m)
        h = h + (m @ lp["w2"] + lp["b2"])
        states.append(h)
    feats = states[SELECT_LAYER]
    if SELECT_FEATURE == "patch":
        feats = feats[:, 1:]
    return feats.astype(images.dtype)


if __name__ == "__main__":
    key = jax.random.PRNGKey(0)
    pkey, ikey = jax.random.split(key)
    params = init_params(pkey)
    images = jax.random.normal(ikey, (2, CHANNELS, IMAGE_SIZE, IMAGE_SIZE), dtype=jnp.float32)

    feats = clip_vision_tower_forward(images, params)
    feats = jax.block_until_ready(feats)
    assert feats.shape == (2, NUM_PATCHES, HIDDEN), feats.shape

    ref = reference_forward(images, params)
    err = float(jnp.max(jnp.abs(feats - ref)))
    assert jnp.allclose(feats, ref, atol=2e-3, rtol=2e-3), err

    # list-of-images path: stacked into one batched launch, returns per-image features.
    feats_list = clip_vision_tower_forward([images[0], images[1]], params)
    feats_list = jax.block_until_ready(feats_list)
    assert len(feats_list) == 2 and feats_list[0].shape == (1, NUM_PATCHES, HIDDEN)
    assert jnp.allclose(jnp.concatenate(feats_list, axis=0), ref, atol=2e-3, rtol=2e-3)

    print("KERNEL_OK")
</pallas_src>

<mosaic_0001>
module attributes {stable_mosaic.version = 11 : i64} {
  func.func @fused_tower_kernel(%arg0: i32, %arg1: memref<1x5x192xf32, #tpu.memory_space<vmem>>, %arg2: memref<192x32xf32, #tpu.memory_space<vmem>>, %arg3: memref<5x32xf32, #tpu.memory_space<vmem>>, %arg4: memref<1x32xf32, #tpu.memory_space<vmem>>, %arg5: memref<1x32xf32, #tpu.memory_space<vmem>>, %arg6: memref<2x1x32xf32, #tpu.memory_space<vmem>>, %arg7: memref<2x1x32xf32, #tpu.memory_space<vmem>>, %arg8: memref<2x32x96xf32, #tpu.memory_space<vmem>>, %arg9: memref<2x1x96xf32, #tpu.memory_space<vmem>>, %arg10: memref<2x32x32xf32, #tpu.memory_space<vmem>>, %arg11: memref<2x1x32xf32, #tpu.memory_space<vmem>>, %arg12: memref<2x1x32xf32, #tpu.memory_space<vmem>>, %arg13: memref<2x1x32xf32, #tpu.memory_space<vmem>>, %arg14: memref<2x32x64xf32, #tpu.memory_space<vmem>>, %arg15: memref<2x1x64xf32, #tpu.memory_space<vmem>>, %arg16: memref<2x64x32xf32, #tpu.memory_space<vmem>>, %arg17: memref<2x1x32xf32, #tpu.memory_space<vmem>>, %arg18: memref<1x4x32xf32, #tpu.memory_space<vmem>>) attributes {dimension_semantics = [#tpu.dimension_semantics<parallel>], iteration_bounds = array<i64: 2>, scalar_prefetch = 0 : i64, scratch_operands = 0 : i64, tpu.core_type = #tpu.core_type<tc>, window_params = [{transform_indices = @transform_0, window_bounds = array<i64: 1, 5, 192>}, {pipeline_mode = #tpu.pipeline_mode<synchronous>, transform_indices = @transform_1, window_bounds = array<i64: 192, 32>}, {pipeline_mode = #tpu.pipeline_mode<synchronous>, transform_indices = @transform_2, window_bounds = array<i64: 5, 32>}, {pipeline_mode = #tpu.pipeline_mode<synchronous>, transform_indices = @transform_3, window_bounds = array<i64: 1, 32>}, {pipeline_mode = #tpu.pipeline_mode<synchronous>, transform_indices = @transform_4, window_bounds = array<i64: 1, 32>}, {pipeline_mode = #tpu.pipeline_mode<synchronous>, transform_indices = @transform_5, window_bounds = array<i64: 2, 1, 32>}, {pipeline_mode = #tpu.pipeline_mode<synchronous>, transform_indices = @transform_6, window_bounds = array<i64: 2, 1, 32>}, {pipeline_mode = #tpu.pipeline_mode<synchronous>, transform_indices = @transform_7, window_bounds = array<i64: 2, 32, 96>}, {pipeline_mode = #tpu.pipeline_mode<synchronous>, transform_indices = @transform_8, window_bounds = array<i64: 2, 1, 96>}, {pipeline_mode = #tpu.pipeline_mode<synchronous>, transform_indices = @transform_9, window_bounds = array<i64: 2, 32, 32>}, {pipeline_mode = #tpu.pipeline_mode<synchronous>, transform_indices = @transform_10, window_bounds = array<i64: 2, 1, 32>}, {pipeline_mode = #tpu.pipeline_mode<synchronous>, transform_indices = @transform_11, window_bounds = array<i64: 2, 1, 32>}, {pipeline_mode = #tpu.pipeline_mode<synchronous>, transform_indices = @transform_12, window_bounds = array<i64: 2, 1, 32>}, {pipeline_mode = #tpu.pipeline_mode<synchronous>, transform_indices = @transform_13, window_bounds = array<i64: 2, 32, 64>}, {pipeline_mode = #tpu.pipeline_mode<synchronous>, transform_indices = @transform_14, window_bounds = array<i64: 2, 1, 64>}, {pipeline_mode = #tpu.pipeline_mode<synchronous>, transform_indices = @transform_15, window_bounds = array<i64: 2, 64, 32>}, {pipeline_mode = #tpu.pipeline_mode<synchronous>, transform_indices = @transform_16, window_bounds = array<i64: 2, 1, 32>}, {transform_indices = @transform_17, window_bounds = array<i64: 1, 4, 32>}]} {
    %c0 = arith.constant 0 : index
    %c0_0 = arith.constant 0 : index
    %c0_1 = arith.constant 0 : index
    %0 = vector.load %arg1[%c0, %c0_0, %c0_1] : memref<1x5x192xf32, #tpu.memory_space<vmem>>, vector<1x5x192xf32>
    %1 = vector.shape_cast %0 : vector<1x5x192xf32> to vector<5x192xf32>
    %c0_2 = arith.constant 0 : index
    %c0_3 = arith.constant 0 : index
    %2 = vector.load %arg2[%c0_2, %c0_3] : memref<192x32xf32, #tpu.memory_space<vmem>>, vector<192x32xf32>
    %cst = arith.constant dense<0.000000e+00> : vector<5x32xf32>
    %3 = tpu.matmul %1, %2, %cst {dimension_numbers = #tpu.dot_dimension_numbers<[1], [0], [0], [1], [0, 0, 1, 1], [], []>} : vector<5x192xf32>, vector<192x32xf32>, vector<5x32xf32> -> vector<5x32xf32>
    %c0_4 = arith.constant 0 : index
    %c0_5 = arith.constant 0 : index
    %4 = vector.load %arg3[%c0_4, %c0_5] : memref<5x32xf32, #tpu.memory_space<vmem>>, vector<5x32xf32>
    %5 = arith.addf %3, %4 : vector<5x32xf32>
    %c0_6 = arith.constant 0 : index
    %c0_7 = arith.constant 0 : index
    %6 = vector.load %arg4[%c0_6, %c0_7] : memref<1x32xf32, #tpu.memory_space<vmem>>, vector<1x32xf32>
    %c0_8 = arith.constant 0 : index
    %c0_9 = arith.constant 0 : index
    %7 = vector.load %arg5[%c0_8, %c0_9] : memref<1x32xf32, #tpu.memory_space<vmem>>, vector<1x32xf32>
    %cst_10 = arith.constant dense<0.000000e+00> : vector<5xf32>
    %8 = vector.multi_reduction <add>, %5, %cst_10 [1] : vector<5x32xf32> to vector<5xf32>
    %9 = vector.shape_cast %8 : vector<5xf32> to vector<5x1xf32>
    %cst_11 = arith.constant 3.200000e+01 : f32
    %10 = vector.broadcast %cst_11 : f32 to vector<5x1xf32>
    %11 = arith.divf %9, %10 : vector<5x1xf32>
    %12 = vector.broadcast %11 : vector<5x1xf32> to vector<5x32xf32>
    %13 = arith.subf %5, %12 : vector<5x32xf32>
    %14 = arith.mulf %13, %13 : vector<5x32xf32>
    %cst_12 = arith.constant dense<0.000000e+00> : vector<5xf32>
    %15 = vector.multi_reduction <add>, %14, %cst_12 [1] : vector<5x32xf32> to vector<5xf32>
    %16 = vector.shape_cast %15 : vector<5xf32> to vector<5x1xf32>
    %cst_13 = arith.constant 3.200000e+01 : f32
    %17 = vector.broadcast %cst_13 : f32 to vector<5x1xf32>
    %18 = arith.divf %16, %17 : vector<5x1xf32>
    %19 = vector.broadcast %11 : vector<5x1xf32> to vector<5x32xf32>
    %20 = arith.subf %5, %19 : vector<5x32xf32>
    %cst_14 = arith.constant 9.99999974E-6 : f32
    %21 = vector.broadcast %cst_14 : f32 to vector<5x1xf32>
    %22 = arith.addf %18, %21 : vector<5x1xf32>
    %23 = math.rsqrt %22 : vector<5x1xf32>
    %24 = vector.broadcast %23 : vector<5x1xf32> to vector<5x32xf32>
    %25 = arith.mulf %20, %24 : vector<5x32xf32>
    %26 = vector.broadcast %6 : vector<1x32xf32> to vector<5x32xf32>
    %27 = arith.mulf %25, %26 : vector<5x32xf32>
    %28 = vector.broadcast %7 : vector<1x32xf32> to vector<5x32xf32>
    %29 = arith.addf %27, %28 : vector<5x32xf32>
    %c0_15 = arith.constant 0 : index
    %c0_16 = arith.constant 0 : index
    %c0_17 = arith.constant 0 : index
    %30 = vector.load %arg6[%c0_15, %c0_16, %c0_17] : memref<2x1x32xf32, #tpu.memory_space<vmem>>, vector<1x1x32xf32>
    %31 = vector.shape_cast %30 : vector<1x1x32xf32> to vector<1x32xf32>
    %c0_18 = arith.constant 0 : index
    %c0_19 = arith.constant 0 : index
    %c0_20 = arith.constant 0 : index
    %32 = vector.load %arg7[%c0_18, %c0_19, %c0_20] : memref<2x1x32xf32, #tpu.memory_space<vmem>>, vector<1x1x32xf32>
    %33 = vector.shape_cast %32 : vector<1x1x32xf32> to vector<1x32xf32>
    %cst_21 = arith.constant dense<0.000000e+00> : vector<5xf32>
    %34 = vector.multi_reduction <add>, %29, %cst_21 [1] : vector<5x32xf32> to vector<5xf32>
    %35 = vector.shape_cast %34 : vector<5xf32> to vector<5x1xf32>
    %cst_22 = arith.constant 3.200000e+01 : f32
    %36 = vector.broadcast %cst_22 : f32 to vector<5x1xf32>
    %37 = arith.divf %35, %36 : vector<5x1xf32>
    %38 = vector.broadcast %37 : vector<5x1xf32> to vector<5x32xf32>
    %39 = arith.subf %29, %38 : vector<5x32xf32>
    %40 = arith.mulf %39, %39 : vector<5x32xf32>
    %cst_23 = arith.constant dense<0.000000e+00> : vector<5xf32>
    %41 = vector.multi_reduction <add>, %40, %cst_23 [1] : vector<5x32xf32> to vector<5xf32>
    %42 = vector.shape_cast %41 : vector<5xf32> to vector<5x1xf32>
    %cst_24 = arith.constant 3.200000e+01 : f32
    %43 = vector.broadcast %cst_24 : f32 to vector<5x1xf32>
    %44 = arith.divf %42, %43 : vector<5x1xf32>
    %45 = vector.broadcast %37 : vector<5x1xf32> to vector<5x32xf32>
    %46 = arith.subf %29, %45 : vector<5x32xf32>
    %cst_25 = arith.constant 9.99999974E-6 : f32
    %47 = vector.broadcast %cst_25 : f32 to vector<5x1xf32>
    %48 = arith.addf %44, %47 : vector<5x1xf32>
    %49 = math.rsqrt %48 : vector<5x1xf32>
    %50 = vector.broadcast %49 : vector<5x1xf32> to vector<5x32xf32>
    %51 = arith.mulf %46, %50 : vector<5x32xf32>
    %52 = vector.broadcast %31 : vector<1x32xf32> to vector<5x32xf32>
    %53 = arith.mulf %51, %52 : vector<5x32xf32>
    %54 = vector.broadcast %33 : vector<1x32xf32> to vector<5x32xf32>
    %55 = arith.addf %53, %54 : vector<5x32xf32>
    %c0_26 = arith.constant 0 : index
    %c0_27 = arith.constant 0 : index
    %c0_28 = arith.constant 0 : index
    %56 = vector.load %arg8[%c0_26, %c0_27, %c0_28] : memref<2x32x96xf32, #tpu.memory_space<vmem>>, vector<1x32x96xf32>
    %57 = vector.shape_cast %56 : vector<1x32x96xf32> to vector<32x96xf32>
    %cst_29 = arith.constant dense<0.000000e+00> : vector<5x96xf32>
    %58 = tpu.matmul %55, %57, %cst_29 {dimension_numbers = #tpu.dot_dimension_numbers<[1], [0], [0], [1], [0, 0, 1, 1], [], []>} : vector<5x32xf32>, vector<32x96xf32>, vector<5x96xf32> -> vector<5x96xf32>
    %c0_30 = arith.constant 0 : index
    %c0_31 = arith.constant 0 : index
    %c0_32 = arith.constant 0 : index
    %59 = vector.load %arg9[%c0_30, %c0_31, %c0_32] : memref<2x1x96xf32, #tpu.memory_space<vmem>>, vector<1x1x96xf32>
    %60 = vector.shape_cast %59 : vector<1x1x96xf32> to vector<1x96xf32>
    %61 = vector.broadcast %60 : vector<1x96xf32> to vector<5x96xf32>
    %62 = arith.addf %58, %61 : vector<5x96xf32>
    %63 = vector.extract_strided_slice %62 {offsets = [0, 0], sizes = [5, 32], strides = [1, 1]} : vector<5x96xf32> to vector<5x32xf32>
    %cst_33 = arith.constant 0.353553385 : f32
    %64 = vector.broadcast %cst_33 : f32 to vector<5x32xf32>
    %65 = arith.mulf %63, %64 : vector<5x32xf32>
    %66 = vector.extract_strided_slice %62 {offsets = [0, 32], sizes = [5, 32], strides = [1, 1]} : vector<5x96xf32> to vector<5x32xf32>
    %67 = vector.extract_strided_slice %62 {offsets = [0, 64], sizes = [5, 32], strides = [1, 1]} : vector<5x96xf32> to vector<5x32xf32>
    %68 = vector.extract_strided_slice %65 {offsets = [0, 0], sizes = [5, 8], strides = [1, 1]} : vector<5x32xf32> to vector<5x8xf32>
    %69 = vector.shape_cast %68 : vector<5x8xf32> to vector<1x5x8xf32>
    %70 = vector.extract_strided_slice %65 {offsets = [0, 8], sizes = [5, 8], strides = [1, 1]} : vector<5x32xf32> to vector<5x8xf32>
    %71 = vector.shape_cast %70 : vector<5x8xf32> to vector<1x5x8xf32>
    %72 = vector.extract_strided_slice %65 {offsets = [0, 16], sizes = [5, 8], strides = [1, 1]} : vector<5x32xf32> to vector<5x8xf32>
    %73 = vector.shape_cast %72 : vector<5x8xf32> to vector<1x5x8xf32>
    %74 = vector.extract_strided_slice %65 {offsets = [0, 24], sizes = [5, 8], strides = [1, 1]} : vector<5x32xf32> to vector<5x8xf32>
    %75 = vector.shape_cast %74 : vector<5x8xf32> to vector<1x5x8xf32>
    %76 = tpu.concatenate %69, %71, %73, %75 in 0 : vector<1x5x8xf32>, vector<1x5x8xf32>, vector<1x5x8xf32>, vector<1x5x8xf32> -> vector<4x5x8xf32>
    %77 = vector.extract_strided_slice %66 {offsets = [0, 0], sizes = [5, 8], strides = [1, 1]} : vector<5x32xf32> to vector<5x8xf32>
    %78 = vector.shape_cast %77 : vector<5x8xf32> to vector<1x5x8xf32>
    %79 = vector.extract_strided_slice %66 {offsets = [0, 8], sizes = [5, 8], strides = [1, 1]} : vector<5x32xf32> to vector<5x8xf32>
    %80 = vector.shape_cast %79 : vector<5x8xf32> to vector<1x5x8xf32>
    %81 = vector.extract_strided_slice %66 {offsets = [0, 16], sizes = [5, 8], strides = [1, 1]} : vector<5x32xf32> to vector<5x8xf32>
    %82 = vector.shape_cast %81 : vector<5x8xf32> to vector<1x5x8xf32>
    %83 = vector.extract_strided_slice %66 {offsets = [0, 24], sizes = [5, 8], strides = [1, 1]} : vector<5x32xf32> to vector<5x8xf32>
    %84 = vector.shape_cast %83 : vector<5x8xf32> to vector<1x5x8xf32>
    %85 = tpu.concatenate %78, %80, %82, %84 in 0 : vector<1x5x8xf32>, vector<1x5x8xf32>, vector<1x5x8xf32>, vector<1x5x8xf32> -> vector<4x5x8xf32>
    %86 = vector.extract_strided_slice %67 {offsets = [0, 0], sizes = [5, 8], strides = [1, 1]} : vector<5x32xf32> to vector<5x8xf32>
    %87 = vector.shape_cast %86 : vector<5x8xf32> to vector<1x5x8xf32>
    %88 = vector.extract_strided_slice %67 {offsets = [0, 8], sizes = [5, 8], strides = [1, 1]} : vector<5x32xf32> to vector<5x8xf32>
    %89 = vector.shape_cast %88 : vector<5x8xf32> to vector<1x5x8xf32>
    %90 = vector.extract_strided_slice %67 {offsets = [0, 16], sizes = [5, 8], strides = [1, 1]} : vector<5x32xf32> to vector<5x8xf32>
    %91 = vector.shape_cast %90 : vector<5x8xf32> to vector<1x5x8xf32>
    %92 = vector.extract_strided_slice %67 {offsets = [0, 24], sizes = [5, 8], strides = [1, 1]} : vector<5x32xf32> to vector<5x8xf32>
    %93 = vector.shape_cast %92 : vector<5x8xf32> to vector<1x5x8xf32>
    %94 = tpu.concatenate %87, %89, %91, %93 in 0 : vector<1x5x8xf32>, vector<1x5x8xf32>, vector<1x5x8xf32>, vector<1x5x8xf32> -> vector<4x5x8xf32>
    "tpu.trace_start"() <{level = 10 : i32, message = "hqd,hkd->hqk"}> : () -> ()
    %cst_34 = arith.constant dense<0.000000e+00> : vector<4x5x5xf32>
    %95 = tpu.matmul %76, %85, %cst_34 {dimension_numbers = #tpu.dot_dimension_numbers<[2], [2], [1], [1], [0, 0, 0, 1, 1, 1], [0], [0]>} : vector<4x5x8xf32>, vector<4x5x8xf32>, vector<4x5x5xf32> -> vector<4x5x5xf32>
    "tpu.trace_stop"() : () -> ()
    %cst_35 = arith.constant dense<0xFF800000> : vector<4x5xf32>
    %96 = vector.multi_reduction <maximumf>, %95, %cst_35 [2] : vector<4x5x5xf32> to vector<4x5xf32>
    %97 = vector.shape_cast %96 : vector<4x5xf32> to vector<4x5x1xf32>
    %98 = vector.broadcast %97 : vector<4x5x1xf32> to vector<4x5x5xf32>
    %99 = arith.subf %95, %98 : vector<4x5x5xf32>
    %100 = math.exp %99 : vector<4x5x5xf32>
    %cst_36 = arith.constant dense<0.000000e+00> : vector<4x5xf32>
    %101 = vector.multi_reduction <add>, %100, %cst_36 [2] : vector<4x5x5xf32> to vector<4x5xf32>
    %102 = vector.shape_cast %101 : vector<4x5xf32> to vector<4x5x1xf32>
    %103 = tpu.reciprocal %102 {approx = true} : vector<4x5x1xf32> -> vector<4x5x1xf32>
    %104 = vector.broadcast %103 : vector<4x5x1xf32> to vector<4x5x5xf32>
    %105 = arith.mulf %100, %104 : vector<4x5x5xf32>
    "tpu.trace_start"() <{level = 10 : i32, message = "hqk,hkd->hqd"}> : () -> ()
    %cst_37 = arith.constant dense<0.000000e+00> : vector<4x5x8xf32>
    %106 = tpu.matmul %105, %94, %cst_37 {dimension_numbers = #tpu.dot_dimension_numbers<[2], [1], [1], [2], [0, 0, 0, 1, 1, 2], [0], [0]>} : vector<4x5x5xf32>, vector<4x5x8xf32>, vector<4x5x8xf32> -> vector<4x5x8xf32>
    "tpu.trace_stop"() : () -> ()
    %107 = vector.extract_strided_slice %106 {offsets = [0, 0, 0], sizes = [1, 5, 8], strides = [1, 1, 1]} : vector<4x5x8xf32> to vector<1x5x8xf32>
    %108 = vector.shape_cast %107 : vector<1x5x8xf32> to vector<5x8xf32>
    %109 = vector.extract_strided_slice %106 {offsets = [1, 0, 0], sizes = [1, 5, 8], strides = [1, 1, 1]} : vector<4x5x8xf32> to vector<1x5x8xf32>
    %110 = vector.shape_cast %109 : vector<1x5x8xf32> to vector<5x8xf32>
    %111 = vector.extract_strided_slice %106 {offsets = [2, 0, 0], sizes = [1, 5, 8], strides = [1, 1, 1]} : vector<4x5x8xf32> to vector<1x5x8xf32>
    %112 = vector.shape_cast %111 : vector<1x5x8xf32> to vector<5x8xf32>
    %113 = vector.extract_strided_slice %106 {offsets = [3, 0, 0], sizes = [1, 5, 8], strides = [1, 1, 1]} : vector<4x5x8xf32> to vector<1x5x8xf32>
    %114 = vector.shape_cast %113 : vector<1x5x8xf32> to vector<5x8xf32>
    %115 = tpu.concatenate %108, %110, %112, %114 in 1 : vector<5x8xf32>, vector<5x8xf32>, vector<5x8xf32>, vector<5x8xf32> -> vector<5x32xf32>
    %c0_38 = arith.constant 0 : index
    %c0_39 = arith.constant 0 : index
    %c0_40 = arith.constant 0 : index
    %116 = vector.load %arg10[%c0_38, %c0_39, %c0_40] : memref<2x32x32xf32, #tpu.memory_space<vmem>>, vector<1x32x32xf32>
    %117 = vector.shape_cast %116 : vector<1x32x32xf32> to vector<32x32xf32>
    %cst_41 = arith.constant dense<0.000000e+00> : vector<5x32xf32>
    %118 = tpu.matmul %115, %117, %cst_41 {dimension_numbers = #tpu.dot_dimension_numbers<[1], [0], [0], [1], [0, 0, 1, 1], [], []>} : vector<5x32xf32>, vector<32x32xf32>, vector<5x32xf32> -> vector<5x32xf32>
    %119 = arith.addf %29, %118 : vector<5x32xf32>
    %c0_42 = arith.constant 0 : index
    %c0_43 = arith.constant 0 : index
    %c0_44 = arith.constant 0 : index
    %120 = vector.load %arg11[%c0_42, %c0_43, %c0_44] : memref<2x1x32xf32, #tpu.memory_space<vmem>>, vector<1x1x32xf32>
    %121 = vector.shape_cast %120 : vector<1x1x32xf32> to vector<1x32xf32>
    %122 = vector.broadcast %121 : vector<1x32xf32> to vector<5x32xf32>
    %123 = arith.addf %119, %122 : vector<5x32xf32>
    %c0_45 = arith.constant 0 : index
    %c0_46 = arith.constant 0 : index
    %c0_47 = arith.constant 0 : index
    %124 = vector.load %arg12[%c0_45, %c0_46, %c0_47] : memref<2x1x32xf32, #tpu.memory_space<vmem>>, vector<1x1x32xf32>
    %125 = vector.shape_cast %124 : vector<1x1x32xf32> to vector<1x32xf32>
    %c0_48 = arith.constant 0 : index
    %c0_49 = arith.constant 0 : index
    %c0_50 = arith.constant 0 : index
    %126 = vector.load %arg13[%c0_48, %c0_49, %c0_50] : memref<2x1x32xf32, #tpu.memory_space<vmem>>, vector<1x1x32xf32>
    %127 = vector.shape_cast %126 : vector<1x1x32xf32> to vector<1x32xf32>
    %cst_51 = arith.constant dense<0.000000e+00> : vector<5xf32>
    %128 = vector.multi_reduction <add>, %123, %cst_51 [1] : vector<5x32xf32> to vector<5xf32>
    %129 = vector.shape_cast %128 : vector<5xf32> to vector<5x1xf32>
    %cst_52 = arith.constant 3.200000e+01 : f32
    %130 = vector.broadcast %cst_52 : f32 to vector<5x1xf32>
    %131 = arith.divf %129, %130 : vector<5x1xf32>
    %132 = vector.broadcast %131 : vector<5x1xf32> to vector<5x32xf32>
    %133 = arith.subf %123, %132 : vector<5x32xf32>
    %134 = arith.mulf %133, %133 : vector<5x32xf32>
    %cst_53 = arith.constant dense<0.000000e+00> : vector<5xf32>
    %135 = vector.multi_reduction <add>, %134, %cst_53 [1] : vector<5x32xf32> to vector<5xf32>
    %136 = vector.shape_cast %135 : vector<5xf32> to vector<5x1xf32>
    %cst_54 = arith.constant 3.200000e+01 : f32
    %137 = vector.broadcast %cst_54 : f32 to vector<5x1xf32>
    %138 = arith.divf %136, %137 : vector<5x1xf32>
    %139 = vector.broadcast %131 : vector<5x1xf32> to vector<5x32xf32>
    %140 = arith.subf %123, %139 : vector<5x32xf32>
    %cst_55 = arith.constant 9.99999974E-6 : f32
    %141 = vector.broadcast %cst_55 : f32 to vector<5x1xf32>
    %142 = arith.addf %138, %141 : vector<5x1xf32>
    %143 = math.rsqrt %142 : vector<5x1xf32>
    %144 = vector.broadcast %143 : vector<5x1xf32> to vector<5x32xf32>
    %145 = arith.mulf %140, %144 : vector<5x32xf32>
    %146 = vector.broadcast %125 : vector<1x32xf32> to vector<5x32xf32>
    %147 = arith.mulf %145, %146 : vector<5x32xf32>
    %148 = vector.broadcast %127 : vector<1x32xf32> to vector<5x32xf32>
    %149 = arith.addf %147, %148 : vector<5x32xf32>
    %c0_56 = arith.constant 0 : index
    %c0_57 = arith.constant 0 : index
    %c0_58 = arith.constant 0 : index
    %150 = vector.load %arg14[%c0_56, %c0_57, %c0_58] : memref<2x32x64xf32, #tpu.memory_space<vmem>>, vector<1x32x64xf32>
    %151 = vector.shape_cast %150 : vector<1x32x64xf32> to vector<32x64xf32>
    %cst_59 = arith.constant dense<0.000000e+00> : vector<5x64xf32>
    %152 = tpu.matmul %149, %151, %cst_59 {dimension_numbers = #tpu.dot_dimension_numbers<[1], [0], [0], [1], [0, 0, 1, 1], [], []>} : vector<5x32xf32>, vector<32x64xf32>, vector<5x64xf32> -> vector<5x64xf32>
    %c0_60 = arith.constant 0 : index
    %c0_61 = arith.constant 0 : index
    %c0_62 = arith.constant 0 : index
    %153 = vector.load %arg15[%c0_60, %c0_61, %c0_62] : memref<2x1x64xf32, #tpu.memory_space<vmem>>, vector<1x1x64xf32>
    %154 = vector.shape_cast %153 : vector<1x1x64xf32> to vector<1x64xf32>
    %155 = vector.broadcast %154 : vector<1x64xf32> to vector<5x64xf32>
    %156 = arith.addf %152, %155 : vector<5x64xf32>
    %cst_63 = arith.constant 1.702000e+00 : f32
    %157 = vector.broadcast %cst_63 : f32 to vector<5x64xf32>
    %158 = arith.mulf %157, %156 : vector<5x64xf32>
    %159 = arith.negf %158 : vector<5x64xf32>
    %160 = math.exp %159 : vector<5x64xf32>
    %cst_64 = arith.constant 1.000000e+00 : f32
    %161 = vector.broadcast %cst_64 : f32 to vector<5x64xf32>
    %162 = arith.addf %161, %160 : vector<5x64xf32>
    %163 = arith.divf %161, %162 : vector<5x64xf32>
    %164 = arith.mulf %156, %163 : vector<5x64xf32>
    %c0_65 = arith.constant 0 : index
    %c0_66 = arith.constant 0 : index
    %c0_67 = arith.constant 0 : index
    %165 = vector.load %arg16[%c0_65, %c0_66, %c0_67] : memref<2x64x32xf32, #tpu.memory_space<vmem>>, vector<1x64x32xf32>
    %166 = vector.shape_cast %165 : vector<1x64x32xf32> to vector<64x32xf32>
    %cst_68 = arith.constant dense<0.000000e+00> : vector<5x32xf32>
    %167 = tpu.matmul %164, %166, %cst_68 {dimension_numbers = #tpu.dot_dimension_numbers<[1], [0], [0], [1], [0, 0, 1, 1], [], []>} : vector<5x64xf32>, vector<64x32xf32>, vector<5x32xf32> -> vector<5x32xf32>
    %168 = arith.addf %123, %167 : vector<5x32xf32>
    %c0_69 = arith.constant 0 : index
    %c0_70 = arith.constant 0 : index
    %c0_71 = arith.constant 0 : index
    %169 = vector.load %arg17[%c0_69, %c0_70, %c0_71] : memref<2x1x32xf32, #tpu.memory_space<vmem>>, vector<1x1x32xf32>
    %170 = vector.shape_cast %169 : vector<1x1x32xf32> to vector<1x32xf32>
    %171 = vector.broadcast %170 : vector<1x32xf32> to vector<5x32xf32>
    %172 = arith.addf %168, %171 : vector<5x32xf32>
    %c1 = arith.constant 1 : index
    %c0_72 = arith.constant 0 : index
    %c0_73 = arith.constant 0 : index
    %173 = vector.load %arg6[%c1, %c0_72, %c0_73] : memref<2x1x32xf32, #tpu.memory_space<vmem>>, vector<1x1x32xf32>
    %174 = vector.shape_cast %173 : vector<1x1x32xf32> to vector<1x32xf32>
    %c1_74 = arith.constant 1 : index
    %c0_75 = arith.constant 0 : index
    %c0_76 = arith.constant 0 : index
    %175 = vector.load %arg7[%c1_74, %c0_75, %c0_76] : memref<2x1x32xf32, #tpu.memory_space<vmem>>, vector<1x1x32xf32>
    %176 = vector.shape_cast %175 : vector<1x1x32xf32> to vector<1x32xf32>
    %cst_77 = arith.constant dense<0.000000e+00> : vector<5xf32>
    %177 = vector.multi_reduction <add>, %172, %cst_77 [1] : vector<5x32xf32> to vector<5xf32>
    %178 = vector.shape_cast %177 : vector<5xf32> to vector<5x1xf32>
    %cst_78 = arith.constant 3.200000e+01 : f32
    %179 = vector.broadcast %cst_78 : f32 to vector<5x1xf32>
    %180 = arith.divf %178, %179 : vector<5x1xf32>
    %181 = vector.broadcast %180 : vector<5x1xf32> to vector<5x32xf32>
    %182 = arith.subf %172, %181 : vector<5x32xf32>
    %183 = arith.mulf %182, %182 : vector<5x32xf32>
    %cst_79 = arith.constant dense<0.000000e+00> : vector<5xf32>
    %184 = vector.multi_reduction <add>, %183, %cst_79 [1] : vector<5x32xf32> to vector<5xf32>
    %185 = vector.shape_cast %184 : vector<5xf32> to vector<5x1xf32>
    %cst_80 = arith.constant 3.200000e+01 : f32
    %186 = vector.broadcast %cst_80 : f32 to vector<5x1xf32>
    %187 = arith.divf %185, %186 : vector<5x1xf32>
    %188 = vector.broadcast %180 : vector<5x1xf32> to vector<5x32xf32>
    %189 = arith.subf %172, %188 : vector<5x32xf32>
    %cst_81 = arith.constant 9.99999974E-6 : f32
    %190 = vector.broadcast %cst_81 : f32 to vector<5x1xf32>
    %191 = arith.addf %187, %190 : vector<5x1xf32>
    %192 = math.rsqrt %191 : vector<5x1xf32>
    %193 = vector.broadcast %192 : vector<5x1xf32> to vector<5x32xf32>
    %194 = arith.mulf %189, %193 : vector<5x32xf32>
    %195 = vector.broadcast %174 : vector<1x32xf32> to vector<5x32xf32>
    %196 = arith.mulf %194, %195 : vector<5x32xf32>
    %197 = vector.broadcast %176 : vector<1x32xf32> to vector<5x32xf32>
    %198 = arith.addf %196, %197 : vector<5x32xf32>
    %c1_82 = arith.constant 1 : index
    %c0_83 = arith.constant 0 : index
    %c0_84 = arith.constant 0 : index
    %199 = vector.load %arg8[%c1_82, %c0_83, %c0_84] : memref<2x32x96xf32, #tpu.memory_space<vmem>>, vector<1x32x96xf32>
    %200 = vector.shape_cast %199 : vector<1x32x96xf32> to vector<32x96xf32>
    %cst_85 = arith.constant dense<0.000000e+00> : vector<5x96xf32>
    %201 = tpu.matmul %198, %200, %cst_85 {dimension_numbers = #tpu.dot_dimension_numbers<[1], [0], [0], [1], [0, 0, 1, 1], [], []>} : vector<5x32xf32>, vector<32x96xf32>, vector<5x96xf32> -> vector<5x96xf32>
    %c1_86 = arith.constant 1 : index
    %c0_87 = arith.constant 0 : index
    %c0_88 = arith.constant 0 : index
    %202 = vector.load %arg9[%c1_86, %c0_87, %c0_88] : memref<2x1x96xf32, #tpu.memory_space<vmem>>, vector<1x1x96xf32>
    %203 = vector.shape_cast %202 : vector<1x1x96xf32> to vector<1x96xf32>
    %204 = vector.broadcast %203 : vector<1x96xf32> to vector<5x96xf32>
    %205 = arith.addf %201, %204 : vector<5x96xf32>
    %206 = vector.extract_strided_slice %205 {offsets = [0, 0], sizes = [5, 32], strides = [1, 1]} : vector<5x96xf32> to vector<5x32xf32>
    %cst_89 = arith.constant 0.353553385 : f32
    %207 = vector.broadcast %cst_89 : f32 to vector<5x32xf32>
    %208 = arith.mulf %206, %207 : vector<5x32xf32>
    %209 = vector.extract_strided_slice %205 {offsets = [0, 32], sizes = [5, 32], strides = [1, 1]} : vector<5x96xf32> to vector<5x32xf32>
    %210 = vector.extract_strided_slice %205 {offsets = [0, 64], sizes = [5, 32], strides = [1, 1]} : vector<5x96xf32> to vector<5x32xf32>
    %211 = vector.extract_strided_slice %208 {offsets = [0, 0], sizes = [5, 8], strides = [1, 1]} : vector<5x32xf32> to vector<5x8xf32>
    %212 = vector.shape_cast %211 : vector<5x8xf32> to vector<1x5x8xf32>
    %213 = vector.extract_strided_slice %208 {offsets = [0, 8], sizes = [5, 8], strides = [1, 1]} : vector<5x32xf32> to vector<5x8xf32>
    %214 = vector.shape_cast %213 : vector<5x8xf32> to vector<1x5x8xf32>
    %215 = vector.extract_strided_slice %208 {offsets = [0, 16], sizes = [5, 8], strides = [1, 1]} : vector<5x32xf32> to vector<5x8xf32>
    %216 = vector.shape_cast %215 : vector<5x8xf32> to vector<1x5x8xf32>
    %217 = vector.extract_strided_slice %208 {offsets = [0, 24], sizes = [5, 8], strides = [1, 1]} : vector<5x32xf32> to vector<5x8xf32>
    %218 = vector.shape_cast %217 : vector<5x8xf32> to vector<1x5x8xf32>
    %219 = tpu.concatenate %212, %214, %216, %218 in 0 : vector<1x5x8xf32>, vector<1x5x8xf32>, vector<1x5x8xf32>, vector<1x5x8xf32> -> vector<4x5x8xf32>
    %220 = vector.extract_strided_slice %209 {offsets = [0, 0], sizes = [5, 8], strides = [1, 1]} : vector<5x32xf32> to vector<5x8xf32>
    %221 = vector.shape_cast %220 : vector<5x8xf32> to vector<1x5x8xf32>
    %222 = vector.extract_strided_slice %209 {offsets = [0, 8], sizes = [5, 8], strides = [1, 1]} : vector<5x32xf32> to vector<5x8xf32>
    %223 = vector.shape_cast %222 : vector<5x8xf32> to vector<1x5x8xf32>
    %224 = vector.extract_strided_slice %209 {offsets = [0, 16], sizes = [5, 8], strides = [1, 1]} : vector<5x32xf32> to vector<5x8xf32>
    %225 = vector.shape_cast %224 : vector<5x8xf32> to vector<1x5x8xf32>
    %226 = vector.extract_strided_slice %209 {offsets = [0, 24], sizes = [5, 8], strides = [1, 1]} : vector<5x32xf32> to vector<5x8xf32>
    %227 = vector.shape_cast %226 : vector<5x8xf32> to vector<1x5x8xf32>
    %228 = tpu.concatenate %221, %223, %225, %227 in 0 : vector<1x5x8xf32>, vector<1x5x8xf32>, vector<1x5x8xf32>, vector<1x5x8xf32> -> vector<4x5x8xf32>
    %229 = vector.extract_strided_slice %210 {offsets = [0, 0], sizes = [5, 8], strides = [1, 1]} : vector<5x32xf32> to vector<5x8xf32>
    %230 = vector.shape_cast %229 : vector<5x8xf32> to vector<1x5x8xf32>
    %231 = vector.extract_strided_slice %210 {offsets = [0, 8], sizes = [5, 8], strides = [1, 1]} : vector<5x32xf32> to vector<5x8xf32>
    %232 = vector.shape_cast %231 : vector<5x8xf32> to vector<1x5x8xf32>
    %233 = vector.extract_strided_slice %210 {offsets = [0, 16], sizes = [5, 8], strides = [1, 1]} : vector<5x32xf32> to vector<5x8xf32>
    %234 = vector.shape_cast %233 : vector<5x8xf32> to vector<1x5x8xf32>
    %235 = vector.extract_strided_slice %210 {offsets = [0, 24], sizes = [5, 8], strides = [1, 1]} : vector<5x32xf32> to vector<5x8xf32>
    %236 = vector.shape_cast %235 : vector<5x8xf32> to vector<1x5x8xf32>
    %237 = tpu.concatenate %230, %232, %234, %236 in 0 : vector<1x5x8xf32>, vector<1x5x8xf32>, vector<1x5x8xf32>, vector<1x5x8xf32> -> vector<4x5x8xf32>
    "tpu.trace_start"() <{level = 10 : i32, message = "hqd,hkd->hqk"}> : () -> ()
    %cst_90 = arith.constant dense<0.000000e+00> : vector<4x5x5xf32>
    %238 = tpu.matmul %219, %228, %cst_90 {dimension_numbers = #tpu.dot_dimension_numbers<[2], [2], [1], [1], [0, 0, 0, 1, 1, 1], [0], [0]>} : vector<4x5x8xf32>, vector<4x5x8xf32>, vector<4x5x5xf32> -> vector<4x5x5xf32>
    "tpu.trace_stop"() : () -> ()
    %cst_91 = arith.constant dense<0xFF800000> : vector<4x5xf32>
    %239 = vector.multi_reduction <maximumf>, %238, %cst_91 [2] : vector<4x5x5xf32> to vector<4x5xf32>
    %240 = vector.shape_cast %239 : vector<4x5xf32> to vector<4x5x1xf32>
    %241 = vector.broadcast %240 : vector<4x5x1xf32> to vector<4x5x5xf32>
    %242 = arith.subf %238, %241 : vector<4x5x5xf32>
    %243 = math.exp %242 : vector<4x5x5xf32>
    %cst_92 = arith.constant dense<0.000000e+00> : vector<4x5xf32>
    %244 = vector.multi_reduction <add>, %243, %cst_92 [2] : vector<4x5x5xf32> to vector<4x5xf32>
    %245 = vector.shape_cast %244 : vector<4x5xf32> to vector<4x5x1xf32>
    %246 = tpu.reciprocal %245 {approx = true} : vector<4x5x1xf32> -> vector<4x5x1xf32>
    %247 = vector.broadcast %246 : vector<4x5x1xf32> to vector<4x5x5xf32>
    %248 = arith.mulf %243, %247 : vector<4x5x5xf32>
    "tpu.trace_start"() <{level = 10 : i32, message = "hqk,hkd->hqd"}> : () -> ()
    %cst_93 = arith.constant dense<0.000000e+00> : vector<4x5x8xf32>
    %249 = tpu.matmul %248, %237, %cst_93 {dimension_numbers = #tpu.dot_dimension_numbers<[2], [1], [1], [2], [0, 0, 0, 1, 1, 2], [0], [0]>} : vector<4x5x5xf32>, vector<4x5x8xf32>, vector<4x5x8xf32> -> vector<4x5x8xf32>
    "tpu.trace_stop"() : () -> ()
    %250 = vector.extract_strided_slice %249 {offsets = [0, 0, 0], sizes = [1, 5, 8], strides = [1, 1, 1]} : vector<4x5x8xf32> to vector<1x5x8xf32>
    %251 = vector.shape_cast %250 : vector<1x5x8xf32> to vector<5x8xf32>
    %252 = vector.extract_strided_slice %249 {offsets = [1, 0, 0], sizes = [1, 5, 8], strides = [1, 1, 1]} : vector<4x5x8xf32> to vector<1x5x8xf32>
    %253 = vector.shape_cast %252 : vector<1x5x8xf32> to vector<5x8xf32>
    %254 = vector.extract_strided_slice %249 {offsets = [2, 0, 0], sizes = [1, 5, 8], strides = [1, 1, 1]} : vector<4x5x8xf32> to vector<1x5x8xf32>
    %255 = vector.shape_cast %254 : vector<1x5x8xf32> to vector<5x8xf32>
    %256 = vector.extract_strided_slice %249 {offsets = [3, 0, 0], sizes = [1, 5, 8], strides = [1, 1, 1]} : vector<4x5x8xf32> to vector<1x5x8xf32>
    %257 = vector.shape_cast %256 : vector<1x5x8xf32> to vector<5x8xf32>
    %258 = tpu.concatenate %251, %253, %255, %257 in 1 : vector<5x8xf32>, vector<5x8xf32>, vector<5x8xf32>, vector<5x8xf32> -> vector<5x32xf32>
    %c1_94 = arith.constant 1 : index
    %c0_95 = arith.constant 0 : index
    %c0_96 = arith.constant 0 : index
    %259 = vector.load %arg10[%c1_94, %c0_95, %c0_96] : memref<2x32x32xf32, #tpu.memory_space<vmem>>, vector<1x32x32xf32>
    %260 = vector.shape_cast %259 : vector<1x32x32xf32> to vector<32x32xf32>
    %cst_97 = arith.constant dense<0.000000e+00> : vector<5x32xf32>
    %261 = tpu.matmul %258, %260, %cst_97 {dimension_numbers = #tpu.dot_dimension_numbers<[1], [0], [0], [1], [0, 0, 1, 1], [], []>} : vector<5x32xf32>, vector<32x32xf32>, vector<5x32xf32> -> vector<5x32xf32>
    %262 = arith.addf %172, %261 : vector<5x32xf32>
    %c1_98 = arith.constant 1 : index
    %c0_99 = arith.constant 0 : index
    %c0_100 = arith.constant 0 : index
    %263 = vector.load %arg11[%c1_98, %c0_99, %c0_100] : memref<2x1x32xf32, #tpu.memory_space<vmem>>, vector<1x1x32xf32>
    %264 = vector.shape_cast %263 : vector<1x1x32xf32> to vector<1x32xf32>
    %265 = vector.broadcast %264 : vector<1x32xf32> to vector<5x32xf32>
    %266 = arith.addf %262, %265 : vector<5x32xf32>
    %c1_101 = arith.constant 1 : index
    %c0_102 = arith.constant 0 : index
    %c0_103 = arith.constant 0 : index
    %267 = vector.load %arg12[%c1_101, %c0_102, %c0_103] : memref<2x1x32xf32, #tpu.memory_space<vmem>>, vector<1x1x32xf32>
    %268 = vector.shape_cast %267 : vector<1x1x32xf32> to vector<1x32xf32>
    %c1_104 = arith.constant 1 : index
    %c0_105 = arith.constant 0 : index
    %c0_106 = arith.constant 0 : index
    %269 = vector.load %arg13[%c1_104, %c0_105, %c0_106] : memref<2x1x32xf32, #tpu.memory_space<vmem>>, vector<1x1x32xf32>
    %270 = vector.shape_cast %269 : vector<1x1x32xf32> to vector<1x32xf32>
    %cst_107 = arith.constant dense<0.000000e+00> : vector<5xf32>
    %271 = vector.multi_reduction <add>, %266, %cst_107 [1] : vector<5x32xf32> to vector<5xf32>
    %272 = vector.shape_cast %271 : vector<5xf32> to vector<5x1xf32>
    %cst_108 = arith.constant 3.200000e+01 : f32
    %273 = vector.broadcast %cst_108 : f32 to vector<5x1xf32>
    %274 = arith.divf %272, %273 : vector<5x1xf32>
    %275 = vector.broadcast %274 : vector<5x1xf32> to vector<5x32xf32>
    %276 = arith.subf %266, %275 : vector<5x32xf32>
    %277 = arith.mulf %276, %276 : vector<5x32xf32>
    %cst_109 = arith.constant dense<0.000000e+00> : vector<5xf32>
    %278 = vector.multi_reduction <add>, %277, %cst_109 [1] : vector<5x32xf32> to vector<5xf32>
    %279 = vector.shape_cast %278 : vector<5xf32> to vector<5x1xf32>
    %cst_110 = arith.constant 3.200000e+01 : f32
    %280 = vector.broadcast %cst_110 : f32 to vector<5x1xf32>
    %281 = arith.divf %279, %280 : vector<5x1xf32>
    %282 = vector.broadcast %274 : vector<5x1xf32> to vector<5x32xf32>
    %283 = arith.subf %266, %282 : vector<5x32xf32>
    %cst_111 = arith.constant 9.99999974E-6 : f32
    %284 = vector.broadcast %cst_111 : f32 to vector<5x1xf32>
    %285 = arith.addf %281, %284 : vector<5x1xf32>
    %286 = math.rsqrt %285 : vector<5x1xf32>
    %287 = vector.broadcast %286 : vector<5x1xf32> to vector<5x32xf32>
    %288 = arith.mulf %283, %287 : vector<5x32xf32>
    %289 = vector.broadcast %268 : vector<1x32xf32> to vector<5x32xf32>
    %290 = arith.mulf %288, %289 : vector<5x32xf32>
    %291 = vector.broadcast %270 : vector<1x32xf32> to vector<5x32xf32>
    %292 = arith.addf %290, %291 : vector<5x32xf32>
    %c1_112 = arith.constant 1 : index
    %c0_113 = arith.constant 0 : index
    %c0_114 = arith.constant 0 : index
    %293 = vector.load %arg14[%c1_112, %c0_113, %c0_114] : memref<2x32x64xf32, #tpu.memory_space<vmem>>, vector<1x32x64xf32>
    %294 = vector.shape_cast %293 : vector<1x32x64xf32> to vector<32x64xf32>
    %cst_115 = arith.constant dense<0.000000e+00> : vector<5x64xf32>
    %295 = tpu.matmul %292, %294, %cst_115 {dimension_numbers = #tpu.dot_dimension_numbers<[1], [0], [0], [1], [0, 0, 1, 1], [], []>} : vector<5x32xf32>, vector<32x64xf32>, vector<5x64xf32> -> vector<5x64xf32>
    %c1_116 = arith.constant 1 : index
    %c0_117 = arith.constant 0 : index
    %c0_118 = arith.constant 0 : index
    %296 = vector.load %arg15[%c1_116, %c0_117, %c0_118] : memref<2x1x64xf32, #tpu.memory_space<vmem>>, vector<1x1x64xf32>
    %297 = vector.shape_cast %296 : vector<1x1x64xf32> to vector<1x64xf32>
    %298 = vector.broadcast %297 : vector<1x64xf32> to vector<5x64xf32>
    %299 = arith.addf %295, %298 : vector<5x64xf32>
    %cst_119 = arith.constant 1.702000e+00 : f32
    %300 = vector.broadcast %cst_119 : f32 to vector<5x64xf32>
    %301 = arith.mulf %300, %299 : vector<5x64xf32>
    %302 = arith.negf %301 : vector<5x64xf32>
    %303 = math.exp %302 : vector<5x64xf32>
    %cst_120 = arith.constant 1.000000e+00 : f32
    %304 = vector.broadcast %cst_120 : f32 to vector<5x64xf32>
    %305 = arith.addf %304, %303 : vector<5x64xf32>
    %306 = arith.divf %304, %305 : vector<5x64xf32>
    %307 = arith.mulf %299, %306 : vector<5x64xf32>
    %c1_121 = arith.constant 1 : index
    %c0_122 = arith.constant 0 : index
    %c0_123 = arith.constant 0 : index
    %308 = vector.load %arg16[%c1_121, %c0_122, %c0_123] : memref<2x64x32xf32, #tpu.memory_space<vmem>>, vector<1x64x32xf32>
    %309 = vector.shape_cast %308 : vector<1x64x32xf32> to vector<64x32xf32>
    %cst_124 = arith.constant dense<0.000000e+00> : vector<5x32xf32>
    %310 = tpu.matmul %307, %309, %cst_124 {dimension_numbers = #tpu.dot_dimension_numbers<[1], [0], [0], [1], [0, 0, 1, 1], [], []>} : vector<5x64xf32>, vector<64x32xf32>, vector<5x32xf32> -> vector<5x32xf32>
    %311 = arith.addf %266, %310 : vector<5x32xf32>
    %c1_125 = arith.constant 1 : index
    %c0_126 = arith.constant 0 : index
    %c0_127 = arith.constant 0 : index
    %312 = vector.load %arg17[%c1_125, %c0_126, %c0_127] : memref<2x1x32xf32, #tpu.memory_space<vmem>>, vector<1x1x32xf32>
    %313 = vector.shape_cast %312 : vector<1x1x32xf32> to vector<1x32xf32>
    %314 = vector.broadcast %313 : vector<1x32xf32> to vector<5x32xf32>
    %315 = arith.addf %311, %314 : vector<5x32xf32>
    %316 = vector.extract_strided_slice %315 {offsets = [1, 0], sizes = [4, 32], strides = [1, 1]} : vector<5x32xf32> to vector<4x32xf32>
    %317 = vector.shape_cast %316 : vector<4x32xf32> to vector<1x4x32xf32>
    %c0_128 = arith.constant 0 : index
    %c0_129 = arith.constant 0 : index
    %c0_130 = arith.constant 0 : index
    %318 = vector.load %arg18[%c0_128, %c0_129, %c0_130] : memref<1x4x32xf32, #tpu.memory_space<vmem>>, vector<1x4x32xf32>
    tpu.vector_store %arg18[%c0_128, %c0_129, %c0_130], %317 {strides = array<i32>} : memref<1x4x32xf32, #tpu.memory_space<vmem>>, vector<1x4x32xf32>,
    return
  }
  func.func @transform_0(%arg0: i32) -> (i32, i32, i32) {
    %c0_i32 = arith.constant 0 : i32
    %c0_i32_0 = arith.constant 0 : i32
    %c0_i32_1 = arith.constant 0 : i32
    return %arg0, %c0_i32, %c0_i32_0 : i32, i32, i32
  }
  func.func @transform_1(%arg0: i32) -> (i32, i32) {
    %c0_i32 = arith.constant 0 : i32
    %c0_i32_0 = arith.constant 0 : i32
    %c0_i32_1 = arith.constant 0 : i32
    return %c0_i32, %c0_i32_0 : i32, i32
  }
  func.func @transform_2(%arg0: i32) -> (i32, i32) {
    %c0_i32 = arith.constant 0 : i32
    %c0_i32_0 = arith.constant 0 : i32
    %c0_i32_1 = arith.constant 0 : i32
    return %c0_i32, %c0_i32_0 : i32, i32
  }
  func.func @transform_3(%arg0: i32) -> (i32, i32) {
    %c0_i32 = arith.constant 0 : i32
    %c0_i32_0 = arith.constant 0 : i32
    %c0_i32_1 = arith.constant 0 : i32
    return %c0_i32, %c0_i32_0 : i32, i32
  }
  func.func @transform_4(%arg0: i32) -> (i32, i32) {
    %c0_i32 = arith.constant 0 : i32
    %c0_i32_0 = arith.constant 0 : i32
    %c0_i32_1 = arith.constant 0 : i32
    return %c0_i32, %c0_i32_0 : i32, i32
  }
  func.func @transform_5(%arg0: i32) -> (i32, i32, i32) {
    %c0_i32 = arith.constant 0 : i32
    %c0_i32_0 = arith.constant 0 : i32
    %c0_i32_1 = arith.constant 0 : i32
    %c0_i32_2 = arith.constant 0 : i32
    return %c0_i32, %c0_i32_0, %c0_i32_1 : i32, i32, i32
  }
  func.func @transform_6(%arg0: i32) -> (i32, i32, i32) {
    %c0_i32 = arith.constant 0 : i32
    %c0_i32_0 = arith.constant 0 : i32
    %c0_i32_1 = arith.constant 0 : i32
    %c0_i32_2 = arith.constant 0 : i32
    return %c0_i32, %c0_i32_0, %c0_i32_1 : i32, i32, i32
  }
  func.func @transform_7(%arg0: i32) -> (i32, i32, i32) {
    %c0_i32 = arith.constant 0 : i32
    %c0_i32_0 = arith.constant 0 : i32
    %c0_i32_1 = arith.constant 0 : i32
    %c0_i32_2 = arith.constant 0 : i32
    return %c0_i32, %c0_i32_0, %c0_i32_1 : i32, i32, i32
  }
  func.func @transform_8(%arg0: i32) -> (i32, i32, i32) {
    %c0_i32 = arith.constant 0 : i32
    %c0_i32_0 = arith.constant 0 : i32
    %c0_i32_1 = arith.constant 0 : i32
    %c0_i32_2 = arith.constant 0 : i32
    return %c0_i32, %c0_i32_0, %c0_i32_1 : i32, i32, i32
  }
  func.func @transform_9(%arg0: i32) -> (i32, i32, i32) {
    %c0_i32 = arith.constant 0 : i32
    %c0_i32_0 = arith.constant 0 : i32
    %c0_i32_1 = arith.constant 0 : i32
    %c0_i32_2 = arith.constant 0 : i32
    return %c0_i32, %c0_i32_0, %c0_i32_1 : i32, i32, i32
  }
  func.func @transform_10(%arg0: i32) -> (i32, i32, i32) {
    %c0_i32 = arith.constant 0 : i32
    %c0_i32_0 = arith.constant 0 : i32
    %c0_i32_1 = arith.constant 0 : i32
    %c0_i32_2 = arith.constant 0 : i32
    return %c0_i32, %c0_i32_0, %c0_i32_1 : i32, i32, i32
  }
  func.func @transform_11(%arg0: i32) -> (i32, i32, i32) {
    %c0_i32 = arith.constant 0 : i32
    %c0_i32_0 = arith.constant 0 : i32
    %c0_i32_1 = arith.constant 0 : i32
    %c0_i32_2 = arith.constant 0 : i32
    return %c0_i32, %c0_i32_0, %c0_i32_1 : i32, i32, i32
  }
  func.func @transform_12(%arg0: i32) -> (i32, i32, i32) {
    %c0_i32 = arith.constant 0 : i32
    %c0_i32_0 = arith.constant 0 : i32
    %c0_i32_1 = arith.constant 0 : i32
    %c0_i32_2 = arith.constant 0 : i32
    return %c0_i32, %c0_i32_0, %c0_i32_1 : i32, i32, i32
  }
  func.func @transform_13(%arg0: i32) -> (i32, i32, i32) {
    %c0_i32 = arith.constant 0 : i32
    %c0_i32_0 = arith.constant 0 : i32
    %c0_i32_1 = arith.constant 0 : i32
    %c0_i32_2 = arith.constant 0 : i32
    return %c0_i32, %c0_i32_0, %c0_i32_1 : i32, i32, i32
  }
  func.func @transform_14(%arg0: i32) -> (i32, i32, i32) {
    %c0_i32 = arith.constant 0 : i32
    %c0_i32_0 = arith.constant 0 : i32
    %c0_i32_1 = arith.constant 0 : i32
    %c0_i32_2 = arith.constant 0 : i32
    return %c0_i32, %c0_i32_0, %c0_i32_1 : i32, i32, i32
  }
  func.func @transform_15(%arg0: i32) -> (i32, i32, i32) {
    %c0_i32 = arith.constant 0 : i32
    %c0_i32_0 = arith.constant 0 : i32
    %c0_i32_1 = arith.constant 0 : i32
    %c0_i32_2 = arith.constant 0 : i32
    return %c0_i32, %c0_i32_0, %c0_i32_1 : i32, i32, i32
  }
  func.func @transform_16(%arg0: i32) -> (i32, i32, i32) {
    %c0_i32 = arith.constant 0 : i32
    %c0_i32_0 = arith.constant 0 : i32
    %c0_i32_1 = arith.constant 0 : i32
    %c0_i32_2 = arith.constant 0 : i32
    return %c0_i32, %c0_i32_0, %c0_i32_1 : i32, i32, i32
  }
  func.func @transform_17(%arg0: i32) -> (i32, i32, i32) {
    %c0_i32 = arith.constant 0 : i32
    %c0_i32_0 = arith.constant 0 : i32
    %c0_i32_1 = arith.constant 0 : i32
    return %arg0, %c0_i32, %c0_i32_0 : i32, i32, i32
  }
}

</mosaic_0001>

<llo_original>
// kernel: tpu_custom_call.1
$region0: #{tpu_custom_call.1}
  #allocation0 [shape = 'u32[]', space=smem, size = 0x4, offset = 0x4, fixed_abs, tag = 'smem constant byte address 0x4 - core index']
  #allocation1 [shape = 'u32[144,128]{1,0:T(1,128)}', space=vmem, size = 0x12000, scoped, tag = 'internal scratch']
  %s0 = inlined_call_operand.vmem [shape: f32[2,5,192], index: 0, kind: input, shape index: {}]
  %s1 = inlined_call_operand.vmem [shape: f32[192,32], index: 1, kind: input, shape index: {}]
  %s2 = inlined_call_operand.vmem [shape: f32[5,32], index: 2, kind: input, shape index: {}]
  %s3 = inlined_call_operand.vmem [shape: f32[1,32], index: 3, kind: input, shape index: {}]
  %s4 = inlined_call_operand.vmem [shape: f32[1,32], index: 4, kind: input, shape index: {}]
  %s5 = inlined_call_operand.vmem [shape: f32[2,1,32], index: 5, kind: input, shape index: {}]
  %s6 = inlined_call_operand.vmem [shape: f32[2,1,32], index: 6, kind: input, shape index: {}]
  %s7 = inlined_call_operand.vmem [shape: f32[2,32,96], index: 7, kind: input, shape index: {}]
  %s8 = inlined_call_operand.vmem [shape: f32[2,1,96], index: 8, kind: input, shape index: {}]
  %s9 = inlined_call_operand.vmem [shape: f32[2,32,32], index: 9, kind: input, shape index: {}]
  %s10 = inlined_call_operand.vmem [shape: f32[2,1,32], index: 10, kind: input, shape index: {}]
  %s11 = inlined_call_operand.vmem [shape: f32[2,1,32], index: 11, kind: input, shape index: {}]
  %s12 = inlined_call_operand.vmem [shape: f32[2,1,32], index: 12, kind: input, shape index: {}]
  %s13 = inlined_call_operand.vmem [shape: f32[2,32,64], index: 13, kind: input, shape index: {}]
  %s14 = inlined_call_operand.vmem [shape: f32[2,1,64], index: 14, kind: input, shape index: {}]
  %s15 = inlined_call_operand.vmem [shape: f32[2,64,32], index: 15, kind: input, shape index: {}]
  %s16 = inlined_call_operand.vmem [shape: f32[2,1,32], index: 16, kind: input, shape index: {}]
  %s17 = inlined_call_operand.hbm [shape: f32[2,4,32], index: 17, kind: output, shape index: {}]
  %s18 = sld [smem:[#allocation0]]
  $region101: #{tpu_custom_call.1} parent=0
    _
  %s20 = ssub.s32 1, %s18
  %s21 = scalar_select 0, %s20, %s18
  $region1: #{tpu_custom_call.1} parent=0
    #allocation2 [shape = 'u8[4096]{0}', space=vmem, size = 0x1000, scoped, tag = 'output window, operand 0']
    #allocation3 [shape = 's32[2]{0}', space=sflag, size = 0x8, scoped, tag = 'scoped memory for tpu_custom_call.1']
    %22 = vsyncpa [#allocation3], 0
    %s23 = scalar_lea.sflag [#allocation3], 1
    %24 = vsyncpa %s23, 0
    loop: start=0, step=1, limit=4
    $region2: #{tpu_custom_call.1} parent=1 // loop_pre_header
      _
    $region3: #{tpu_custom_call.1} parent=1 // loop_header
      %s26 = sphi 0, %s30
      %p27 = scmp.ge.s32.totalorder %s26, 4
      %s36 = sphi 0, %s38
      %s39 = sphi 0, %s36
      %s40 = sphi 0, %s39
      %s56 = sphi 0, %s40
      %s60 = sphi 0, %s60
      %s62 = sphi 0, %s60
      %s63 = sphi 0, %s62
      %s77 = sphi 0, %s63
      %s81 = sphi 0, %s81
      %s83 = sphi 0, %s81
      %s84 = sphi 0, %s83
      %s98 = sphi 0, %s84
      %s102 = sphi 0, %s102
      %s104 = sphi 0, %s102
      %s105 = sphi 0, %s104
      %s119 = sphi 0, %s105
      %s123 = sphi 0, %s123
      %s125 = sphi 0, %s123
      %s126 = sphi 0, %s125
      %s140 = sphi 0, %s126
      %s144 = sphi 0, %s144
      %s146 = sphi 0, %s144
      %s147 = sphi 0, %s146
      %s161 = sphi 0, %s147
      %s165 = sphi 0, %s165
      %s167 = sphi 0, %s165
      %s168 = sphi 0, %s167
      %s182 = sphi 0, %s168
      %s186 = sphi 0, %s186
      %s188 = sphi 0, %s186
      %s189 = sphi 0, %s188
      %s203 = sphi 0, %s189
      %s207 = sphi 0, %s207
      %s209 = sphi 0, %s207
      %s210 = sphi 0, %s209
      %s224 = sphi 0, %s210
      %s228 = sphi 0, %s228
      %s230 = sphi 0, %s228
      %s231 = sphi 0, %s230
      %s245 = sphi 0, %s231
      %s249 = sphi 0, %s249
      %s251 = sphi 0, %s249
      %s252 = sphi 0, %s251
      %s266 = sphi 0, %s252
      %s270 = sphi 0, %s270
      %s272 = sphi 0, %s270
      %s273 = sphi 0, %s272
      %s287 = sphi 0, %s273
      %s291 = sphi 0, %s291
      %s293 = sphi 0, %s291
      %s294 = sphi 0, %s293
      %s308 = sphi 0, %s294
      %s312 = sphi 0, %s312
      %s314 = sphi 0, %s312
      %s315 = sphi 0, %s314
      %s329 = sphi 0, %s315
      %s333 = sphi 0, %s333
      %s335 = sphi 0, %s333
      %s336 = sphi 0, %s335
      %s350 = sphi 0, %s336
      %s354 = sphi 0, %s354
      %s356 = sphi 0, %s354
      %s357 = sphi 0, %s356
      %s371 = sphi 0, %s357
      %s375 = sphi 0, %s375
      %s377 = sphi 0, %s375
      %s378 = sphi 0, %s377
      %s392 = sphi 0, %s378
      %s398 = sphi 0, %s400
      %s401 = sphi 0, %s398
      %s402 = sphi 0, %s401
      %s418 = sphi 0, %s402
    $region4: #{tpu_custom_call.1} parent=1 // loop_header_branch
      %29 = sbr.rel (%p27) target = $region8
    $region5: #{tpu_custom_call.1} parent=1 // loop_body
      %s31 = ssub.s32 %s26, 1
      %s32 = ssub.s32 %s26, 2
      %s33 = sadd.s32 %s26, 1
      %s34 = ssub.s32 %s26, %s33
      %p35 = scmp.eq.s32.totalorder %s34, 0
      %s37 = sadd.s32 %s36, 1
      %s38 = scalar_select %p35, %s36, %s37
      %p41 = pneg %p35
      %p42 = scmp.eq.s32.totalorder %s26, 1
      %p43 = por %p41, %p42
      %p44 = scmp.ne.s32.totalorder %s36, %s39
      %p45 = scmp.eq.s32.totalorder %s26, 0
      %p46 = por %p44, %p45
      %p47 = scmp.ne.s32.totalorder %s36, %s39
      %p48 = scmp.eq.s32.totalorder %s31, 1
      %p49 = por %p47, %p48
      %p50 = scmp.ne.s32.totalorder %s39, %s40
      %p51 = scmp.eq.s32.totalorder %s31, 0
      %p52 = por %p50, %p51
      %p53 = scmp.ne.s32.totalorder %s39, %s40
      %p54 = scmp.eq.s32.totalorder %s32, 1
      %p55 = por %p53, %p54
      %p57 = scmp.ne.s32.totalorder %s40, %s56
      %p58 = scmp.eq.s32.totalorder %s32, 0
      %p59 = por %p57, %p58
      %s61 = sadd.s32 %s60, 1
      %p64 = scmp.eq.s32.totalorder %s26, 1
      %p65 = scmp.ne.s32.totalorder %s60, %s62
      %p66 = scmp.eq.s32.totalorder %s26, 0
      %p67 = por %p65, %p66
      %p68 = scmp.ne.s32.totalorder %s60, %s62
      %p69 = scmp.eq.s32.totalorder %s31, 1
      %p70 = por %p68, %p69
      %p71 = scmp.ne.s32.totalorder %s62, %s63
      %p72 = scmp.eq.s32.totalorder %s31, 0
      %p73 = por %p71, %p72
      %p74 = scmp.ne.s32.totalorder %s62, %s63
      %p75 = scmp.eq.s32.totalorder %s32, 1
      %p76 = por %p74, %p75
      %p78 = scmp.ne.s32.totalorder %s63, %s77
      %p79 = scmp.eq.s32.totalorder %s32, 0
      %p80 = por %p78, %p79
      %s82 = sadd.s32 %s81, 1
      %p85 = scmp.eq.s32.totalorder %s26, 1
      %p86 = scmp.ne.s32.totalorder %s81, %s83
      %p87 = scmp.eq.s32.totalorder %s26, 0
      %p88 = por %p86, %p87
      %p89 = scmp.ne.s32.totalorder %s81, %s83
      %p90 = scmp.eq.s32.totalorder %s31, 1
      %p91 = por %p89, %p90
      %p92 = scmp.ne.s32.totalorder %s83, %s84
      %p93 = scmp.eq.s32.totalorder %s31, 0
      %p94 = por %p92, %p93
      %p95 = scmp.ne.s32.totalorder %s83, %s84
      %p96 = scmp.eq.s32.totalorder %s32, 1
      %p97 = por %p95, %p96
      %p99 = scmp.ne.s32.totalorder %s84, %s98
      %p100 = scmp.eq.s32.totalorder %s32, 0
      %p101 = por %p99, %p100
      %s103 = sadd.s32 %s102, 1
      %p106 = scmp.eq.s32.totalorder %s26, 1
      %p107 = scmp.ne.s32.totalorder %s102, %s104
      %p108 = scmp.eq.s32.totalorder %s26, 0
      %p109 = por %p107, %p108
      %p110 = scmp.ne.s32.totalorder %s102, %s104
      %p111 = scmp.eq.s32.totalorder %s31, 1
      %p112 = por %p110, %p111
      %p113 = scmp.ne.s32.totalorder %s104, %s105
      %p114 = scmp.eq.s32.totalorder %s31, 0
      %p115 = por %p113, %p114
      %p116 = scmp.ne.s32.totalorder %s104, %s105
      %p117 = scmp.eq.s32.totalorder %s32, 1
      %p118 = por %p116, %p117
      %p120 = scmp.ne.s32.totalorder %s105, %s119
      %p121 = scmp.eq.s32.totalorder %s32, 0
      %p122 = por %p120, %p121
      %s124 = sadd.s32 %s123, 1
      %p127 = scmp.eq.s32.totalorder %s26, 1
      %p128 = scmp.ne.s32.totalorder %s123, %s125
      %p129 = scmp.eq.s32.totalorder %s26, 0
      %p130 = por %p128, %p129
      %p131 = scmp.ne.s32.totalorder %s123, %s125
      %p132 = scmp.eq.s32.totalorder %s31, 1
      %p133 = por %p131, %p132
      %p134 = scmp.ne.s32.totalorder %s125, %s126
      %p135 = scmp.eq.s32.totalorder %s31, 0
      %p136 = por %p134, %p135
      %p137 = scmp.ne.s32.totalorder %s125, %s126
      %p138 = scmp.eq.s32.totalorder %s32, 1
      %p139 = por %p137, %p138
      %p141 = scmp.ne.s32.totalorder %s126, %s140
      %p142 = scmp.eq.s32.totalorder %s32, 0
      %p143 = por %p141, %p142
      %s145 = sadd.s32 %s144, 1
      %p148 = scmp.eq.s32.totalorder %s26, 1
      %p149 = scmp.ne.s32.totalorder %s144, %s146
      %p150 = scmp.eq.s32.totalorder %s26, 0
      %p151 = por %p149, %p150
      %p152 = scmp.ne.s32.totalorder %s144, %s146
      %p153 = scmp.eq.s32.totalorder %s31, 1
      %p154 = por %p152, %p153
      %p155 = scmp.ne.s32.totalorder %s146, %s147
      %p156 = scmp.eq.s32.totalorder %s31, 0
      %p157 = por %p155, %p156
      %p158 = scmp.ne.s32.totalorder %s146, %s147
      %p159 = scmp.eq.s32.totalorder %s32, 1
      %p160 = por %p158, %p159
      %p162 = scmp.ne.s32.totalorder %s147, %s161
      %p163 = scmp.eq.s32.totalorder %s32, 0
      %p164 = por %p162, %p163
      %s166 = sadd.s32 %s165, 1
      %p169 = scmp.eq.s32.totalorder %s26, 1
      %p170 = scmp.ne.s32.totalorder %s165, %s167
      %p171 = scmp.eq.s32.totalorder %s26, 0
      %p172 = por %p170, %p171
      %p173 = scmp.ne.s32.totalorder %s165, %s167
      %p174 = scmp.eq.s32.totalorder %s31, 1
      %p175 = por %p173, %p174
      %p176 = scmp.ne.s32.totalorder %s167, %s168
      %p177 = scmp.eq.s32.totalorder %s31, 0
      %p178 = por %p176, %p177
      %p179 = scmp.ne.s32.totalorder %s167, %s168
      %p180 = scmp.eq.s32.totalorder %s32, 1
      %p181 = por %p179, %p180
      %p183 = scmp.ne.s32.totalorder %s168, %s182
      %p184 = scmp.eq.s32.totalorder %s32, 0
      %p185 = por %p183, %p184
      %s187 = sadd.s32 %s186, 1
      %p190 = scmp.eq.s32.totalorder %s26, 1
      %p191 = scmp.ne.s32.totalorder %s186, %s188
      %p192 = scmp.eq.s32.totalorder %s26, 0
      %p193 = por %p191, %p192
      %p194 = scmp.ne.s32.totalorder %s186, %s188
      %p195 = scmp.eq.s32.totalorder %s31, 1
      %p196 = por %p194, %p195
      %p197 = scmp.ne.s32.totalorder %s188, %s189
      %p198 = scmp.eq.s32.totalorder %s31, 0
      %p199 = por %p197, %p198
      %p200 = scmp.ne.s32.totalorder %s188, %s189
      %p201 = scmp.eq.s32.totalorder %s32, 1
      %p202 = por %p200, %p201
      %p204 = scmp.ne.s32.totalorder %s189, %s203
      %p205 = scmp.eq.s32.totalorder %s32, 0
      %p206 = por %p204, %p205
      %s208 = sadd.s32 %s207, 1
      %p211 = scmp.eq.s32.totalorder %s26, 1
      %p212 = scmp.ne.s32.totalorder %s207, %s209
      %p213 = scmp.eq.s32.totalorder %s26, 0
      %p214 = por %p212, %p213
      %p215 = scmp.ne.s32.totalorder %s207, %s209
      %p216 = scmp.eq.s32.totalorder %s31, 1
      %p217 = por %p215, %p216
      %p218 = scmp.ne.s32.totalorder %s209, %s210
      %p219 = scmp.eq.s32.totalorder %s31, 0
      %p220 = por %p218, %p219
      %p221 = scmp.ne.s32.totalorder %s209, %s210
      %p222 = scmp.eq.s32.totalorder %s32, 1
      %p223 = por %p221, %p222
      %p225 = scmp.ne.s32.totalorder %s210, %s224
      %p226 = scmp.eq.s32.totalorder %s32, 0
      %p227 = por %p225, %p226
      %s229 = sadd.s32 %s228, 1
      %p232 = scmp.eq.s32.totalorder %s26, 1
      %p233 = scmp.ne.s32.totalorder %s228, %s230
      %p234 = scmp.eq.s32.totalorder %s26, 0
      %p235 = por %p233, %p234
      %p236 = scmp.ne.s32.totalorder %s228, %s230
      %p237 = scmp.eq.s32.totalorder %s31, 1
      %p238 = por %p236, %p237
      %p239 = scmp.ne.s32.totalorder %s230, %s231
      %p240 = scmp.eq.s32.totalorder %s31, 0
      %p241 = por %p239, %p240
      %p242 = scmp.ne.s32.totalorder %s230, %s231
      %p243 = scmp.eq.s32.totalorder %s32, 1
      %p244 = por %p242, %p243
      %p246 = scmp.ne.s32.totalorder %s231, %s245
      %p247 = scmp.eq.s32.totalorder %s32, 0
      %p248 = por %p246, %p247
      %s250 = sadd.s32 %s249, 1
      %p253 = scmp.eq.s32.totalorder %s26, 1
      %p254 = scmp.ne.s32.totalorder %s249, %s251
      %p255 = scmp.eq.s32.totalorder %s26, 0
      %p256 = por %p254, %p255
      %p257 = scmp.ne.s32.totalorder %s249, %s251
      %p258 = scmp.eq.s32.totalorder %s31, 1
      %p259 = por %p257, %p258
      %p260 = scmp.ne.s32.totalorder %s251, %s252
      %p261 = scmp.eq.s32.totalorder %s31, 0
      %p262 = por %p260, %p261
      %p263 = scmp.ne.s32.totalorder %s251, %s252
      %p264 = scmp.eq.s32.totalorder %s32, 1
      %p265 = por %p263, %p264
      %p267 = scmp.ne.s32.totalorder %s252, %s266
      %p268 = scmp.eq.s32.totalorder %s32, 0
      %p269 = por %p267, %p268
      %s271 = sadd.s32 %s270, 1
      %p274 = scmp.eq.s32.totalorder %s26, 1
      %p275 = scmp.ne.s32.totalorder %s270, %s272
      %p276 = scmp.eq.s32.totalorder %s26, 0
      %p277 = por %p275, %p276
      %p278 = scmp.ne.s32.totalorder %s270, %s272
      %p279 = scmp.eq.s32.totalorder %s31, 1
      %p280 = por %p278, %p279
      %p281 = scmp.ne.s32.totalorder %s272, %s273
      %p282 = scmp.eq.s32.totalorder %s31, 0
      %p283 = por %p281, %p282
      %p284 = scmp.ne.s32.totalorder %s272, %s273
      %p285 = scmp.eq.s32.totalorder %s32, 1
      %p286 = por %p284, %p285
      %p288 = scmp.ne.s32.totalorder %s273, %s287
      %p289 = scmp.eq.s32.totalorder %s32, 0
      %p290 = por %p288, %p289
      %s292 = sadd.s32 %s291, 1
      %p295 = scmp.eq.s32.totalorder %s26, 1
      %p296 = scmp.ne.s32.totalorder %s291, %s293
      %p297 = scmp.eq.s32.totalorder %s26, 0
      %p298 = por %p296, %p297
      %p299 = scmp.ne.s32.totalorder %s291, %s293
      %p300 = scmp.eq.s32.totalorder %s31, 1
      %p301 = por %p299, %p300
      %p302 = scmp.ne.s32.totalorder %s293, %s294
      %p303 = scmp.eq.s32.totalorder %s31, 0
      %p304 = por %p302, %p303
      %p305 = scmp.ne.s32.totalorder %s293, %s294
      %p306 = scmp.eq.s32.totalorder %s32, 1
      %p307 = por %p305, %p306
      %p309 = scmp.ne.s32.totalorder %s294, %s308
      %p310 = scmp.eq.s32.totalorder %s32, 0
      %p311 = por %p309, %p310
      %s313 = sadd.s32 %s312, 1
      %p316 = scmp.eq.s32.totalorder %s26, 1
      %p317 = scmp.ne.s32.totalorder %s312, %s314
      %p318 = scmp.eq.s32.totalorder %s26, 0
      %p319 = por %p317, %p318
      %p320 = scmp.ne.s32.totalorder %s312, %s314
      %p321 = scmp.eq.s32.totalorder %s31, 1
      %p322 = por %p320, %p321
      %p323 = scmp.ne.s32.totalorder %s314, %s315
      %p324 = scmp.eq.s32.totalorder %s31, 0
      %p325 = por %p323, %p324
      %p326 = scmp.ne.s32.totalorder %s314, %s315
      %p327 = scmp.eq.s32.totalorder %s32, 1
      %p328 = por %p326, %p327
      %p330 = scmp.ne.s32.totalorder %s315, %s329
      %p331 = scmp.eq.s32.totalorder %s32, 0
      %p332 = por %p330, %p331
      %s334 = sadd.s32 %s333, 1
      %p337 = scmp.eq.s32.totalorder %s26, 1
      %p338 = scmp.ne.s32.totalorder %s333, %s335
      %p339 = scmp.eq.s32.totalorder %s26, 0
      %p340 = por %p338, %p339
      %p341 = scmp.ne.s32.totalorder %s333, %s335
      %p342 = scmp.eq.s32.totalorder %s31, 1
      %p343 = por %p341, %p342
      %p344 = scmp.ne.s32.totalorder %s335, %s336
      %p345 = scmp.eq.s32.totalorder %s31, 0
      %p346 = por %p344, %p345
      %p347 = scmp.ne.s32.totalorder %s335, %s336
      %p348 = scmp.eq.s32.totalorder %s32, 1
      %p349 = por %p347, %p348
      %p351 = scmp.ne.s32.totalorder %s336, %s350
      %p352 = scmp.eq.s32.totalorder %s32, 0
      %p353 = por %p351, %p352
      %s355 = sadd.s32 %s354, 1
      %p358 = scmp.eq.s32.totalorder %s26, 1
      %p359 = scmp.ne.s32.totalorder %s354, %s356
      %p360 = scmp.eq.s32.totalorder %s26, 0
      %p361 = por %p359, %p360
      %p362 = scmp.ne.s32.totalorder %s354, %s356
      %p363 = scmp.eq.s32.totalorder %s31, 1
      %p364 = por %p362, %p363
      %p365 = scmp.ne.s32.totalorder %s356, %s357
      %p366 = scmp.eq.s32.totalorder %s31, 0
      %p367 = por %p365, %p366
      %p368 = scmp.ne.s32.totalorder %s356, %s357
      %p369 = scmp.eq.s32.totalorder %s32, 1
      %p370 = por %p368, %p369
      %p372 = scmp.ne.s32.totalorder %s357, %s371
      %p373 = scmp.eq.s32.totalorder %s32, 0
      %p374 = por %p372, %p373
      %s376 = sadd.s32 %s375, 1
      %p379 = scmp.eq.s32.totalorder %s26, 1
      %p380 = scmp.ne.s32.totalorder %s375, %s377
      %p381 = scmp.eq.s32.totalorder %s26, 0
      %p382 = por %p380, %p381
      %p383 = scmp.ne.s32.totalorder %s375, %s377
      %p384 = scmp.eq.s32.totalorder %s31, 1
      %p385 = por %p383, %p384
      %p386 = scmp.ne.s32.totalorder %s377, %s378
      %p387 = scmp.eq.s32.totalorder %s31, 0
      %p388 = por %p386, %p387
      %p389 = scmp.ne.s32.totalorder %s377, %s378
      %p390 = scmp.eq.s32.totalorder %s32, 1
      %p391 = por %p389, %p390
      %p393 = scmp.ne.s32.totalorder %s378, %s392
      %p394 = scmp.eq.s32.totalorder %s32, 0
      %p395 = por %p393, %p394
      %s396 = ssub.s32 %s26, %s33
      %p397 = scmp.eq.s32.totalorder %s396, 0
      %s399 = sadd.s32 %s398, 1
      %s400 = scalar_select %p397, %s398, %s399
      %p403 = pneg %p397
      %p404 = scmp.eq.s32.totalorder %s26, 1
      %p405 = por %p403, %p404
      %p406 = scmp.ne.s32.totalorder %s398, %s401
      %p407 = scmp.eq.s32.totalorder %s26, 0
      %p408 = por %p406, %p407
      %p409 = scmp.ne.s32.totalorder %s398, %s401
      %p410 = scmp.eq.s32.totalorder %s31, 1
      %p411 = por %p409, %p410
      %p412 = scmp.ne.s32.totalorder %s401, %s402
      %p413 = scmp.eq.s32.totalorder %s31, 0
      %p414 = por %p412, %p413
      %p415 = scmp.ne.s32.totalorder %s401, %s402
      %p416 = scmp.eq.s32.totalorder %s32, 1
      %p417 = por %p415, %p416
      %p419 = scmp.ne.s32.totalorder %s402, %s418
      %p420 = scmp.eq.s32.totalorder %s32, 0
      %p421 = por %p419, %p420
      %p422 = scmp.le.s32.totalorder 1, %s26
      %p423 = scmp.lt.s32.totalorder %s26, 3
      %p424 = pnand %p422, %p423
      %p425 = pneg %p424
      // Predicated region
      $region9: #{tpu_custom_call.1} parent=5 // pred_check
        _
      $region10: #{tpu_custom_call.1} parent=5 // pred_check_branch
        %427 = sbr.rel (%p424) target = $region12
      $region11: #{tpu_custom_call.1} parent=5 // pred_region
        %s428 = ssub.s32 %s26, 1
        // Predicated region
        $region13: #{tpu_custom_call.1} parent=11 // pred_check
          %p429 = pneg %p73
        $region14: #{tpu_custom_call.1} parent=11 // pred_check_branch
          %431 = sbr.rel (%p429) target = $region16
        $region15: #{tpu_custom_call.1} parent=11 // pred_region
          _
        $region16: #{tpu_custom_call.1} parent=11 // pred_fallthru
          _
        // Predicated region
        $region17: #{tpu_custom_call.1} parent=11 // pred_check
          %p432 = pneg %p94
        $region18: #{tpu_custom_call.1} parent=11 // pred_check_branch
          %434 = sbr.rel (%p432) target = $region20
        $region19: #{tpu_custom_call.1} parent=11 // pred_region
          _
        $region20: #{tpu_custom_call.1} parent=11 // pred_fallthru
          _
        // Predicated region
        $region21: #{tpu_custom_call.1} parent=11 // pred_check
          %p435 = pneg %p115
        $region22: #{tpu_custom_call.1} parent=11 // pred_check_branch
          %437 = sbr.rel (%p435) target = $region24
        $region23: #{tpu_custom_call.1} parent=11 // pred_region
          _
        $region24: #{tpu_custom_call.1} parent=11 // pred_fallthru
          _
        // Predicated region
        $region25: #{tpu_custom_call.1} parent=11 // pred_check
          %p438 = pneg %p136
        $region26: #{tpu_custom_call.1} parent=11 // pred_check_branch
          %440 = sbr.rel (%p438) target = $region28
        $region27: #{tpu_custom_call.1} parent=11 // pred_region
          _
        $region28: #{tpu_custom_call.1} parent=11 // pred_fallthru
          _
        // Predicated region
        $region29: #{tpu_custom_call.1} parent=11 // pred_check
          %p441 = pneg %p157
        $region30: #{tpu_custom_call.1} parent=11 // pred_check_branch
          %443 = sbr.rel (%p441) target = $region32
        $region31: #{tpu_custom_call.1} parent=11 // pred_region
          _
        $region32: #{tpu_custom_call.1} parent=11 // pred_fallthru
          _
        // Predicated region
        $region33: #{tpu_custom_call.1} parent=11 // pred_check
          %p444 = pneg %p178
        $region34: #{tpu_custom_call.1} parent=11 // pred_check_branch
          %446 = sbr.rel (%p444) target = $region36
        $region35: #{tpu_custom_call.1} parent=11 // pred_region
          _
        $region36: #{tpu_custom_call.1} parent=11 // pred_fallthru
          _
        // Predicated region
        $region37: #{tpu_custom_call.1} parent=11 // pred_check
          %p447 = pneg %p199
        $region38: #{tpu_custom_call.1} parent=11 // pred_check_branch
          %449 = sbr.rel (%p447) target = $region40
        $region39: #{tpu_custom_call.1} parent=11 // pred_region
          _
        $region40: #{tpu_custom_call.1} parent=11 // pred_fallthru
          _
        // Predicated region
        $region41: #{tpu_custom_call.1} parent=11 // pred_check
          %p450 = pneg %p220
        $region42: #{tpu_custom_call.1} parent=11 // pred_check_branch
          %452 = sbr.rel (%p450) target = $region44
        $region43: #{tpu_custom_call.1} parent=11 // pred_region
          _
        $region44: #{tpu_custom_call.1} parent=11 // pred_fallthru
          _
        // Predicated region
        $region45: #{tpu_custom_call.1} parent=11 // pred_check
          %p453 = pneg %p241
        $region46: #{tpu_custom_call.1} parent=11 // pred_check_branch
          %455 = sbr.rel (%p453) target = $region48
        $region47: #{tpu_custom_call.1} parent=11 // pred_region
          _
        $region48: #{tpu_custom_call.1} parent=11 // pred_fallthru
          _
        // Predicated region
        $region49: #{tpu_custom_call.1} parent=11 // pred_check
          %p456 = pneg %p262
        $region50: #{tpu_custom_call.1} parent=11 // pred_check_branch
          %458 = sbr.rel (%p456) target = $region52
        $region51: #{tpu_custom_call.1} parent=11 // pred_region
          _
        $region52: #{tpu_custom_call.1} parent=11 // pred_fallthru
          _
        // Predicated region
        $region53: #{tpu_custom_call.1} parent=11 // pred_check
          %p459 = pneg %p283
        $region54: #{tpu_custom_call.1} parent=11 // pred_check_branch
          %461 = sbr.rel (%p459) target = $region56
        $region55: #{tpu_custom_call.1} parent=11 // pred_region
          _
        $region56: #{tpu_custom_call.1} parent=11 // pred_fallthru
          _
        // Predicated region
        $region57: #{tpu_custom_call.1} parent=11 // pred_check
          %p462 = pneg %p304
        $region58: #{tpu_custom_call.1} parent=11 // pred_check_branch
          %464 = sbr.rel (%p462) target = $region60
        $region59: #{tpu_custom_call.1} parent=11 // pred_region
          _
        $region60: #{tpu_custom_call.1} parent=11 // pred_fallthru
          _
        // Predicated region
        $region61: #{tpu_custom_call.1} parent=11 // pred_check
          %p465 = pneg %p325
        $region62: #{tpu_custom_call.1} parent=11 // pred_check_branch
          %467 = sbr.rel (%p465) target = $region64
        $region63: #{tpu_custom_call.1} parent=11 // pred_region
          _
        $region64: #{tpu_custom_call.1} parent=11 // pred_fallthru
          _
        // Predicated region
        $region65: #{tpu_custom_call.1} parent=11 // pred_check
          %p468 = pneg %p346
        $region66: #{tpu_custom_call.1} parent=11 // pred_check_branch
          %470 = sbr.rel (%p468) target = $region68
        $region67: #{tpu_custom_call.1} parent=11 // pred_region
          _
        $region68: #{tpu_custom_call.1} parent=11 // pred_fallthru
          _
        // Predicated region
        $region69: #{tpu_custom_call.1} parent=11 // pred_check
          %p471 = pneg %p367
        $region70: #{tpu_custom_call.1} parent=11 // pred_check_branch
          %473 = sbr.rel (%p471) target = $region72
        $region71: #{tpu_custom_call.1} parent=11 // pred_region
          _
        $region72: #{tpu_custom_call.1} parent=11 // pred_fallthru
          _
        // Predicated region
        $region73: #{tpu_custom_call.1} parent=11 // pred_check
          %p474 = pneg %p388
        $region74: #{tpu_custom_call.1} parent=11 // pred_check_branch
          %476 = sbr.rel (%p474) target = $region76
        $region75: #{tpu_custom_call.1} parent=11 // pred_region
          _
        $region76: #{tpu_custom_call.1} parent=11 // pred_fallthru
          _
      $region12: #{tpu_custom_call.1} parent=5 // pred_fallthru
        _
      %p477 = scmp.lt.s32.totalorder %s26, 2
      // Predicated region
      $region77: #{tpu_custom_call.1} parent=5 // pred_check
        %p478 = pneg %p477
      $region78: #{tpu_custom_call.1} parent=5 // pred_check_branch
        %480 = sbr.rel (%p478) target = $region80
      $region79: #{tpu_custom_call.1} parent=5 // pred_region
        // Predicated region
        $region81: #{tpu_custom_call.1} parent=79 // pred_check
          %p481 = pneg %p46
        $region82: #{tpu_custom_call.1} parent=79 // pred_check_branch
          %483 = sbr.rel (%p481) target = $region84
        $region83: #{tpu_custom_call.1} parent=79 // pred_region
          %p484 = scmp.lt.s32.totalorder %s26, 1
          %s485 = scalar_select %p484, %s26, 1
          %s486 = smul.addr %s485, 2
          %s487 = smul.addr %s486, 8
          %s488 = scalar_lea.vmem %s0, %s487
        $region84: #{tpu_custom_call.1} parent=79 // pred_fallthru
          _
      $region80: #{tpu_custom_call.1} parent=5 // pred_fallthru
        _
      %p489 = scmp.le.s32.totalorder 1, %s26
      %p490 = scmp.lt.s32.totalorder %s26, 3
      %p491 = pnand %p489, %p490
      %p492 = pneg %p491
      // Predicated region
      $region85: #{tpu_custom_call.1} parent=5 // pred_check
        _
      $region86: #{tpu_custom_call.1} parent=5 // pred_check_branch
        %494 = sbr.rel (%p491) target = $region88
      $region87: #{tpu_custom_call.1} parent=5 // pred_region
        %s495 = ssub.s32 %s26, 1
        %p496 = scmp.lt.s32.totalorder %s31, 1
        %s497 = scalar_select %p496, %s31, 1
        %s498 = smul.addr %s497, 2
        %s499 = smul.addr %s498, 8
        %s500 = scalar_lea.vmem %s0, %s499
        %p501 = pneg %p52
        %p502 = pneg %p49
        %p503 = pneg %p73
        %p504 = pneg %p70
        %p505 = pneg %p94
        %p506 = pneg %p91
        %p507 = pneg %p115
        %p508 = pneg %p112
        %p509 = pneg %p136
        %p510 = pneg %p133
        %p511 = pneg %p157
        %p512 = pneg %p154
        %p513 = pneg %p178
        %p514 = pneg %p175
        %p515 = pneg %p199
        %p516 = pneg %p196
        %p517 = pneg %p220
        %p518 = pneg %p217
        %p519 = pneg %p241
        %p520 = pneg %p238
        %p521 = pneg %p262
        %p522 = pneg %p259
        %p523 = pneg %p283
        %p524 = pneg %p280
        %p525 = pneg %p304
        %p526 = pneg %p301
        %p527 = pneg %p325
        %p528 = pneg %p322
        %p529 = pneg %p346
        %p530 = pneg %p343
        %p531 = pneg %p367
        %p532 = pneg %p364
        %p533 = pneg %p388
        %p534 = pneg %p385
        %p535 = pneg %p414
        %p536 = pneg %p411
        %s537 = sand.u32 %s401, 1
        %s538 = scalar_lea.sflag [#allocation3], %s537
        %s539 = sand.u32 %s401, 1
        %s540 = smul.addr %s539, 4
        %s541 = scalar_lea.vmem [#allocation2], %s540
        %p542 = scmp.lt.s32.totalorder %s31, 1
        %s543 = scalar_select %p542, %s31, 1
        %s544 = smul.addr %s543, 2
        %s545 = smul.addr %s544, 8
        %s546 = scalar_lea.vmem %s0, %s545
        %v547 = vld [vmem:[%s546] sm:$0x1f]
        %v548 = vld [vmem:[%s546 + $0x8] sm:$0x1f]
        %v549 = vld [vmem:[%s1] sm:$0xff]
        %v550 = vld [vmem:[%s1 + $0x8] sm:$0xff]
        %v551 = vld [vmem:[%s1 + $0x10] sm:$0xff]
        %v552 = vld [vmem:[%s1 + $0x18] sm:$0xff]
        %v553 = vld [vmem:[%s1 + $0x20] sm:$0xff]
        %v554 = vld [vmem:[%s1 + $0x28] sm:$0xff]
        %v555 = vld [vmem:[%s1 + $0x30] sm:$0xff]
        %v556 = vld [vmem:[%s1 + $0x38] sm:$0xff]
        %v557 = vld [vmem:[%s1 + $0x40] sm:$0xff]
        %v558 = vld [vmem:[%s1 + $0x48] sm:$0xff]
        %v559 = vld [vmem:[%s1 + $0x50] sm:$0xff]
        %v560 = vld [vmem:[%s1 + $0x58] sm:$0xff]
        %v561 = vld [vmem:[%s1 + $0x60] sm:$0xff]
        %v562 = vld [vmem:[%s1 + $0x68] sm:$0xff]
        %v563 = vld [vmem:[%s1 + $0x70] sm:$0xff]
        %v564 = vld [vmem:[%s1 + $0x78] sm:$0xff]
        %v565 = vld [vmem:[%s1 + $0x80] sm:$0xff]
        %v566 = vld [vmem:[%s1 + $0x88] sm:$0xff]
        %v567 = vld [vmem:[%s1 + $0x90] sm:$0xff]
        %v568 = vld [vmem:[%s1 + $0x98] sm:$0xff]
        %v569 = vld [vmem:[%s1 + $0xa0] sm:$0xff]
        %v570 = vld [vmem:[%s1 + $0xa8] sm:$0xff]
        %v571 = vld [vmem:[%s1 + $0xb0] sm:$0xff]
        %v572 = vld [vmem:[%s1 + $0xb8] sm:$0xff]
        %v573 = vld [vmem:[%s2] sm:$0x1f]
        %vm574 = vcmask 523264
        %v576 = vsel %vm574, %v548, 0
        %578 = vmatprep.subr.mxu0 0.0
        %579 = vmatpush1.msra.mxu0 %v549
        %580 = vmatprep.subr.mxu0 0.0
        %581 = vmatpush1.msra.mxu0 %v550
        %582 = vmatprep.subr.mxu0 0.0
        %583 = vmatpush1.msra.mxu0 %v551
        %584 = vmatprep.subr.mxu0 0.0
        %585 = vmatpush1.msra.mxu0 %v552
        %586 = vmatprep.subr.mxu0 0.0
        %587 = vmatpush1.msra.mxu0 %v553
        %588 = vmatprep.subr.mxu0 0.0
        %589 = vmatpush1.msra.mxu0 %v554
        %590 = vmatprep.subr.mxu0 0.0
        %591 = vmatpush1.msra.mxu0 %v555
        %592 = vmatprep.subr.mxu0 0.0
        %593 = vmatpush1.msra.mxu0 %v556
        %594 = vmatprep.subr.mxu0 0.0
        %595 = vmatpush1.msra.mxu0 %v557
        %596 = vmatprep.subr.mxu0 0.0
        %597 = vmatpush1.msra.mxu0 %v558
        %598 = vmatprep.subr.mxu0 0.0
        %599 = vmatpush1.msra.mxu0 %v559
        %600 = vmatprep.subr.mxu0 0.0
        %601 = vmatpush1.msra.mxu0 %v560
        %602 = vmatprep.subr.mxu0 0.0
        %603 = vmatpush1.msra.mxu0 %v561
        %604 = vmatprep.subr.mxu0 0.0
        %605 = vmatpush1.msra.mxu0 %v562
        %606 = vmatprep.subr.mxu0 0.0
        %607 = vmatpush1.msra.mxu0 %v563
        %608 = vmatprep.subr.mxu0 0.0
        %609 = vmatpush1.msra.mxu0 %v564
        %610 = vmatprep.subr.mxu0 0.0
        %611 = vmatpush1.msra.mxu0 %v565
        %612 = vmatprep.subr.mxu0 0.0
        %613 = vmatpush1.msra.mxu0 %v566
        %614 = vmatprep.subr.mxu0 0.0
        %615 = vmatpush1.msra.mxu0 %v567
        %616 = vmatprep.subr.mxu0 0.0
        %617 = vmatpush1.msra.mxu0 %v568
        %618 = vmatprep.subr.mxu0 0.0
        %619 = vmatpush1.msra.mxu0 %v569
        %620 = vmatprep.subr.mxu0 0.0
        %621 = vmatpush1.msra.mxu0 %v570
        %622 = vmatprep.subr.mxu0 0.0
        %623 = vmatpush1.msra.mxu0 %v571
        %624 = vmatprep.subr.mxu0 0.0
        %625 = vmatpush1.msra.mxu0 %v572
        %626 = vmatprep.subr.mxu0 0.0
        %627 = vmatpush1.msra.mxu0 0.0
        %628 = vmatprep.subr.mxu0 0.0
        %629 = vmatpush1.msra.mxu0 0.0
        %630 = vmatprep.subr.mxu0 0.0
        %631 = vmatpush1.msra.mxu0 0.0
        %632 = vmatprep.subr.mxu0 0.0
        %633 = vmatpush1.msra.mxu0 0.0
        %634 = vmatprep.subr.mxu0 0.0
        %635 = vmatpush1.msra.mxu0 0.0
        %636 = vmatprep.subr.mxu0 0.0
        %637 = vmatpush1.msra.mxu0 0.0
        %638 = vmatprep.subr.mxu0 0.0
        %639 = vmatpush1.msra.mxu0 0.0
        %640 = vmatprep.subr.mxu0 0.0
        %641 = vmatpush1.msra.mxu0 0.0
        %642 = vmatprep.mubr.f32.mxu0 %v576
        %643 = vmatmul.mubr.f32.gmra.mrb[0].mxu0 %v547
        %v644 = vpop.f32.mrb[0].mxu0
        %v645 = vadd.f32 %v573, %v644
        %v646 = vpop.f32.mrb[0].mxu0
        %647 = vdwg.mxu0
        %v648 = vld [vmem:[%s3] sm:$0x1]
        %v649 = vld [vmem:[%s4] sm:$0x1]
        %vm650 = vcmask 258048
        %v651 = vsel %vm650, %v645, 0.0
        %652 = vadd.xlane.f32.xlu0 %v651
        %v653 = vpop.xlane.xlu0 %652
        %v654 = vrcp.pop 32.0
        %v655 = vmul.f32 %v653, %v654
        %v656 = vsub.f32 %v645, %v655
        %v657 = vmul.f32 %v656, %v656
        %v658 = vsel %vm650, %v657, 0.0
        %659 = vadd.xlane.f32.xlu0 %v658
        %v660 = vpop.xlane.xlu0 %659
        %v661 = vmul.f32 %v660, %v654
        %v662 = vadd.f32 %v661, 1e-05
        %v663 = vrsqrt.pop %v662
        %v664 = vmul.f32 %v656, %v663
        %v666 = vlaneseq
        %v667 = vshrl.u32 %v666, 7
        %v668 = vsub.s32 0, %v667
        %v669 = vrot.slane %v648, %v668
        %v671 = vmul.f32 %v664, %v669
        %v673 = vlaneseq
        %v674 = vshrl.u32 %v673, 7
        %v675 = vsub.s32 0, %v674
        %v676 = vrot.slane %v649, %v675
        %v678 = vadd.f32 %v671, %v676
        %v679 = vld [vmem:[%s5] sm:$0x1]
        %v680 = vld [vmem:[%s6] sm:$0x1]
        %v681 = vsel %vm650, %v678, 0.0
        %682 = vadd.xlane.f32.xlu0 %v681
        %v683 = vpop.xlane.xlu0 %682
        %v684 = vmul.f32 %v683, %v654
        %v685 = vsub.f32 %v678, %v684
        %v686 = vmul.f32 %v685, %v685
        %v687 = vsel %vm650, %v686, 0.0
        %688 = vadd.xlane.f32.xlu0 %v687
        %v689 = vpop.xlane.xlu0 %688
        %v690 = vmul.f32 %v689, %v654
        %v691 = vadd.f32 %v690, 1e-05
        %v692 = vrsqrt.pop %v691
        %v693 = vmul.f32 %v685, %v692
        %v695 = vlaneseq
        %v696 = vshrl.u32 %v695, 7
        %v697 = vsub.s32 0, %v696
        %v698 = vrot.slane %v679, %v697
        %v700 = vmul.f32 %v693, %v698
        %v702 = vlaneseq
        %v703 = vshrl.u32 %v702, 7
        %v704 = vsub.s32 0, %v703
        %v705 = vrot.slane %v680, %v704
        %v707 = vadd.f32 %v700, %v705
        %v708 = vld [vmem:[%s7] sm:$0xff]
        %v709 = vld [vmem:[%s7 + $0x8] sm:$0xff]
        %v710 = vld [vmem:[%s7 + $0x10] sm:$0xff]
        %v711 = vld [vmem:[%s7 + $0x18] sm:$0xff]
        %v712 = vld [vmem:[%s8] sm:$0x1]
        %v714 = vlaneseq
        %v715 = vshrl.u32 %v714, 7
        %v716 = vsub.s32 0, %v715
        %v717 = vrot.slane %v712, %v716
        %vm719 = vcmask 261120
        %v721 = vsel %vm719, %v707, 0
        %723 = vmatprep.subr.mxu0 0.0
        %724 = vmatpush1.msra.mxu0 %v708
        %725 = vmatprep.subr.mxu0 0.0
        %726 = vmatpush1.msra.mxu0 %v709
        %727 = vmatprep.subr.mxu0 0.0
        %728 = vmatpush1.msra.mxu0 %v710
        %729 = vmatprep.subr.mxu0 0.0
        %730 = vmatpush1.msra.mxu0 %v711
        %731 = vmatprep.subr.mxu0 0.0
        %732 = vmatpush1.msra.mxu0 0.0
        %733 = vmatprep.subr.mxu0 0.0
        %734 = vmatpush1.msra.mxu0 0.0
        %735 = vmatprep.subr.mxu0 0.0
        %736 = vmatpush1.msra.mxu0 0.0
        %737 = vmatprep.subr.mxu0 0.0
        %738 = vmatpush1.msra.mxu0 0.0
        %739 = vmatprep.subr.mxu0 0.0
        %740 = vmatpush1.msra.mxu0 0.0
        %741 = vmatprep.subr.mxu0 0.0
        %742 = vmatpush1.msra.mxu0 0.0
        %743 = vmatprep.subr.mxu0 0.0
        %744 = vmatpush1.msra.mxu0 0.0
        %745 = vmatprep.subr.mxu0 0.0
        %746 = vmatpush1.msra.mxu0 0.0
        %747 = vmatprep.subr.mxu0 0.0
        %748 = vmatpush1.msra.mxu0 0.0
        %749 = vmatprep.subr.mxu0 0.0
        %750 = vmatpush1.msra.mxu0 0.0
        %751 = vmatprep.subr.mxu0 0.0
        %752 = vmatpush1.msra.mxu0 0.0
        %753 = vmatprep.subr.mxu0 0.0
        %754 = vmatpush1.msra.mxu0 0.0
        %755 = vmatprep.subr.mxu0 0.0
        %756 = vmatpush1.msra.mxu0 0.0
        %757 = vmatprep.subr.mxu0 0.0
        %758 = vmatpush1.msra.mxu0 0.0
        %759 = vmatprep.subr.mxu0 0.0
        %760 = vmatpush1.msra.mxu0 0.0
        %761 = vmatprep.subr.mxu0 0.0
        %762 = vmatpush1.msra.mxu0 0.0
        %763 = vmatprep.subr.mxu0 0.0
        %764 = vmatpush1.msra.mxu0 0.0
        %765 = vmatprep.subr.mxu0 0.0
        %766 = vmatpush1.msra.mxu0 0.0
        %767 = vmatprep.subr.mxu0 0.0
        %768 = vmatpush1.msra.mxu0 0.0
        %769 = vmatprep.subr.mxu0 0.0
        %770 = vmatpush1.msra.mxu0 0.0
        %771 = vmatprep.subr.mxu0 0.0
        %772 = vmatpush1.msra.mxu0 0.0
        %773 = vmatprep.subr.mxu0 0.0
        %774 = vmatpush1.msra.mxu0 0.0
        %775 = vmatprep.subr.mxu0 0.0
        %776 = vmatpush1.msra.mxu0 0.0
        %777 = vmatprep.subr.mxu0 0.0
        %778 = vmatpush1.msra.mxu0 0.0
        %779 = vmatprep.subr.mxu0 0.0
        %780 = vmatpush1.msra.mxu0 0.0
        %781 = vmatprep.subr.mxu0 0.0
        %782 = vmatpush1.msra.mxu0 0.0
        %783 = vmatprep.subr.mxu0 0.0
        %784 = vmatpush1.msra.mxu0 0.0
        %785 = vmatprep.subr.mxu0 0.0
        %786 = vmatpush1.msra.mxu0 0.0
        %787 = vmatprep.mubr.f32.mxu0 0.0
        %788 = vmatmul.mubr.f32.gmra.mrb[0].mxu0 %v721
        %v789 = vpop.f32.mrb[0].mxu0
        %v790 = vadd.f32 %v717, %v789
        %v791 = vpop.f32.mrb[0].mxu0
        %792 = vdwg.mxu0
        %v793 = vmul.f32 %v790, 0.35355338
        %795 = vrot.lane.b32.xlu0 %v793, 120
        %v796 = vpop.permute.xlu0 %795
        %797 = vrot.lane.b32.xlu0 %v793, 112
        %v798 = vpop.permute.xlu0 %797
        %799 = vrot.lane.b32.xlu0 %v793, 104
        %v800 = vpop.permute.xlu0 %799
        %802 = vrot.lane.b32.xlu0 %v790, 120
        %v803 = vpop.permute.xlu0 %802
        %804 = vrot.lane.b32.xlu0 %v790, 112
        %v805 = vpop.permute.xlu0 %804
        %806 = vrot.lane.b32.xlu0 %v790, 104
        %v807 = vpop.permute.xlu0 %806
        %808 = vrot.lane.b32.xlu0 %v790, 96
        %v809 = vpop.permute.xlu0 %808
        %vm810 = vcmask 64512
        %v811 = vsel %vm810, %v793, 0
        %v813 = vsel %vm810, %v809, 0
        %815 = vmatprep.subr.mxu0 0.0
        %816 = vmatpush1.xpose.msra.mxu0 %v813
        %817 = vmatprep.subr.mxu0 0.0
        %818 = vmatpush1.xpose.msra.mxu0 0.0
        %819 = vmatprep.subr.mxu0 0.0
        %820 = vmatpush1.xpose.msra.mxu0 0.0
        %821 = vmatprep.subr.mxu0 0.0
        %822 = vmatpush1.xpose.msra.mxu0 0.0
        %823 = vmatprep.subr.mxu0 0.0
        %824 = vmatpush1.xpose.msra.mxu0 0.0
        %825 = vmatprep.subr.mxu0 0.0
        %826 = vmatpush1.xpose.msra.mxu0 0.0
        %827 = vmatprep.subr.mxu0 0.0
        %828 = vmatpush1.xpose.msra.mxu0 0.0
        %829 = vmatprep.subr.mxu0 0.0
        %830 = vmatpush1.xpose.msra.mxu0 0.0
        %831 = vmatprep.subr.mxu0 0.0
        %832 = vmatpush1.xpose.msra.mxu0 0.0
        %833 = vmatprep.subr.mxu0 0.0
        %834 = vmatpush1.xpose.msra.mxu0 0.0
        %835 = vmatprep.subr.mxu0 0.0
        %836 = vmatpush1.xpose.msra.mxu0 0.0
        %837 = vmatprep.subr.mxu0 0.0
        %838 = vmatpush1.xpose.msra.mxu0 0.0
        %839 = vmatprep.subr.mxu0 0.0
        %840 = vmatpush1.xpose.msra.mxu0 0.0
        %841 = vmatprep.subr.mxu0 0.0
        %842 = vmatpush1.xpose.msra.mxu0 0.0
        %843 = vmatprep.subr.mxu0 0.0
        %844 = vmatpush1.xpose.msra.mxu0 0.0
        %845 = vmatprep.subr.mxu0 0.0
        %846 = vmatpush1.xpose.msra.mxu0 0.0
        %847 = vmatprep.subr.mxu0 0.0
        %848 = vmatpush1.xpose.msra.mxu0 0.0
        %849 = vmatprep.subr.mxu0 0.0
        %850 = vmatpush1.xpose.msra.mxu0 0.0
        %851 = vmatprep.subr.mxu0 0.0
        %852 = vmatpush1.xpose.msra.mxu0 0.0
        %853 = vmatprep.subr.mxu0 0.0
        %854 = vmatpush1.xpose.msra.mxu0 0.0
        %855 = vmatprep.subr.mxu0 0.0
        %856 = vmatpush1.xpose.msra.mxu0 0.0
        %857 = vmatprep.subr.mxu0 0.0
        %858 = vmatpush1.xpose.msra.mxu0 0.0
        %859 = vmatprep.subr.mxu0 0.0
        %860 = vmatpush1.xpose.msra.mxu0 0.0
        %861 = vmatprep.subr.mxu0 0.0
        %862 = vmatpush1.xpose.msra.mxu0 0.0
        %863 = vmatprep.subr.mxu0 0.0
        %864 = vmatpush1.xpose.msra.mxu0 0.0
        %865 = vmatprep.subr.mxu0 0.0
        %866 = vmatpush1.xpose.msra.mxu0 0.0
        %867 = vmatprep.subr.mxu0 0.0
        %868 = vmatpush1.xpose.msra.mxu0 0.0
        %869 = vmatprep.subr.mxu0 0.0
        %870 = vmatpush1.xpose.msra.mxu0 0.0
        %871 = vmatprep.subr.mxu0 0.0
        %872 = vmatpush1.xpose.msra.mxu0 0.0
        %873 = vmatprep.subr.mxu0 0.0
        %874 = vmatpush1.xpose.msra.mxu0 0.0
        %875 = vmatprep.subr.mxu0 0.0
        %876 = vmatpush1.xpose.msra.mxu0 0.0
        %877 = vmatprep.subr.mxu0 0.0
        %878 = vmatpush1.xpose.msra.mxu0 0.0
        %879 = vmatprep.mubr.f32.mxu0 0.0
        %880 = vmatmul.mubr.f32.gmra.mrb[0].mxu0 %v811
        %v881 = vpop.f32.mrb[0].mxu0
        %v882 = vadd.f32 0.0, %v881
        %v883 = vpop.f32.mrb[0].mxu0
        %884 = vdwg.mxu0
        %885 = vrot.lane.b32.xlu0 %v803, 96
        %v886 = vpop.permute.xlu0 %885
        %v887 = vsel %vm810, %v796, 0
        %v889 = vsel %vm810, %v886, 0
        %891 = vmatprep.subr.mxu0 0.0
        %892 = vmatpush1.xpose.msra.mxu0 %v889
        %893 = vmatprep.subr.mxu0 0.0
        %894 = vmatpush1.xpose.msra.mxu0 0.0
        %895 = vmatprep.subr.mxu0 0.0
        %896 = vmatpush1.xpose.msra.mxu0 0.0
        %897 = vmatprep.subr.mxu0 0.0
        %898 = vmatpush1.xpose.msra.mxu0 0.0
        %899 = vmatprep.subr.mxu0 0.0
        %900 = vmatpush1.xpose.msra.mxu0 0.0
        %901 = vmatprep.subr.mxu0 0.0
        %902 = vmatpush1.xpose.msra.mxu0 0.0
        %903 = vmatprep.subr.mxu0 0.0
        %904 = vmatpush1.xpose.msra.mxu0 0.0
        %905 = vmatprep.subr.mxu0 0.0
        %906 = vmatpush1.xpose.msra.mxu0 0.0
        %907 = vmatprep.subr.mxu0 0.0
        %908 = vmatpush1.xpose.msra.mxu0 0.0
        %909 = vmatprep.subr.mxu0 0.0
        %910 = vmatpush1.xpose.msra.mxu0 0.0
        %911 = vmatprep.subr.mxu0 0.0
        %912 = vmatpush1.xpose.msra.mxu0 0.0
        %913 = vmatprep.subr.mxu0 0.0
        %914 = vmatpush1.xpose.msra.mxu0 0.0
        %915 = vmatprep.subr.mxu0 0.0
        %916 = vmatpush1.xpose.msra.mxu0 0.0
        %917 = vmatprep.subr.mxu0 0.0
        %918 = vmatpush1.xpose.msra.mxu0 0.0
        %919 = vmatprep.subr.mxu0 0.0
        %920 = vmatpush1.xpose.msra.mxu0 0.0
        %921 = vmatprep.subr.mxu0 0.0
        %922 = vmatpush1.xpose.msra.mxu0 0.0
        %923 = vmatprep.subr.mxu0 0.0
        %924 = vmatpush1.xpose.msra.mxu0 0.0
        %925 = vmatprep.subr.mxu0 0.0
        %926 = vmatpush1.xpose.msra.mxu0 0.0
        %927 = vmatprep.subr.mxu0 0.0
        %928 = vmatpush1.xpose.msra.mxu0 0.0
        %929 = vmatprep.subr.mxu0 0.0
        %930 = vmatpush1.xpose.msra.mxu0 0.0
        %931 = vmatprep.subr.mxu0 0.0
        %932 = vmatpush1.xpose.msra.mxu0 0.0
        %933 = vmatprep.subr.mxu0 0.0
        %934 = vmatpush1.xpose.msra.mxu0 0.0
        %935 = vmatprep.subr.mxu0 0.0
        %936 = vmatpush1.xpose.msra.mxu0 0.0
        %937 = vmatprep.subr.mxu0 0.0
        %938 = vmatpush1.xpose.msra.mxu0 0.0
        %939 = vmatprep.subr.mxu0 0.0
        %940 = vmatpush1.xpose.msra.mxu0 0.0
        %941 = vmatprep.subr.mxu0 0.0
        %942 = vmatpush1.xpose.msra.mxu0 0.0
        %943 = vmatprep.subr.mxu0 0.0
        %944 = vmatpush1.xpose.msra.mxu0 0.0
        %945 = vmatprep.subr.mxu0 0.0
        %946 = vmatpush1.xpose.msra.mxu0 0.0
        %947 = vmatprep.subr.mxu0 0.0
        %948 = vmatpush1.xpose.msra.mxu0 0.0
        %949 = vmatprep.subr.mxu0 0.0
        %950 = vmatpush1.xpose.msra.mxu0 0.0
        %951 = vmatprep.subr.mxu0 0.0
        %952 = vmatpush1.xpose.msra.mxu0 0.0
        %953 = vmatprep.subr.mxu0 0.0
        %954 = vmatpush1.xpose.msra.mxu0 0.0
        %955 = vmatprep.mubr.f32.mxu0 0.0
        %956 = vmatmul.mubr.f32.gmra.mrb[0].mxu0 %v887
        %v957 = vpop.f32.mrb[0].mxu0
        %v958 = vadd.f32 0.0, %v957
        %v959 = vpop.f32.mrb[0].mxu0
        %960 = vdwg.mxu0
        %961 = vrot.lane.b32.xlu0 %v805, 96
        %v962 = vpop.permute.xlu0 %961
        %v963 = vsel %vm810, %v798, 0
        %v965 = vsel %vm810, %v962, 0
        %967 = vmatprep.subr.mxu0 0.0
        %968 = vmatpush1.xpose.msra.mxu0 %v965
        %969 = vmatprep.subr.mxu0 0.0
        %970 = vmatpush1.xpose.msra.mxu0 0.0
        %971 = vmatprep.subr.mxu0 0.0
        %972 = vmatpush1.xpose.msra.mxu0 0.0
        %973 = vmatprep.subr.mxu0 0.0
        %974 = vmatpush1.xpose.msra.mxu0 0.0
        %975 = vmatprep.subr.mxu0 0.0
        %976 = vmatpush1.xpose.msra.mxu0 0.0
        %977 = vmatprep.subr.mxu0 0.0
        %978 = vmatpush1.xpose.msra.mxu0 0.0
        %979 = vmatprep.subr.mxu0 0.0
        %980 = vmatpush1.xpose.msra.mxu0 0.0
        %981 = vmatprep.subr.mxu0 0.0
        %982 = vmatpush1.xpose.msra.mxu0 0.0
        %983 = vmatprep.subr.mxu0 0.0
        %984 = vmatpush1.xpose.msra.mxu0 0.0
        %985 = vmatprep.subr.mxu0 0.0
        %986 = vmatpush1.xpose.msra.mxu0 0.0
        %987 = vmatprep.subr.mxu0 0.0
        %988 = vmatpush1.xpose.msra.mxu0 0.0
        %989 = vmatprep.subr.mxu0 0.0
        %990 = vmatpush1.xpose.msra.mxu0 0.0
        %991 = vmatprep.subr.mxu0 0.0
        %992 = vmatpush1.xpose.msra.mxu0 0.0
        %993 = vmatprep.subr.mxu0 0.0
        %994 = vmatpush1.xpose.msra.mxu0 0.0
        %995 = vmatprep.subr.mxu0 0.0
        %996 = vmatpush1.xpose.msra.mxu0 0.0
        %997 = vmatprep.subr.mxu0 0.0
        %998 = vmatpush1.xpose.msra.mxu0 0.0
        %999 = vmatprep.subr.mxu0 0.0
        %1000 = vmatpush1.xpose.msra.mxu0 0.0
        %1001 = vmatprep.subr.mxu0 0.0
        %1002 = vmatpush1.xpose.msra.mxu0 0.0
        %1003 = vmatprep.subr.mxu0 0.0
        %1004 = vmatpush1.xpose.msra.mxu0 0.0
        %1005 = vmatprep.subr.mxu0 0.0
        %1006 = vmatpush1.xpose.msra.mxu0 0.0
        %1007 = vmatprep.subr.mxu0 0.0
        %1008 = vmatpush1.xpose.msra.mxu0 0.0
        %1009 = vmatprep.subr.mxu0 0.0
        %1010 = vmatpush1.xpose.msra.mxu0 0.0
        %1011 = vmatprep.subr.mxu0 0.0
        %1012 = vmatpush1.xpose.msra.mxu0 0.0
        %1013 = vmatprep.subr.mxu0 0.0
        %1014 = vmatpush1.xpose.msra.mxu0 0.0
        %1015 = vmatprep.subr.mxu0 0.0
        %1016 = vmatpush1.xpose.msra.mxu0 0.0
        %1017 = vmatprep.subr.mxu0 0.0
        %1018 = vmatpush1.xpose.msra.mxu0 0.0
        %1019 = vmatprep.subr.mxu0 0.0
        %1020 = vmatpush1.xpose.msra.mxu0 0.0
        %1021 = vmatprep.subr.mxu0 0.0
        %1022 = vmatpush1.xpose.msra.mxu0 0.0
        %1023 = vmatprep.subr.mxu0 0.0
        %1024 = vmatpush1.xpose.msra.mxu0 0.0
        %1025 = vmatprep.subr.mxu0 0.0
        %1026 = vmatpush1.xpose.msra.mxu0 0.0
        %1027 = vmatprep.subr.mxu0 0.0
        %1028 = vmatpush1.xpose.msra.mxu0 0.0
        %1029 = vmatprep.subr.mxu0 0.0
        %1030 = vmatpush1.xpose.msra.mxu0 0.0
        %1031 = vmatprep.mubr.f32.mxu0 0.0
        %1032 = vmatmul.mubr.f32.gmra.mrb[0].mxu0 %v963
        %v1033 = vpop.f32.mrb[0].mxu0
        %v1034 = vadd.f32 0.0, %v1033
        %v1035 = vpop.f32.mrb[0].mxu0
        %1036 = vdwg.mxu0
        %1037 = vrot.lane.b32.xlu0 %v807, 96
        %v1038 = vpop.permute.xlu0 %1037
        %v1039 = vsel %vm810, %v800, 0
        %v1041 = vsel %vm810, %v1038, 0
        %1043 = vmatprep.subr.mxu0 0.0
        %1044 = vmatpush1.xpose.msra.mxu0 %v1041
        %1045 = vmatprep.subr.mxu0 0.0
        %1046 = vmatpush1.xpose.msra.mxu0 0.0
        %1047 = vmatprep.subr.mxu0 0.0
        %1048 = vmatpush1.xpose.msra.mxu0 0.0
        %1049 = vmatprep.subr.mxu0 0.0
        %1050 = vmatpush1.xpose.msra.mxu0 0.0
        %1051 = vmatprep.subr.mxu0 0.0
        %1052 = vmatpush1.xpose.msra.mxu0 0.0
        %1053 = vmatprep.subr.mxu0 0.0
        %1054 = vmatpush1.xpose.msra.mxu0 0.0
        %1055 = vmatprep.subr.mxu0 0.0
        %1056 = vmatpush1.xpose.msra.mxu0 0.0
        %1057 = vmatprep.subr.mxu0 0.0
        %1058 = vmatpush1.xpose.msra.mxu0 0.0
        %1059 = vmatprep.subr.mxu0 0.0
        %1060 = vmatpush1.xpose.msra.mxu0 0.0
        %1061 = vmatprep.subr.mxu0 0.0
        %1062 = vmatpush1.xpose.msra.mxu0 0.0
        %1063 = vmatprep.subr.mxu0 0.0
        %1064 = vmatpush1.xpose.msra.mxu0 0.0
        %1065 = vmatprep.subr.mxu0 0.0
        %1066 = vmatpush1.xpose.msra.mxu0 0.0
        %1067 = vmatprep.subr.mxu0 0.0
        %1068 = vmatpush1.xpose.msra.mxu0 0.0
        %1069 = vmatprep.subr.mxu0 0.0
        %1070 = vmatpush1.xpose.msra.mxu0 0.0
        %1071 = vmatprep.subr.mxu0 0.0
        %1072 = vmatpush1.xpose.msra.mxu0 0.0
        %1073 = vmatprep.subr.mxu0 0.0
        %1074 = vmatpush1.xpose.msra.mxu0 0.0
        %1075 = vmatprep.subr.mxu0 0.0
        %1076 = vmatpush1.xpose.msra.mxu0 0.0
        %1077 = vmatprep.subr.mxu0 0.0
        %1078 = vmatpush1.xpose.msra.mxu0 0.0
        %1079 = vmatprep.subr.mxu0 0.0
        %1080 = vmatpush1.xpose.msra.mxu0 0.0
        %1081 = vmatprep.subr.mxu0 0.0
        %1082 = vmatpush1.xpose.msra.mxu0 0.0
        %1083 = vmatprep.subr.mxu0 0.0
        %1084 = vmatpush1.xpose.msra.mxu0 0.0
        %1085 = vmatprep.subr.mxu0 0.0
        %1086 = vmatpush1.xpose.msra.mxu0 0.0
        %1087 = vmatprep.subr.mxu0 0.0
        %1088 = vmatpush1.xpose.msra.mxu0 0.0
        %1089 = vmatprep.subr.mxu0 0.0
        %1090 = vmatpush1.xpose.msra.mxu0 0.0
        %1091 = vmatprep.subr.mxu0 0.0
        %1092 = vmatpush1.xpose.msra.mxu0 0.0
        %1093 = vmatprep.subr.mxu0 0.0
        %1094 = vmatpush1.xpose.msra.mxu0 0.0
        %1095 = vmatprep.subr.mxu0 0.0
        %1096 = vmatpush1.xpose.msra.mxu0 0.0
        %1097 = vmatprep.subr.mxu0 0.0
        %1098 = vmatpush1.xpose.msra.mxu0 0.0
        %1099 = vmatprep.subr.mxu0 0.0
        %1100 = vmatpush1.xpose.msra.mxu0 0.0
        %1101 = vmatprep.subr.mxu0 0.0
        %1102 = vmatpush1.xpose.msra.mxu0 0.0
        %1103 = vmatprep.subr.mxu0 0.0
        %1104 = vmatpush1.xpose.msra.mxu0 0.0
        %1105 = vmatprep.subr.mxu0 0.0
        %1106 = vmatpush1.xpose.msra.mxu0 0.0
        %1107 = vmatprep.mubr.f32.mxu0 0.0
        %1108 = vmatmul.mubr.f32.gmra.mrb[0].mxu0 %v1039
        %v1109 = vpop.f32.mrb[0].mxu0
        %v1110 = vadd.f32 0.0, %v1109
        %v1111 = vpop.f32.mrb[0].mxu0
        %1112 = vdwg.mxu0
        %vm1113 = vcmask 36864
        %v1114 = vsel %vm1113, %v882, -inf
        %1115 = vmax.xlane.f32.xlu0 %v1114
        %v1116 = vpop.xlane.xlu0 %1115
        %v1117 = vsel %vm1113, %v958, -inf
        %1118 = vmax.xlane.f32.xlu0 %v1117
        %v1119 = vpop.xlane.xlu0 %1118
        %v1120 = vsel %vm1113, %v1034, -inf
        %1121 = vmax.xlane.f32.xlu0 %v1120
        %v1122 = vpop.xlane.xlu0 %1121
        %v1123 = vsel %vm1113, %v1110, -inf
        %1124 = vmax.xlane.f32.xlu0 %v1123
        %v1125 = vpop.xlane.xlu0 %1124
        %v1126 = vsub.f32 %v882, %v1116
        %v1127 = vsub.f32 %v958, %v1119
        %v1128 = vsub.f32 %v1034, %v1122
        %v1129 = vsub.f32 %v1110, %v1125
        %v1130 = vmul.f32 %v1126, 1.442695
        %v1131 = vpow.pop %v1130
        %v1132 = vmul.f32 %v1127, 1.442695
        %v1133 = vpow.pop %v1132
        %v1134 = vmul.f32 %v1128, 1.442695
        %v1135 = vpow.pop %v1134
        %v1136 = vmul.f32 %v1129, 1.442695
        %v1137 = vpow.pop %v1136
        %v1138 = vsel %vm1113, %v1131, 0.0
        %1139 = vadd.xlane.f32.xlu0 %v1138
        %v1140 = vpop.xlane.xlu0 %1139
        %v1141 = vsel %vm1113, %v1133, 0.0
        %1142 = vadd.xlane.f32.xlu0 %v1141
        %v1143 = vpop.xlane.xlu0 %1142
        %v1144 = vsel %vm1113, %v1135, 0.0
        %1145 = vadd.xlane.f32.xlu0 %v1144
        %v1146 = vpop.xlane.xlu0 %1145
        %v1147 = vsel %vm1113, %v1137, 0.0
        %1148 = vadd.xlane.f32.xlu0 %v1147
        %v1149 = vpop.xlane.xlu0 %1148
        %v1150 = vrcp.pop %v1140
        %v1151 = vrcp.pop %v1143
        %v1152 = vrcp.pop %v1146
        %v1153 = vrcp.pop %v1149
        %v1154 = vmul.f32 %v1131, %v1150
        %v1155 = vmul.f32 %v1133, %v1151
        %v1156 = vmul.f32 %v1135, %v1152
        %v1157 = vmul.f32 %v1137, %v1153
        %1158 = vrot.lane.b32.xlu0 %v790, 64
        %v1159 = vpop.permute.xlu0 %1158
        %vm1160 = vcmask 39936
        %v1162 = vsel %vm1160, %v1154, 0
        %vm1164 = vcmask 1044480
        %v1165 = vsel %vm1164, %v1159, 0
        %1167 = vmatprep.subr.mxu0 0.0
        %1168 = vmatpush1.msra.mxu0 %v1165
        %1169 = vmatprep.subr.mxu0 0.0
        %1170 = vmatpush1.msra.mxu0 0.0
        %1171 = vmatprep.subr.mxu0 0.0
        %1172 = vmatpush1.msra.mxu0 0.0
        %1173 = vmatprep.subr.mxu0 0.0
        %1174 = vmatpush1.msra.mxu0 0.0
        %1175 = vmatprep.subr.mxu0 0.0
        %1176 = vmatpush1.msra.mxu0 0.0
        %1177 = vmatprep.subr.mxu0 0.0
        %1178 = vmatpush1.msra.mxu0 0.0
        %1179 = vmatprep.subr.mxu0 0.0
        %1180 = vmatpush1.msra.mxu0 0.0
        %1181 = vmatprep.subr.mxu0 0.0
        %1182 = vmatpush1.msra.mxu0 0.0
        %1183 = vmatprep.subr.mxu0 0.0
        %1184 = vmatpush1.msra.mxu0 0.0
        %1185 = vmatprep.subr.mxu0 0.0
        %1186 = vmatpush1.msra.mxu0 0.0
        %1187 = vmatprep.subr.mxu0 0.0
        %1188 = vmatpush1.msra.mxu0 0.0
        %1189 = vmatprep.subr.mxu0 0.0
        %1190 = vmatpush1.msra.mxu0 0.0
        %1191 = vmatprep.subr.mxu0 0.0
        %1192 = vmatpush1.msra.mxu0 0.0
        %1193 = vmatprep.subr.mxu0 0.0
        %1194 = vmatpush1.msra.mxu0 0.0
        %1195 = vmatprep.subr.mxu0 0.0
        %1196 = vmatpush1.msra.mxu0 0.0
        %1197 = vmatprep.subr.mxu0 0.0
        %1198 = vmatpush1.msra.mxu0 0.0
        %1199 = vmatprep.subr.mxu0 0.0
        %1200 = vmatpush1.msra.mxu0 0.0
        %1201 = vmatprep.subr.mxu0 0.0
        %1202 = vmatpush1.msra.mxu0 0.0
        %1203 = vmatprep.subr.mxu0 0.0
        %1204 = vmatpush1.msra.mxu0 0.0
        %1205 = vmatprep.subr.mxu0 0.0
        %1206 = vmatpush1.msra.mxu0 0.0
        %1207 = vmatprep.subr.mxu0 0.0
        %1208 = vmatpush1.msra.mxu0 0.0
        %1209 = vmatprep.subr.mxu0 0.0
        %1210 = vmatpush1.msra.mxu0 0.0
        %1211 = vmatprep.subr.mxu0 0.0
        %1212 = vmatpush1.msra.mxu0 0.0
        %1213 = vmatprep.subr.mxu0 0.0
        %1214 = vmatpush1.msra.mxu0 0.0
        %1215 = vmatprep.subr.mxu0 0.0
        %1216 = vmatpush1.msra.mxu0 0.0
        %1217 = vmatprep.subr.mxu0 0.0
        %1218 = vmatpush1.msra.mxu0 0.0
        %1219 = vmatprep.subr.mxu0 0.0
        %1220 = vmatpush1.msra.mxu0 0.0
        %1221 = vmatprep.subr.mxu0 0.0
        %1222 = vmatpush1.msra.mxu0 0.0
        %1223 = vmatprep.subr.mxu0 0.0
        %1224 = vmatpush1.msra.mxu0 0.0
        %1225 = vmatprep.subr.mxu0 0.0
        %1226 = vmatpush1.msra.mxu0 0.0
        %1227 = vmatprep.subr.mxu0 0.0
        %1228 = vmatpush1.msra.mxu0 0.0
        %1229 = vmatprep.subr.mxu0 0.0
        %1230 = vmatpush1.msra.mxu0 0.0
        %1231 = vmatprep.mubr.f32.mxu0 0.0
        %1232 = vmatmul.mubr.f32.gmra.mrb[0].mxu0 %v1162
        %v1233 = vpop.f32.mrb[0].mxu0
        %v1234 = vadd.f32 0.0, %v1233
        %v1235 = vpop.f32.mrb[0].mxu0
        %1236 = vdwg.mxu0
        %1237 = vrot.lane.b32.xlu0 %v803, 64
        %v1238 = vpop.permute.xlu0 %1237
        %v1240 = vsel %vm1160, %v1155, 0
        %v1242 = vsel %vm1164, %v1238, 0
        %1244 = vmatprep.subr.mxu0 0.0
        %1245 = vmatpush1.msra.mxu0 %v1242
        %1246 = vmatprep.subr.mxu0 0.0
        %1247 = vmatpush1.msra.mxu0 0.0
        %1248 = vmatprep.subr.mxu0 0.0
        %1249 = vmatpush1.msra.mxu0 0.0
        %1250 = vmatprep.subr.mxu0 0.0
        %1251 = vmatpush1.msra.mxu0 0.0
        %1252 = vmatprep.subr.mxu0 0.0
        %1253 = vmatpush1.msra.mxu0 0.0
        %1254 = vmatprep.subr.mxu0 0.0
        %1255 = vmatpush1.msra.mxu0 0.0
        %1256 = vmatprep.subr.mxu0 0.0
        %1257 = vmatpush1.msra.mxu0 0.0
        %1258 = vmatprep.subr.mxu0 0.0
        %1259 = vmatpush1.msra.mxu0 0.0
        %1260 = vmatprep.subr.mxu0 0.0
        %1261 = vmatpush1.msra.mxu0 0.0
        %1262 = vmatprep.subr.mxu0 0.0
        %1263 = vmatpush1.msra.mxu0 0.0
        %1264 = vmatprep.subr.mxu0 0.0
        %1265 = vmatpush1.msra.mxu0 0.0
        %1266 = vmatprep.subr.mxu0 0.0
        %1267 = vmatpush1.msra.mxu0 0.0
        %1268 = vmatprep.subr.mxu0 0.0
        %1269 = vmatpush1.msra.mxu0 0.0
        %1270 = vmatprep.subr.mxu0 0.0
        %1271 = vmatpush1.msra.mxu0 0.0
        %1272 = vmatprep.subr.mxu0 0.0
        %1273 = vmatpush1.msra.mxu0 0.0
        %1274 = vmatprep.subr.mxu0 0.0
        %1275 = vmatpush1.msra.mxu0 0.0
        %1276 = vmatprep.subr.mxu0 0.0
        %1277 = vmatpush1.msra.mxu0 0.0
        %1278 = vmatprep.subr.mxu0 0.0
        %1279 = vmatpush1.msra.mxu0 0.0
        %1280 = vmatprep.subr.mxu0 0.0
        %1281 = vmatpush1.msra.mxu0 0.0
        %1282 = vmatprep.subr.mxu0 0.0
        %1283 = vmatpush1.msra.mxu0 0.0
        %1284 = vmatprep.subr.mxu0 0.0
        %1285 = vmatpush1.msra.mxu0 0.0
        %1286 = vmatprep.subr.mxu0 0.0
        %1287 = vmatpush1.msra.mxu0 0.0
        %1288 = vmatprep.subr.mxu0 0.0
        %1289 = vmatpush1.msra.mxu0 0.0
        %1290 = vmatprep.subr.mxu0 0.0
        %1291 = vmatpush1.msra.mxu0 0.0
        %1292 = vmatprep.subr.mxu0 0.0
        %1293 = vmatpush1.msra.mxu0 0.0
        %1294 = vmatprep.subr.mxu0 0.0
        %1295 = vmatpush1.msra.mxu0 0.0
        %1296 = vmatprep.subr.mxu0 0.0
        %1297 = vmatpush1.msra.mxu0 0.0
        %1298 = vmatprep.subr.mxu0 0.0
        %1299 = vmatpush1.msra.mxu0 0.0
        %1300 = vmatprep.subr.mxu0 0.0
        %1301 = vmatpush1.msra.mxu0 0.0
        %1302 = vmatprep.subr.mxu0 0.0
        %1303 = vmatpush1.msra.mxu0 0.0
        %1304 = vmatprep.subr.mxu0 0.0
        %1305 = vmatpush1.msra.mxu0 0.0
        %1306 = vmatprep.subr.mxu0 0.0
        %1307 = vmatpush1.msra.mxu0 0.0
        %1308 = vmatprep.mubr.f32.mxu0 0.0
        %1309 = vmatmul.mubr.f32.gmra.mrb[0].mxu0 %v1240
        %v1310 = vpop.f32.mrb[0].mxu0
        %v1311 = vadd.f32 0.0, %v1310
        %v1312 = vpop.f32.mrb[0].mxu0
        %1313 = vdwg.mxu0
        %1314 = vrot.lane.b32.xlu0 %v805, 64
        %v1315 = vpop.permute.xlu0 %1314
        %v1317 = vsel %vm1160, %v1156, 0
        %v1319 = vsel %vm1164, %v1315, 0
        %1321 = vmatprep.subr.mxu0 0.0
        %1322 = vmatpush1.msra.mxu0 %v1319
        %1323 = vmatprep.subr.mxu0 0.0
        %1324 = vmatpush1.msra.mxu0 0.0
        %1325 = vmatprep.subr.mxu0 0.0
        %1326 = vmatpush1.msra.mxu0 0.0
        %1327 = vmatprep.subr.mxu0 0.0
        %1328 = vmatpush1.msra.mxu0 0.0
        %1329 = vmatprep.subr.mxu0 0.0
        %1330 = vmatpush1.msra.mxu0 0.0
        %1331 = vmatprep.subr.mxu0 0.0
        %1332 = vmatpush1.msra.mxu0 0.0
        %1333 = vmatprep.subr.mxu0 0.0
        %1334 = vmatpush1.msra.mxu0 0.0
        %1335 = vmatprep.subr.mxu0 0.0
        %1336 = vmatpush1.msra.mxu0 0.0
        %1337 = vmatprep.subr.mxu0 0.0
        %1338 = vmatpush1.msra.mxu0 0.0
        %1339 = vmatprep.subr.mxu0 0.0
        %1340 = vmatpush1.msra.mxu0 0.0
        %1341 = vmatprep.subr.mxu0 0.0
        %1342 = vmatpush1.msra.mxu0 0.0
        %1343 = vmatprep.subr.mxu0 0.0
        %1344 = vmatpush1.msra.mxu0 0.0
        %1345 = vmatprep.subr.mxu0 0.0
        %1346 = vmatpush1.msra.mxu0 0.0
        %1347 = vmatprep.subr.mxu0 0.0
        %1348 = vmatpush1.msra.mxu0 0.0
        %1349 = vmatprep.subr.mxu0 0.0
        %1350 = vmatpush1.msra.mxu0 0.0
        %1351 = vmatprep.subr.mxu0 0.0
        %1352 = vmatpush1.msra.mxu0 0.0
        %1353 = vmatprep.subr.mxu0 0.0
        %1354 = vmatpush1.msra.mxu0 0.0
        %1355 = vmatprep.subr.mxu0 0.0
        %1356 = vmatpush1.msra.mxu0 0.0
        %1357 = vmatprep.subr.mxu0 0.0
        %1358 = vmatpush1.msra.mxu0 0.0
        %1359 = vmatprep.subr.mxu0 0.0
        %1360 = vmatpush1.msra.mxu0 0.0
        %1361 = vmatprep.subr.mxu0 0.0
        %1362 = vmatpush1.msra.mxu0 0.0
        %1363 = vmatprep.subr.mxu0 0.0
        %1364 = vmatpush1.msra.mxu0 0.0
        %1365 = vmatprep.subr.mxu0 0.0
        %1366 = vmatpush1.msra.mxu0 0.0
        %1367 = vmatprep.subr.mxu0 0.0
        %1368 = vmatpush1.msra.mxu0 0.0
        %1369 = vmatprep.subr.mxu0 0.0
        %1370 = vmatpush1.msra.mxu0 0.0
        %1371 = vmatprep.subr.mxu0 0.0
        %1372 = vmatpush1.msra.mxu0 0.0
        %1373 = vmatprep.subr.mxu0 0.0
        %1374 = vmatpush1.msra.mxu0 0.0
        %1375 = vmatprep.subr.mxu0 0.0
        %1376 = vmatpush1.msra.mxu0 0.0
        %1377 = vmatprep.subr.mxu0 0.0
        %1378 = vmatpush1.msra.mxu0 0.0
        %1379 = vmatprep.subr.mxu0 0.0
        %1380 = vmatpush1.msra.mxu0 0.0
        %1381 = vmatprep.subr.mxu0 0.0
        %1382 = vmatpush1.msra.mxu0 0.0
        %1383 = vmatprep.subr.mxu0 0.0
        %1384 = vmatpush1.msra.mxu0 0.0
        %1385 = vmatprep.mubr.f32.mxu0 0.0
        %1386 = vmatmul.mubr.f32.gmra.mrb[0].mxu0 %v1317
        %v1387 = vpop.f32.mrb[0].mxu0
        %v1388 = vadd.f32 0.0, %v1387
        %v1389 = vpop.f32.mrb[0].mxu0
        %1390 = vdwg.mxu0
        %1391 = vrot.lane.b32.xlu0 %v807, 64
        %v1392 = vpop.permute.xlu0 %1391
        %v1394 = vsel %vm1160, %v1157, 0
        %v1396 = vsel %vm1164, %v1392, 0
        %1398 = vmatprep.subr.mxu0 0.0
        %1399 = vmatpush1.msra.mxu0 %v1396
        %1400 = vmatprep.subr.mxu0 0.0
        %1401 = vmatpush1.msra.mxu0 0.0
        %1402 = vmatprep.subr.mxu0 0.0
        %1403 = vmatpush1.msra.mxu0 0.0
        %1404 = vmatprep.subr.mxu0 0.0
        %1405 = vmatpush1.msra.mxu0 0.0
        %1406 = vmatprep.subr.mxu0 0.0
        %1407 = vmatpush1.msra.mxu0 0.0
        %1408 = vmatprep.subr.mxu0 0.0
        %1409 = vmatpush1.msra.mxu0 0.0
        %1410 = vmatprep.subr.mxu0 0.0
        %1411 = vmatpush1.msra.mxu0 0.0
        %1412 = vmatprep.subr.mxu0 0.0
        %1413 = vmatpush1.msra.mxu0 0.0
        %1414 = vmatprep.subr.mxu0 0.0
        %1415 = vmatpush1.msra.mxu0 0.0
        %1416 = vmatprep.subr.mxu0 0.0
        %1417 = vmatpush1.msra.mxu0 0.0
        %1418 = vmatprep.subr.mxu0 0.0
        %1419 = vmatpush1.msra.mxu0 0.0
        %1420 = vmatprep.subr.mxu0 0.0
        %1421 = vmatpush1.msra.mxu0 0.0
        %1422 = vmatprep.subr.mxu0 0.0
        %1423 = vmatpush1.msra.mxu0 0.0
        %1424 = vmatprep.subr.mxu0 0.0
        %1425 = vmatpush1.msra.mxu0 0.0
        %1426 = vmatprep.subr.mxu0 0.0
        %1427 = vmatpush1.msra.mxu0 0.0
        %1428 = vmatprep.subr.mxu0 0.0
        %1429 = vmatpush1.msra.mxu0 0.0
        %1430 = vmatprep.subr.mxu0 0.0
        %1431 = vmatpush1.msra.mxu0 0.0
        %1432 = vmatprep.subr.mxu0 0.0
        %1433 = vmatpush1.msra.mxu0 0.0
        %1434 = vmatprep.subr.mxu0 0.0
        %1435 = vmatpush1.msra.mxu0 0.0
        %1436 = vmatprep.subr.mxu0 0.0
        %1437 = vmatpush1.msra.mxu0 0.0
        %1438 = vmatprep.subr.mxu0 0.0
        %1439 = vmatpush1.msra.mxu0 0.0
        %1440 = vmatprep.subr.mxu0 0.0
        %1441 = vmatpush1.msra.mxu0 0.0
        %1442 = vmatprep.subr.mxu0 0.0
        %1443 = vmatpush1.msra.mxu0 0.0
        %1444 = vmatprep.subr.mxu0 0.0
        %1445 = vmatpush1.msra.mxu0 0.0
        %1446 = vmatprep.subr.mxu0 0.0
        %1447 = vmatpush1.msra.mxu0 0.0
        %1448 = vmatprep.subr.mxu0 0.0
        %1449 = vmatpush1.msra.mxu0 0.0
        %1450 = vmatprep.subr.mxu0 0.0
        %1451 = vmatpush1.msra.mxu0 0.0
        %1452 = vmatprep.subr.mxu0 0.0
        %1453 = vmatpush1.msra.mxu0 0.0
        %1454 = vmatprep.subr.mxu0 0.0
        %1455 = vmatpush1.msra.mxu0 0.0
        %1456 = vmatprep.subr.mxu0 0.0
        %1457 = vmatpush1.msra.mxu0 0.0
        %1458 = vmatprep.subr.mxu0 0.0
        %1459 = vmatpush1.msra.mxu0 0.0
        %1460 = vmatprep.subr.mxu0 0.0
        %1461 = vmatpush1.msra.mxu0 0.0
        %1462 = vmatprep.mubr.f32.mxu0 0.0
        %1463 = vmatmul.mubr.f32.gmra.mrb[0].mxu0 %v1394
        %v1464 = vpop.f32.mrb[0].mxu0
        %v1465 = vadd.f32 0.0, %v1464
        %v1466 = vpop.f32.mrb[0].mxu0
        %1467 = vdwg.mxu0
        %1469 = vrot.lane.b32.xlu0 %v1311, 8
        %v1470 = vpop.permute.xlu0 %1469
        %1473 = vrot.lane.b32.xlu0 %v1388, 16
        %v1474 = vpop.permute.xlu0 %1473
        %1477 = vrot.lane.b32.xlu0 %v1465, 24
        %v1478 = vpop.permute.xlu0 %1477
        %v1480 = vsel %vm810, %v1234, %v1470
        %vm1481 = vcmask 130048
        %v1482 = vsel %vm1481, %v1480, %v1474
        %vm1483 = vcmask 195584
        %v1484 = vsel %vm1483, %v1482, %v1478
        %v1485 = vld [vmem:[%s9] sm:$0xff]
        %v1486 = vld [vmem:[%s9 + $0x8] sm:$0xff]
        %v1487 = vld [vmem:[%s9 + $0x10] sm:$0xff]
        %v1488 = vld [vmem:[%s9 + $0x18] sm:$0xff]
        %v1490 = vsel %vm719, %v1484, 0
        %1492 = vmatprep.subr.mxu0 0.0
        %1493 = vmatpush1.msra.mxu0 %v1485
        %1494 = vmatprep.subr.mxu0 0.0
        %1495 = vmatpush1.msra.mxu0 %v1486
        %1496 = vmatprep.subr.mxu0 0.0
        %1497 = vmatpush1.msra.mxu0 %v1487
        %1498 = vmatprep.subr.mxu0 0.0
        %1499 = vmatpush1.msra.mxu0 %v1488
        %1500 = vmatprep.subr.mxu0 0.0
        %1501 = vmatpush1.msra.mxu0 0.0
        %1502 = vmatprep.subr.mxu0 0.0
        %1503 = vmatpush1.msra.mxu0 0.0
        %1504 = vmatprep.subr.mxu0 0.0
        %1505 = vmatpush1.msra.mxu0 0.0
        %1506 = vmatprep.subr.mxu0 0.0
        %1507 = vmatpush1.msra.mxu0 0.0
        %1508 = vmatprep.subr.mxu0 0.0
        %1509 = vmatpush1.msra.mxu0 0.0
        %1510 = vmatprep.subr.mxu0 0.0
        %1511 = vmatpush1.msra.mxu0 0.0
        %1512 = vmatprep.subr.mxu0 0.0
        %1513 = vmatpush1.msra.mxu0 0.0
        %1514 = vmatprep.subr.mxu0 0.0
        %1515 = vmatpush1.msra.mxu0 0.0
        %1516 = vmatprep.subr.mxu0 0.0
        %1517 = vmatpush1.msra.mxu0 0.0
        %1518 = vmatprep.subr.mxu0 0.0
        %1519 = vmatpush1.msra.mxu0 0.0
        %1520 = vmatprep.subr.mxu0 0.0
        %1521 = vmatpush1.msra.mxu0 0.0
        %1522 = vmatprep.subr.mxu0 0.0
        %1523 = vmatpush1.msra.mxu0 0.0
        %1524 = vmatprep.subr.mxu0 0.0
        %1525 = vmatpush1.msra.mxu0 0.0
        %1526 = vmatprep.subr.mxu0 0.0
        %1527 = vmatpush1.msra.mxu0 0.0
        %1528 = vmatprep.subr.mxu0 0.0
        %1529 = vmatpush1.msra.mxu0 0.0
        %1530 = vmatprep.subr.mxu0 0.0
        %1531 = vmatpush1.msra.mxu0 0.0
        %1532 = vmatprep.subr.mxu0 0.0
        %1533 = vmatpush1.msra.mxu0 0.0
        %1534 = vmatprep.subr.mxu0 0.0
        %1535 = vmatpush1.msra.mxu0 0.0
        %1536 = vmatprep.subr.mxu0 0.0
        %1537 = vmatpush1.msra.mxu0 0.0
        %1538 = vmatprep.subr.mxu0 0.0
        %1539 = vmatpush1.msra.mxu0 0.0
        %1540 = vmatprep.subr.mxu0 0.0
        %1541 = vmatpush1.msra.mxu0 0.0
        %1542 = vmatprep.subr.mxu0 0.0
        %1543 = vmatpush1.msra.mxu0 0.0
        %1544 = vmatprep.subr.mxu0 0.0
        %1545 = vmatpush1.msra.mxu0 0.0
        %1546 = vmatprep.subr.mxu0 0.0
        %1547 = vmatpush1.msra.mxu0 0.0
        %1548 = vmatprep.subr.mxu0 0.0
        %1549 = vmatpush1.msra.mxu0 0.0
        %1550 = vmatprep.subr.mxu0 0.0
        %1551 = vmatpush1.msra.mxu0 0.0
        %1552 = vmatprep.subr.mxu0 0.0
        %1553 = vmatpush1.msra.mxu0 0.0
        %1554 = vmatprep.subr.mxu0 0.0
        %1555 = vmatpush1.msra.mxu0 0.0
        %1556 = vmatprep.mubr.f32.mxu0 0.0
        %1557 = vmatmul.mubr.f32.gmra.mrb[0].mxu0 %v1490
        %v1558 = vpop.f32.mrb[0].mxu0
        %v1559 = vadd.f32 0.0, %v1558
        %v1560 = vpop.f32.mrb[0].mxu0
        %1561 = vdwg.mxu0
        %v1562 = vadd.f32 %v678, %v1559
        %v1563 = vld [vmem:[%s10] sm:$0x1]
        %v1565 = vlaneseq
        %v1566 = vshrl.u32 %v1565, 7
        %v1567 = vsub.s32 0, %v1566
        %v1568 = vrot.slane %v1563, %v1567
        %v1570 = vadd.f32 %v1562, %v1568
        %v1571 = vld [vmem:[%s11] sm:$0x1]
        %v1572 = vld [vmem:[%s12] sm:$0x1]
        %v1573 = vsel %vm650, %v1570, 0.0
        %1574 = vadd.xlane.f32.xlu0 %v1573
        %v1575 = vpop.xlane.xlu0 %1574
        %v1576 = vmul.f32 %v1575, %v654
        %v1577 = vsub.f32 %v1570, %v1576
        %v1578 = vmul.f32 %v1577, %v1577
        %v1579 = vsel %vm650, %v1578, 0.0
        %1580 = vadd.xlane.f32.xlu0 %v1579
        %v1581 = vpop.xlane.xlu0 %1580
        %v1582 = vmul.f32 %v1581, %v654
        %v1583 = vadd.f32 %v1582, 1e-05
        %v1584 = vrsqrt.pop %v1583
        %v1585 = vmul.f32 %v1577, %v1584
        %v1587 = vlaneseq
        %v1588 = vshrl.u32 %v1587, 7
        %v1589 = vsub.s32 0, %v1588
        %v1590 = vrot.slane %v1571, %v1589
        %v1592 = vmul.f32 %v1585, %v1590
        %v1594 = vlaneseq
        %v1595 = vshrl.u32 %v1594, 7
        %v1596 = vsub.s32 0, %v1595
        %v1597 = vrot.slane %v1572, %v1596
        %v1599 = vadd.f32 %v1592, %v1597
        %v1600 = vld [vmem:[%s13] sm:$0xff]
        %v1601 = vld [vmem:[%s13 + $0x8] sm:$0xff]
        %v1602 = vld [vmem:[%s13 + $0x10] sm:$0xff]
        %v1603 = vld [vmem:[%s13 + $0x18] sm:$0xff]
        %v1604 = vld [vmem:[%s14] sm:$0x1]
        %v1606 = vlaneseq
        %v1607 = vshrl.u32 %v1606, 7
        %v1608 = vsub.s32 0, %v1607
        %v1609 = vrot.slane %v1604, %v1608
        %v1612 = vsel %vm719, %v1599, 0
        %1614 = vmatprep.subr.mxu0 0.0
        %1615 = vmatpush1.msra.mxu0 %v1600
        %1616 = vmatprep.subr.mxu0 0.0
        %1617 = vmatpush1.msra.mxu0 %v1601
        %1618 = vmatprep.subr.mxu0 0.0
        %1619 = vmatpush1.msra.mxu0 %v1602
        %1620 = vmatprep.subr.mxu0 0.0
        %1621 = vmatpush1.msra.mxu0 %v1603
        %1622 = vmatprep.subr.mxu0 0.0
        %1623 = vmatpush1.msra.mxu0 0.0
        %1624 = vmatprep.subr.mxu0 0.0
        %1625 = vmatpush1.msra.mxu0 0.0
        %1626 = vmatprep.subr.mxu0 0.0
        %1627 = vmatpush1.msra.mxu0 0.0
        %1628 = vmatprep.subr.mxu0 0.0
        %1629 = vmatpush1.msra.mxu0 0.0
        %1630 = vmatprep.subr.mxu0 0.0
        %1631 = vmatpush1.msra.mxu0 0.0
        %1632 = vmatprep.subr.mxu0 0.0
        %1633 = vmatpush1.msra.mxu0 0.0
        %1634 = vmatprep.subr.mxu0 0.0
        %1635 = vmatpush1.msra.mxu0 0.0
        %1636 = vmatprep.subr.mxu0 0.0
        %1637 = vmatpush1.msra.mxu0 0.0
        %1638 = vmatprep.subr.mxu0 0.0
        %1639 = vmatpush1.msra.mxu0 0.0
        %1640 = vmatprep.subr.mxu0 0.0
        %1641 = vmatpush1.msra.mxu0 0.0
        %1642 = vmatprep.subr.mxu0 0.0
        %1643 = vmatpush1.msra.mxu0 0.0
        %1644 = vmatprep.subr.mxu0 0.0
        %1645 = vmatpush1.msra.mxu0 0.0
        %1646 = vmatprep.subr.mxu0 0.0
        %1647 = vmatpush1.msra.mxu0 0.0
        %1648 = vmatprep.subr.mxu0 0.0
        %1649 = vmatpush1.msra.mxu0 0.0
        %1650 = vmatprep.subr.mxu0 0.0
        %1651 = vmatpush1.msra.mxu0 0.0
        %1652 = vmatprep.subr.mxu0 0.0
        %1653 = vmatpush1.msra.mxu0 0.0
        %1654 = vmatprep.subr.mxu0 0.0
        %1655 = vmatpush1.msra.mxu0 0.0
        %1656 = vmatprep.subr.mxu0 0.0
        %1657 = vmatpush1.msra.mxu0 0.0
        %1658 = vmatprep.subr.mxu0 0.0
        %1659 = vmatpush1.msra.mxu0 0.0
        %1660 = vmatprep.subr.mxu0 0.0
        %1661 = vmatpush1.msra.mxu0 0.0
        %1662 = vmatprep.subr.mxu0 0.0
        %1663 = vmatpush1.msra.mxu0 0.0
        %1664 = vmatprep.subr.mxu0 0.0
        %1665 = vmatpush1.msra.mxu0 0.0
        %1666 = vmatprep.subr.mxu0 0.0
        %1667 = vmatpush1.msra.mxu0 0.0
        %1668 = vmatprep.subr.mxu0 0.0
        %1669 = vmatpush1.msra.mxu0 0.0
        %1670 = vmatprep.subr.mxu0 0.0
        %1671 = vmatpush1.msra.mxu0 0.0
        %1672 = vmatprep.subr.mxu0 0.0
        %1673 = vmatpush1.msra.mxu0 0.0
        %1674 = vmatprep.subr.mxu0 0.0
        %1675 = vmatpush1.msra.mxu0 0.0
        %1676 = vmatprep.subr.mxu0 0.0
        %1677 = vmatpush1.msra.mxu0 0.0
        %1678 = vmatprep.mubr.f32.mxu0 0.0
        %1679 = vmatmul.mubr.f32.gmra.mrb[0].mxu0 %v1612
        %v1680 = vpop.f32.mrb[0].mxu0
        %v1681 = vadd.f32 %v1609, %v1680
        %v1682 = vpop.f32.mrb[0].mxu0
        %1683 = vdwg.mxu0
        %v1684 = vmul.f32 %v1681, 1.702
        %v1685 = vxor.u32 %v1684, 2147483648
        %v1686 = vmul.f32 %v1685, 1.442695
        %v1687 = vpow.pop %v1686
        %v1688 = vadd.f32 %v1687, 1.0
        %v1689 = vrcp.pop %v1688
        %v1690 = vmul.f32 1.0, %v1689
        %v1691 = vmul.f32 %v1681, %v1690
        %v1692 = vld [vmem:[%s15] sm:$0xff]
        %v1693 = vld [vmem:[%s15 + $0x8] sm:$0xff]
        %v1694 = vld [vmem:[%s15 + $0x10] sm:$0xff]
        %v1695 = vld [vmem:[%s15 + $0x18] sm:$0xff]
        %v1696 = vld [vmem:[%s15 + $0x20] sm:$0xff]
        %v1697 = vld [vmem:[%s15 + $0x28] sm:$0xff]
        %v1698 = vld [vmem:[%s15 + $0x30] sm:$0xff]
        %v1699 = vld [vmem:[%s15 + $0x38] sm:$0xff]
        %v1701 = vsel %vm574, %v1691, 0
        %1703 = vmatprep.subr.mxu0 0.0
        %1704 = vmatpush1.msra.mxu0 %v1692
        %1705 = vmatprep.subr.mxu0 0.0
        %1706 = vmatpush1.msra.mxu0 %v1693
        %1707 = vmatprep.subr.mxu0 0.0
        %1708 = vmatpush1.msra.mxu0 %v1694
        %1709 = vmatprep.subr.mxu0 0.0
        %1710 = vmatpush1.msra.mxu0 %v1695
        %1711 = vmatprep.subr.mxu0 0.0
        %1712 = vmatpush1.msra.mxu0 %v1696
        %1713 = vmatprep.subr.mxu0 0.0
        %1714 = vmatpush1.msra.mxu0 %v1697
        %1715 = vmatprep.subr.mxu0 0.0
        %1716 = vmatpush1.msra.mxu0 %v1698
        %1717 = vmatprep.subr.mxu0 0.0
        %1718 = vmatpush1.msra.mxu0 %v1699
        %1719 = vmatprep.subr.mxu0 0.0
        %1720 = vmatpush1.msra.mxu0 0.0
        %1721 = vmatprep.subr.mxu0 0.0
        %1722 = vmatpush1.msra.mxu0 0.0
        %1723 = vmatprep.subr.mxu0 0.0
        %1724 = vmatpush1.msra.mxu0 0.0
        %1725 = vmatprep.subr.mxu0 0.0
        %1726 = vmatpush1.msra.mxu0 0.0
        %1727 = vmatprep.subr.mxu0 0.0
        %1728 = vmatpush1.msra.mxu0 0.0
        %1729 = vmatprep.subr.mxu0 0.0
        %1730 = vmatpush1.msra.mxu0 0.0
        %1731 = vmatprep.subr.mxu0 0.0
        %1732 = vmatpush1.msra.mxu0 0.0
        %1733 = vmatprep.subr.mxu0 0.0
        %1734 = vmatpush1.msra.mxu0 0.0
        %1735 = vmatprep.subr.mxu0 0.0
        %1736 = vmatpush1.msra.mxu0 0.0
        %1737 = vmatprep.subr.mxu0 0.0
        %1738 = vmatpush1.msra.mxu0 0.0
        %1739 = vmatprep.subr.mxu0 0.0
        %1740 = vmatpush1.msra.mxu0 0.0
        %1741 = vmatprep.subr.mxu0 0.0
        %1742 = vmatpush1.msra.mxu0 0.0
        %1743 = vmatprep.subr.mxu0 0.0
        %1744 = vmatpush1.msra.mxu0 0.0
        %1745 = vmatprep.subr.mxu0 0.0
        %1746 = vmatpush1.msra.mxu0 0.0
        %1747 = vmatprep.subr.mxu0 0.0
        %1748 = vmatpush1.msra.mxu0 0.0
        %1749 = vmatprep.subr.mxu0 0.0
        %1750 = vmatpush1.msra.mxu0 0.0
        %1751 = vmatprep.subr.mxu0 0.0
        %1752 = vmatpush1.msra.mxu0 0.0
        %1753 = vmatprep.subr.mxu0 0.0
        %1754 = vmatpush1.msra.mxu0 0.0
        %1755 = vmatprep.subr.mxu0 0.0
        %1756 = vmatpush1.msra.mxu0 0.0
        %1757 = vmatprep.subr.mxu0 0.0
        %1758 = vmatpush1.msra.mxu0 0.0
        %1759 = vmatprep.subr.mxu0 0.0
        %1760 = vmatpush1.msra.mxu0 0.0
        %1761 = vmatprep.subr.mxu0 0.0
        %1762 = vmatpush1.msra.mxu0 0.0
        %1763 = vmatprep.subr.mxu0 0.0
        %1764 = vmatpush1.msra.mxu0 0.0
        %1765 = vmatprep.subr.mxu0 0.0
        %1766 = vmatpush1.msra.mxu0 0.0
        %1767 = vmatprep.mubr.f32.mxu0 0.0
        %1768 = vmatmul.mubr.f32.gmra.mrb[0].mxu0 %v1701
        %v1769 = vpop.f32.mrb[0].mxu0
        %v1770 = vadd.f32 0.0, %v1769
        %v1771 = vpop.f32.mrb[0].mxu0
        %1772 = vdwg.mxu0
        %v1773 = vadd.f32 %v1570, %v1770
        %v1774 = vld [vmem:[%s16] sm:$0x1]
        %v1776 = vlaneseq
        %v1777 = vshrl.u32 %v1776, 7
        %v1778 = vsub.s32 0, %v1777
        %v1779 = vrot.slane %v1774, %v1778
        %v1781 = vadd.f32 %v1773, %v1779
        %s1782 = scalar_lea.vmem %s5, 1
        %v1783 = vld [vmem:[%s1782] sm:$0x1]
        %s1784 = scalar_lea.vmem %s6, 1
        %v1785 = vld [vmem:[%s1784] sm:$0x1]
        %v1786 = vsel %vm650, %v1781, 0.0
        %1787 = vadd.xlane.f32.xlu0 %v1786
        %v1788 = vpop.xlane.xlu0 %1787
        %v1789 = vmul.f32 %v1788, %v654
        %v1790 = vsub.f32 %v1781, %v1789
        %v1791 = vmul.f32 %v1790, %v1790
        %v1792 = vsel %vm650, %v1791, 0.0
        %1793 = vadd.xlane.f32.xlu0 %v1792
        %v1794 = vpop.xlane.xlu0 %1793
        %v1795 = vmul.f32 %v1794, %v654
        %v1796 = vadd.f32 %v1795, 1e-05
        %v1797 = vrsqrt.pop %v1796
        %v1798 = vmul.f32 %v1790, %v1797
        %v1800 = vlaneseq
        %v1801 = vshrl.u32 %v1800, 7
        %v1802 = vsub.s32 0, %v1801
        %v1803 = vrot.slane %v1783, %v1802
        %v1805 = vmul.f32 %v1798, %v1803
        %v1807 = vlaneseq
        %v1808 = vshrl.u32 %v1807, 7
        %v1809 = vsub.s32 0, %v1808
        %v1810 = vrot.slane %v1785, %v1809
        %v1812 = vadd.f32 %v1805, %v1810
        %s1813 = scalar_lea.vmem %s7, 32
        %v1814 = vld [vmem:[%s1813] sm:$0xff]
        %v1815 = vld [vmem:[%s1813 + $0x8] sm:$0xff]
        %v1816 = vld [vmem:[%s1813 + $0x10] sm:$0xff]
        %v1817 = vld [vmem:[%s1813 + $0x18] sm:$0xff]
        %s1818 = scalar_lea.vmem %s8, 1
        %v1819 = vld [vmem:[%s1818] sm:$0x1]
        %v1821 = vlaneseq
        %v1822 = vshrl.u32 %v1821, 7
        %v1823 = vsub.s32 0, %v1822
        %v1824 = vrot.slane %v1819, %v1823
        %v1827 = vsel %vm719, %v1812, 0
        %1829 = vmatprep.subr.mxu0 0.0
        %1830 = vmatpush1.msra.mxu0 %v1814
        %1831 = vmatprep.subr.mxu0 0.0
        %1832 = vmatpush1.msra.mxu0 %v1815
        %1833 = vmatprep.subr.mxu0 0.0
        %1834 = vmatpush1.msra.mxu0 %v1816
        %1835 = vmatprep.subr.mxu0 0.0
        %1836 = vmatpush1.msra.mxu0 %v1817
        %1837 = vmatprep.subr.mxu0 0.0
        %1838 = vmatpush1.msra.mxu0 0.0
        %1839 = vmatprep.subr.mxu0 0.0
        %1840 = vmatpush1.msra.mxu0 0.0
        %1841 = vmatprep.subr.mxu0 0.0
        %1842 = vmatpush1.msra.mxu0 0.0
        %1843 = vmatprep.subr.mxu0 0.0
        %1844 = vmatpush1.msra.mxu0 0.0
        %1845 = vmatprep.subr.mxu0 0.0
        %1846 = vmatpush1.msra.mxu0 0.0
        %1847 = vmatprep.subr.mxu0 0.0
        %1848 = vmatpush1.msra.mxu0 0.0
        %1849 = vmatprep.subr.mxu0 0.0
        %1850 = vmatpush1.msra.mxu0 0.0
        %1851 = vmatprep.subr.mxu0 0.0
        %1852 = vmatpush1.msra.mxu0 0.0
        %1853 = vmatprep.subr.mxu0 0.0
        %1854 = vmatpush1.msra.mxu0 0.0
        %1855 = vmatprep.subr.mxu0 0.0
        %1856 = vmatpush1.msra.mxu0 0.0
        %1857 = vmatprep.subr.mxu0 0.0
        %1858 = vmatpush1.msra.mxu0 0.0
        %1859 = vmatprep.subr.mxu0 0.0
        %1860 = vmatpush1.msra.mxu0 0.0
        %1861 = vmatprep.subr.mxu0 0.0
        %1862 = vmatpush1.msra.mxu0 0.0
        %1863 = vmatprep.subr.mxu0 0.0
        %1864 = vmatpush1.msra.mxu0 0.0
        %1865 = vmatprep.subr.mxu0 0.0
        %1866 = vmatpush1.msra.mxu0 0.0
        %1867 = vmatprep.subr.mxu0 0.0
        %1868 = vmatpush1.msra.mxu0 0.0
        %1869 = vmatprep.subr.mxu0 0.0
        %1870 = vmatpush1.msra.mxu0 0.0
        %1871 = vmatprep.subr.mxu0 0.0
        %1872 = vmatpush1.msra.mxu0 0.0
        %1873 = vmatprep.subr.mxu0 0.0
        %1874 = vmatpush1.msra.mxu0 0.0
        %1875 = vmatprep.subr.mxu0 0.0
        %1876 = vmatpush1.msra.mxu0 0.0
        %1877 = vmatprep.subr.mxu0 0.0
        %1878 = vmatpush1.msra.mxu0 0.0
        %1879 = vmatprep.subr.mxu0 0.0
        %1880 = vmatpush1.msra.mxu0 0.0
        %1881 = vmatprep.subr.mxu0 0.0
        %1882 = vmatpush1.msra.mxu0 0.0
        %1883 = vmatprep.subr.mxu0 0.0
        %1884 = vmatpush1.msra.mxu0 0.0
        %1885 = vmatprep.subr.mxu0 0.0
        %1886 = vmatpush1.msra.mxu0 0.0
        %1887 = vmatprep.subr.mxu0 0.0
        %1888 = vmatpush1.msra.mxu0 0.0
        %1889 = vmatprep.subr.mxu0 0.0
        %1890 = vmatpush1.msra.mxu0 0.0
        %1891 = vmatprep.subr.mxu0 0.0
        %1892 = vmatpush1.msra.mxu0 0.0
        %1893 = vmatprep.mubr.f32.mxu0 0.0
        %1894 = vmatmul.mubr.f32.gmra.mrb[0].mxu0 %v1827
        %v1895 = vpop.f32.mrb[0].mxu0
        %v1896 = vadd.f32 %v1824, %v1895
        %v1897 = vpop.f32.mrb[0].mxu0
        %1898 = vdwg.mxu0
        %v1899 = vmul.f32 %v1896, 0.35355338
        %1901 = vrot.lane.b32.xlu0 %v1899, 120
        %v1902 = vpop.permute.xlu0 %1901
        %1903 = vrot.lane.b32.xlu0 %v1899, 112
        %v1904 = vpop.permute.xlu0 %1903
        %1905 = vrot.lane.b32.xlu0 %v1899, 104
        %v1906 = vpop.permute.xlu0 %1905
        %1908 = vrot.lane.b32.xlu0 %v1896, 120
        %v1909 = vpop.permute.xlu0 %1908
        %1910 = vrot.lane.b32.xlu0 %v1896, 112
        %v1911 = vpop.permute.xlu0 %1910
        %1912 = vrot.lane.b32.xlu0 %v1896, 104
        %v1913 = vpop.permute.xlu0 %1912
        %1914 = vrot.lane.b32.xlu0 %v1896, 96
        %v1915 = vpop.permute.xlu0 %1914
        %v1916 = vsel %vm810, %v1899, 0
        %v1918 = vsel %vm810, %v1915, 0
        %1920 = vmatprep.subr.mxu0 0.0
        %1921 = vmatpush1.xpose.msra.mxu0 %v1918
        %1922 = vmatprep.subr.mxu0 0.0
        %1923 = vmatpush1.xpose.msra.mxu0 0.0
        %1924 = vmatprep.subr.mxu0 0.0
        %1925 = vmatpush1.xpose.msra.mxu0 0.0
        %1926 = vmatprep.subr.mxu0 0.0
        %1927 = vmatpush1.xpose.msra.mxu0 0.0
        %1928 = vmatprep.subr.mxu0 0.0
        %1929 = vmatpush1.xpose.msra.mxu0 0.0
        %1930 = vmatprep.subr.mxu0 0.0
        %1931 = vmatpush1.xpose.msra.mxu0 0.0
        %1932 = vmatprep.subr.mxu0 0.0
        %1933 = vmatpush1.xpose.msra.mxu0 0.0
        %1934 = vmatprep.subr.mxu0 0.0
        %1935 = vmatpush1.xpose.msra.mxu0 0.0
        %1936 = vmatprep.subr.mxu0 0.0
        %1937 = vmatpush1.xpose.msra.mxu0 0.0
        %1938 = vmatprep.subr.mxu0 0.0
        %1939 = vmatpush1.xpose.msra.mxu0 0.0
        %1940 = vmatprep.subr.mxu0 0.0
        %1941 = vmatpush1.xpose.msra.mxu0 0.0
        %1942 = vmatprep.subr.mxu0 0.0
        %1943 = vmatpush1.xpose.msra.mxu0 0.0
        %1944 = vmatprep.subr.mxu0 0.0
        %1945 = vmatpush1.xpose.msra.mxu0 0.0
        %1946 = vmatprep.subr.mxu0 0.0
        %1947 = vmatpush1.xpose.msra.mxu0 0.0
        %1948 = vmatprep.subr.mxu0 0.0
        %1949 = vmatpush1.xpose.msra.mxu0 0.0
        %1950 = vmatprep.subr.mxu0 0.0
        %1951 = vmatpush1.xpose.msra.mxu0 0.0
        %1952 = vmatprep.subr.mxu0 0.0
        %1953 = vmatpush1.xpose.msra.mxu0 0.0
        %1954 = vmatprep.subr.mxu0 0.0
        %1955 = vmatpush1.xpose.msra.mxu0 0.0
        %1956 = vmatprep.subr.mxu0 0.0
        %1957 = vmatpush1.xpose.msra.mxu0 0.0
        %1958 = vmatprep.subr.mxu0 0.0
        %1959 = vmatpush1.xpose.msra.mxu0 0.0
        %1960 = vmatprep.subr.mxu0 0.0
        %1961 = vmatpush1.xpose.msra.mxu0 0.0
        %1962 = vmatprep.subr.mxu0 0.0
        %1963 = vmatpush1.xpose.msra.mxu0 0.0
        %1964 = vmatprep.subr.mxu0 0.0
        %1965 = vmatpush1.xpose.msra.mxu0 0.0
        %1966 = vmatprep.subr.mxu0 0.0
        %1967 = vmatpush1.xpose.msra.mxu0 0.0
        %1968 = vmatprep.subr.mxu0 0.0
        %1969 = vmatpush1.xpose.msra.mxu0 0.0
        %1970 = vmatprep.subr.mxu0 0.0
        %1971 = vmatpush1.xpose.msra.mxu0 0.0
        %1972 = vmatprep.subr.mxu0 0.0
        %1973 = vmatpush1.xpose.msra.mxu0 0.0
        %1974 = vmatprep.subr.mxu0 0.0
        %1975 = vmatpush1.xpose.msra.mxu0 0.0
        %1976 = vmatprep.subr.mxu0 0.0
        %1977 = vmatpush1.xpose.msra.mxu0 0.0
        %1978 = vmatprep.subr.mxu0 0.0
        %1979 = vmatpush1.xpose.msra.mxu0 0.0
        %1980 = vmatprep.subr.mxu0 0.0
        %1981 = vmatpush1.xpose.msra.mxu0 0.0
        %1982 = vmatprep.subr.mxu0 0.0
        %1983 = vmatpush1.xpose.msra.mxu0 0.0
        %1984 = vmatprep.mubr.f32.mxu0 0.0
        %1985 = vmatmul.mubr.f32.gmra.mrb[0].mxu0 %v1916
        %v1986 = vpop.f32.mrb[0].mxu0
        %v1987 = vadd.f32 0.0, %v1986
        %v1988 = vpop.f32.mrb[0].mxu0
        %1989 = vdwg.mxu0
        %1990 = vrot.lane.b32.xlu0 %v1909, 96
        %v1991 = vpop.permute.xlu0 %1990
        %v1992 = vsel %vm810, %v1902, 0
        %v1994 = vsel %vm810, %v1991, 0
        %1996 = vmatprep.subr.mxu0 0.0
        %1997 = vmatpush1.xpose.msra.mxu0 %v1994
        %1998 = vmatprep.subr.mxu0 0.0
        %1999 = vmatpush1.xpose.msra.mxu0 0.0
        %2000 = vmatprep.subr.mxu0 0.0
        %2001 = vmatpush1.xpose.msra.mxu0 0.0
        %2002 = vmatprep.subr.mxu0 0.0
        %2003 = vmatpush1.xpose.msra.mxu0 0.0
        %2004 = vmatprep.subr.mxu0 0.0
        %2005 = vmatpush1.xpose.msra.mxu0 0.0
        %2006 = vmatprep.subr.mxu0 0.0
        %2007 = vmatpush1.xpose.msra.mxu0 0.0
        %2008 = vmatprep.subr.mxu0 0.0
        %2009 = vmatpush1.xpose.msra.mxu0 0.0
        %2010 = vmatprep.subr.mxu0 0.0
        %2011 = vmatpush1.xpose.msra.mxu0 0.0
        %2012 = vmatprep.subr.mxu0 0.0
        %2013 = vmatpush1.xpose.msra.mxu0 0.0
        %2014 = vmatprep.subr.mxu0 0.0
        %2015 = vmatpush1.xpose.msra.mxu0 0.0
        %2016 = vmatprep.subr.mxu0 0.0
        %2017 = vmatpush1.xpose.msra.mxu0 0.0
        %2018 = vmatprep.subr.mxu0 0.0
        %2019 = vmatpush1.xpose.msra.mxu0 0.0
        %2020 = vmatprep.subr.mxu0 0.0
        %2021 = vmatpush1.xpose.msra.mxu0 0.0
        %2022 = vmatprep.subr.mxu0 0.0
        %2023 = vmatpush1.xpose.msra.mxu0 0.0
        %2024 = vmatprep.subr.mxu0 0.0
        %2025 = vmatpush1.xpose.msra.mxu0 0.0
        %2026 = vmatprep.subr.mxu0 0.0
        %2027 = vmatpush1.xpose.msra.mxu0 0.0
        %2028 = vmatprep.subr.mxu0 0.0
        %2029 = vmatpush1.xpose.msra.mxu0 0.0
        %2030 = vmatprep.subr.mxu0 0.0
        %2031 = vmatpush1.xpose.msra.mxu0 0.0
        %2032 = vmatprep.subr.mxu0 0.0
        %2033 = vmatpush1.xpose.msra.mxu0 0.0
        %2034 = vmatprep.subr.mxu0 0.0
        %2035 = vmatpush1.xpose.msra.mxu0 0.0
        %2036 = vmatprep.subr.mxu0 0.0
        %2037 = vmatpush1.xpose.msra.mxu0 0.0
        %2038 = vmatprep.subr.mxu0 0.0
        %2039 = vmatpush1.xpose.msra.mxu0 0.0
        %2040 = vmatprep.subr.mxu0 0.0
        %2041 = vmatpush1.xpose.msra.mxu0 0.0
        %2042 = vmatprep.subr.mxu0 0.0
        %2043 = vmatpush1.xpose.msra.mxu0 0.0
        %2044 = vmatprep.subr.mxu0 0.0
        %2045 = vmatpush1.xpose.msra.mxu0 0.0
        %2046 = vmatprep.subr.mxu0 0.0
        %2047 = vmatpush1.xpose.msra.mxu0 0.0
        %2048 = vmatprep.subr.mxu0 0.0
        %2049 = vmatpush1.xpose.msra.mxu0 0.0
        %2050 = vmatprep.subr.mxu0 0.0
        %2051 = vmatpush1.xpose.msra.mxu0 0.0
        %2052 = vmatprep.subr.mxu0 0.0
        %2053 = vmatpush1.xpose.msra.mxu0 0.0
        %2054 = vmatprep.subr.mxu0 0.0
        %2055 = vmatpush1.xpose.msra.mxu0 0.0
        %2056 = vmatprep.subr.mxu0 0.0
        %2057 = vmatpush1.xpose.msra.mxu0 0.0
        %2058 = vmatprep.subr.mxu0 0.0
        %2059 = vmatpush1.xpose.msra.mxu0 0.0
        %2060 = vmatprep.mubr.f32.mxu0 0.0
        %2061 = vmatmul.mubr.f32.gmra.mrb[0].mxu0 %v1992
        %v2062 = vpop.f32.mrb[0].mxu0
        %v2063 = vadd.f32 0.0, %v2062
        %v2064 = vpop.f32.mrb[0].mxu0
        %2065 = vdwg.mxu0
        %2066 = vrot.lane.b32.xlu0 %v1911, 96
        %v2067 = vpop.permute.xlu0 %2066
        %v2068 = vsel %vm810, %v1904, 0
        %v2070 = vsel %vm810, %v2067, 0
        %2072 = vmatprep.subr.mxu0 0.0
        %2073 = vmatpush1.xpose.msra.mxu0 %v2070
        %2074 = vmatprep.subr.mxu0 0.0
        %2075 = vmatpush1.xpose.msra.mxu0 0.0
        %2076 = vmatprep.subr.mxu0 0.0
        %2077 = vmatpush1.xpose.msra.mxu0 0.0
        %2078 = vmatprep.subr.mxu0 0.0
        %2079 = vmatpush1.xpose.msra.mxu0 0.0
        %2080 = vmatprep.subr.mxu0 0.0
        %2081 = vmatpush1.xpose.msra.mxu0 0.0
        %2082 = vmatprep.subr.mxu0 0.0
        %2083 = vmatpush1.xpose.msra.mxu0 0.0
        %2084 = vmatprep.subr.mxu0 0.0
        %2085 = vmatpush1.xpose.msra.mxu0 0.0
        %2086 = vmatprep.subr.mxu0 0.0
        %2087 = vmatpush1.xpose.msra.mxu0 0.0
        %2088 = vmatprep.subr.mxu0 0.0
        %2089 = vmatpush1.xpose.msra.mxu0 0.0
        %2090 = vmatprep.subr.mxu0 0.0
        %2091 = vmatpush1.xpose.msra.mxu0 0.0
        %2092 = vmatprep.subr.mxu0 0.0
        %2093 = vmatpush1.xpose.msra.mxu0 0.0
        %2094 = vmatprep.subr.mxu0 0.0
        %2095 = vmatpush1.xpose.msra.mxu0 0.0
        %2096 = vmatprep.subr.mxu0 0.0
        %2097 = vmatpush1.xpose.msra.mxu0 0.0
        %2098 = vmatprep.subr.mxu0 0.0
        %2099 = vmatpush1.xpose.msra.mxu0 0.0
        %2100 = vmatprep.subr.mxu0 0.0
        %2101 = vmatpush1.xpose.msra.mxu0 0.0
        %2102 = vmatprep.subr.mxu0 0.0
        %2103 = vmatpush1.xpose.msra.mxu0 0.0
        %2104 = vmatprep.subr.mxu0 0.0
        %2105 = vmatpush1.xpose.msra.mxu0 0.0
        %2106 = vmatprep.subr.mxu0 0.0
        %2107 = vmatpush1.xpose.msra.mxu0 0.0
        %2108 = vmatprep.subr.mxu0 0.0
        %2109 = vmatpush1.xpose.msra.mxu0 0.0
        %2110 = vmatprep.subr.mxu0 0.0
        %2111 = vmatpush1.xpose.msra.mxu0 0.0
        %2112 = vmatprep.subr.mxu0 0.0
        %2113 = vmatpush1.xpose.msra.mxu0 0.0
        %2114 = vmatprep.subr.mxu0 0.0
        %2115 = vmatpush1.xpose.msra.mxu0 0.0
        %2116 = vmatprep.subr.mxu0 0.0
        %2117 = vmatpush1.xpose.msra.mxu0 0.0
        %2118 = vmatprep.subr.mxu0 0.0
        %2119 = vmatpush1.xpose.msra.mxu0 0.0
        %2120 = vmatprep.subr.mxu0 0.0
        %2121 = vmatpush1.xpose.msra.mxu0 0.0
        %2122 = vmatprep.subr.mxu0 0.0
        %2123 = vmatpush1.xpose.msra.mxu0 0.0
        %2124 = vmatprep.subr.mxu0 0.0
        %2125 = vmatpush1.xpose.msra.mxu0 0.0
        %2126 = vmatprep.subr.mxu0 0.0
        %2127 = vmatpush1.xpose.msra.mxu0 0.0
        %2128 = vmatprep.subr.mxu0 0.0
        %2129 = vmatpush1.xpose.msra.mxu0 0.0
        %2130 = vmatprep.subr.mxu0 0.0
        %2131 = vmatpush1.xpose.msra.mxu0 0.0
        %2132 = vmatprep.subr.mxu0 0.0
        %2133 = vmatpush1.xpose.msra.mxu0 0.0
        %2134 = vmatprep.subr.mxu0 0.0
        %2135 = vmatpush1.xpose.msra.mxu0 0.0
        %2136 = vmatprep.mubr.f32.mxu0 0.0
        %2137 = vmatmul.mubr.f32.gmra.mrb[0].mxu0 %v2068
        %v2138 = vpop.f32.mrb[0].mxu0
        %v2139 = vadd.f32 0.0, %v2138
        %v2140 = vpop.f32.mrb[0].mxu0
        %2141 = vdwg.mxu0
        %2142 = vrot.lane.b32.xlu0 %v1913, 96
        %v2143 = vpop.permute.xlu0 %2142
        %v2144 = vsel %vm810, %v1906, 0
        %v2146 = vsel %vm810, %v2143, 0
        %2148 = vmatprep.subr.mxu0 0.0
        %2149 = vmatpush1.xpose.msra.mxu0 %v2146
        %2150 = vmatprep.subr.mxu0 0.0
        %2151 = vmatpush1.xpose.msra.mxu0 0.0
        %2152 = vmatprep.subr.mxu0 0.0
        %2153 = vmatpush1.xpose.msra.mxu0 0.0
        %2154 = vmatprep.subr.mxu0 0.0
        %2155 = vmatpush1.xpose.msra.mxu0 0.0
        %2156 = vmatprep.subr.mxu0 0.0
        %2157 = vmatpush1.xpose.msra.mxu0 0.0
        %2158 = vmatprep.subr.mxu0 0.0
        %2159 = vmatpush1.xpose.msra.mxu0 0.0
        %2160 = vmatprep.subr.mxu0 0.0
        %2161 = vmatpush1.xpose.msra.mxu0 0.0
        %2162 = vmatprep.subr.mxu0 0.0
        %2163 = vmatpush1.xpose.msra.mxu0 0.0
        %2164 = vmatprep.subr.mxu0 0.0
        %2165 = vmatpush1.xpose.msra.mxu0 0.0
        %2166 = vmatprep.subr.mxu0 0.0
        %2167 = vmatpush1.xpose.msra.mxu0 0.0
        %2168 = vmatprep.subr.mxu0 0.0
        %2169 = vmatpush1.xpose.msra.mxu0 0.0
        %2170 = vmatprep.subr.mxu0 0.0
        %2171 = vmatpush1.xpose.msra.mxu0 0.0
        %2172 = vmatprep.subr.mxu0 0.0
        %2173 = vmatpush1.xpose.msra.mxu0 0.0
        %2174 = vmatprep.subr.mxu0 0.0
        %2175 = vmatpush1.xpose.msra.mxu0 0.0
        %2176 = vmatprep.subr.mxu0 0.0
        %2177 = vmatpush1.xpose.msra.mxu0 0.0
        %2178 = vmatprep.subr.mxu0 0.0
        %2179 = vmatpush1.xpose.msra.mxu0 0.0
        %2180 = vmatprep.subr.mxu0 0.0
        %2181 = vmatpush1.xpose.msra.mxu0 0.0
        %2182 = vmatprep.subr.mxu0 0.0
        %2183 = vmatpush1.xpose.msra.mxu0 0.0
        %2184 = vmatprep.subr.mxu0 0.0
        %2185 = vmatpush1.xpose.msra.mxu0 0.0
        %2186 = vmatprep.subr.mxu0 0.0
        %2187 = vmatpush1.xpose.msra.mxu0 0.0
        %2188 = vmatprep.subr.mxu0 0.0
        %2189 = vmatpush1.xpose.msra.mxu0 0.0
        %2190 = vmatprep.subr.mxu0 0.0
        %2191 = vmatpush1.xpose.msra.mxu0 0.0
        %2192 = vmatprep.subr.mxu0 0.0
        %2193 = vmatpush1.xpose.msra.mxu0 0.0
        %2194 = vmatprep.subr.mxu0 0.0
        %2195 = vmatpush1.xpose.msra.mxu0 0.0
        %2196 = vmatprep.subr.mxu0 0.0
        %2197 = vmatpush1.xpose.msra.mxu0 0.0
        %2198 = vmatprep.subr.mxu0 0.0
        %2199 = vmatpush1.xpose.msra.mxu0 0.0
        %2200 = vmatprep.subr.mxu0 0.0
        %2201 = vmatpush1.xpose.msra.mxu0 0.0
        %2202 = vmatprep.subr.mxu0 0.0
        %2203 = vmatpush1.xpose.msra.mxu0 0.0
        %2204 = vmatprep.subr.mxu0 0.0
        %2205 = vmatpush1.xpose.msra.mxu0 0.0
        %2206 = vmatprep.subr.mxu0 0.0
        %2207 = vmatpush1.xpose.msra.mxu0 0.0
        %2208 = vmatprep.subr.mxu0 0.0
        %2209 = vmatpush1.xpose.msra.mxu0 0.0
        %2210 = vmatprep.subr.mxu0 0.0
        %2211 = vmatpush1.xpose.msra.mxu0 0.0
        %2212 = vmatprep.mubr.f32.mxu0 0.0
        %2213 = vmatmul.mubr.f32.gmra.mrb[0].mxu0 %v2144
        %v2214 = vpop.f32.mrb[0].mxu0
        %v2215 = vadd.f32 0.0, %v2214
        %v2216 = vpop.f32.mrb[0].mxu0
        %2217 = vdwg.mxu0
        %v2218 = vsel %vm1113, %v1987, -inf
        %2219 = vmax.xlane.f32.xlu0 %v2218
        %v2220 = vpop.xlane.xlu0 %2219
        %v2221 = vsel %vm1113, %v2063, -inf
        %2222 = vmax.xlane.f32.xlu0 %v2221
        %v2223 = vpop.xlane.xlu0 %2222
        %v2224 = vsel %vm1113, %v2139, -inf
        %2225 = vmax.xlane.f32.xlu0 %v2224
        %v2226 = vpop.xlane.xlu0 %2225
        %v2227 = vsel %vm1113, %v2215, -inf
        %2228 = vmax.xlane.f32.xlu0 %v2227
        %v2229 = vpop.xlane.xlu0 %2228
        %v2230 = vsub.f32 %v1987, %v2220
        %v2231 = vsub.f32 %v2063, %v2223
        %v2232 = vsub.f32 %v2139, %v2226
        %v2233 = vsub.f32 %v2215, %v2229
        %v2234 = vmul.f32 %v2230, 1.442695
        %v2235 = vpow.pop %v2234
        %v2236 = vmul.f32 %v2231, 1.442695
        %v2237 = vpow.pop %v2236
        %v2238 = vmul.f32 %v2232, 1.442695
        %v2239 = vpow.pop %v2238
        %v2240 = vmul.f32 %v2233, 1.442695
        %v2241 = vpow.pop %v2240
        %v2242 = vsel %vm1113, %v2235, 0.0
        %2243 = vadd.xlane.f32.xlu0 %v2242
        %v2244 = vpop.xlane.xlu0 %2243
        %v2245 = vsel %vm1113, %v2237, 0.0
        %2246 = vadd.xlane.f32.xlu0 %v2245
        %v2247 = vpop.xlane.xlu0 %2246
        %v2248 = vsel %vm1113, %v2239, 0.0
        %2249 = vadd.xlane.f32.xlu0 %v2248
        %v2250 = vpop.xlane.xlu0 %2249
        %v2251 = vsel %vm1113, %v2241, 0.0
        %2252 = vadd.xlane.f32.xlu0 %v2251
        %v2253 = vpop.xlane.xlu0 %2252
        %v2254 = vrcp.pop %v2244
        %v2255 = vrcp.pop %v2247
        %v2256 = vrcp.pop %v2250
        %v2257 = vrcp.pop %v2253
        %v2258 = vmul.f32 %v2235, %v2254
        %v2259 = vmul.f32 %v2237, %v2255
        %v2260 = vmul.f32 %v2239, %v2256
        %v2261 = vmul.f32 %v2241, %v2257
        %2262 = vrot.lane.b32.xlu0 %v1896, 64
        %v2263 = vpop.permute.xlu0 %2262
        %v2265 = vsel %vm1160, %v2258, 0
        %v2267 = vsel %vm1164, %v2263, 0
        %2269 = vmatprep.subr.mxu0 0.0
        %2270 = vmatpush1.msra.mxu0 %v2267
        %2271 = vmatprep.subr.mxu0 0.0
        %2272 = vmatpush1.msra.mxu0 0.0
        %2273 = vmatprep.subr.mxu0 0.0
        %2274 = vmatpush1.msra.mxu0 0.0
        %2275 = vmatprep.subr.mxu0 0.0
        %2276 = vmatpush1.msra.mxu0 0.0
        %2277 = vmatprep.subr.mxu0 0.0
        %2278 = vmatpush1.msra.mxu0 0.0
        %2279 = vmatprep.subr.mxu0 0.0
        %2280 = vmatpush1.msra.mxu0 0.0
        %2281 = vmatprep.subr.mxu0 0.0
        %2282 = vmatpush1.msra.mxu0 0.0
        %2283 = vmatprep.subr.mxu0 0.0
        %2284 = vmatpush1.msra.mxu0 0.0
        %2285 = vmatprep.subr.mxu0 0.0
        %2286 = vmatpush1.msra.mxu0 0.0
        %2287 = vmatprep.subr.mxu0 0.0
        %2288 = vmatpush1.msra.mxu0 0.0
        %2289 = vmatprep.subr.mxu0 0.0
        %2290 = vmatpush1.msra.mxu0 0.0
        %2291 = vmatprep.subr.mxu0 0.0
        %2292 = vmatpush1.msra.mxu0 0.0
        %2293 = vmatprep.subr.mxu0 0.0
        %2294 = vmatpush1.msra.mxu0 0.0
        %2295 = vmatprep.subr.mxu0 0.0
        %2296 = vmatpush1.msra.mxu0 0.0
        %2297 = vmatprep.subr.mxu0 0.0
        %2298 = vmatpush1.msra.mxu0 0.0
        %2299 = vmatprep.subr.mxu0 0.0
        %2300 = vmatpush1.msra.mxu0 0.0
        %2301 = vmatprep.subr.mxu0 0.0
        %2302 = vmatpush1.msra.mxu0 0.0
        %2303 = vmatprep.subr.mxu0 0.0
        %2304 = vmatpush1.msra.mxu0 0.0
        %2305 = vmatprep.subr.mxu0 0.0
        %2306 = vmatpush1.msra.mxu0 0.0
        %2307 = vmatprep.subr.mxu0 0.0
        %2308 = vmatpush1.msra.mxu0 0.0
        %2309 = vmatprep.subr.mxu0 0.0
        %2310 = vmatpush1.msra.mxu0 0.0
        %2311 = vmatprep.subr.mxu0 0.0
        %2312 = vmatpush1.msra.mxu0 0.0
        %2313 = vmatprep.subr.mxu0 0.0
        %2314 = vmatpush1.msra.mxu0 0.0
        %2315 = vmatprep.subr.mxu0 0.0
        %2316 = vmatpush1.msra.mxu0 0.0
        %2317 = vmatprep.subr.mxu0 0.0
        %2318 = vmatpush1.msra.mxu0 0.0
        %2319 = vmatprep.subr.mxu0 0.0
        %2320 = vmatpush1.msra.mxu0 0.0
        %2321 = vmatprep.subr.mxu0 0.0
        %2322 = vmatpush1.msra.mxu0 0.0
        %2323 = vmatprep.subr.mxu0 0.0
        %2324 = vmatpush1.msra.mxu0 0.0
        %2325 = vmatprep.subr.mxu0 0.0
        %2326 = vmatpush1.msra.mxu0 0.0
        %2327 = vmatprep.subr.mxu0 0.0
        %2328 = vmatpush1.msra.mxu0 0.0
        %2329 = vmatprep.subr.mxu0 0.0
        %2330 = vmatpush1.msra.mxu0 0.0
        %2331 = vmatprep.subr.mxu0 0.0
        %2332 = vmatpush1.msra.mxu0 0.0
        %2333 = vmatprep.mubr.f32.mxu0 0.0
        %2334 = vmatmul.mubr.f32.gmra.mrb[0].mxu0 %v2265
        %v2335 = vpop.f32.mrb[0].mxu0
        %v2336 = vadd.f32 0.0, %v2335
        %v2337 = vpop.f32.mrb[0].mxu0
        %2338 = vdwg.mxu0
        %2339 = vrot.lane.b32.xlu0 %v1909, 64
        %v2340 = vpop.permute.xlu0 %2339
        %v2342 = vsel %vm1160, %v2259, 0
        %v2344 = vsel %vm1164, %v2340, 0
        %2346 = vmatprep.subr.mxu0 0.0
        %2347 = vmatpush1.msra.mxu0 %v2344
        %2348 = vmatprep.subr.mxu0 0.0
        %2349 = vmatpush1.msra.mxu0 0.0
        %2350 = vmatprep.subr.mxu0 0.0
        %2351 = vmatpush1.msra.mxu0 0.0
        %2352 = vmatprep.subr.mxu0 0.0
        %2353 = vmatpush1.msra.mxu0 0.0
        %2354 = vmatprep.subr.mxu0 0.0
        %2355 = vmatpush1.msra.mxu0 0.0
        %2356 = vmatprep.subr.mxu0 0.0
        %2357 = vmatpush1.msra.mxu0 0.0
        %2358 = vmatprep.subr.mxu0 0.0
        %2359 = vmatpush1.msra.mxu0 0.0
        %2360 = vmatprep.subr.mxu0 0.0
        %2361 = vmatpush1.msra.mxu0 0.0
        %2362 = vmatprep.subr.mxu0 0.0
        %2363 = vmatpush1.msra.mxu0 0.0
        %2364 = vmatprep.subr.mxu0 0.0
        %2365 = vmatpush1.msra.mxu0 0.0
        %2366 = vmatprep.subr.mxu0 0.0
        %2367 = vmatpush1.msra.mxu0 0.0
        %2368 = vmatprep.subr.mxu0 0.0
        %2369 = vmatpush1.msra.mxu0 0.0
        %2370 = vmatprep.subr.mxu0 0.0
        %2371 = vmatpush1.msra.mxu0 0.0
        %2372 = vmatprep.subr.mxu0 0.0
        %2373 = vmatpush1.msra.mxu0 0.0
        %2374 = vmatprep.subr.mxu0 0.0
        %2375 = vmatpush1.msra.mxu0 0.0
        %2376 = vmatprep.subr.mxu0 0.0
        %2377 = vmatpush1.msra.mxu0 0.0
        %2378 = vmatprep.subr.mxu0 0.0
        %2379 = vmatpush1.msra.mxu0 0.0
        %2380 = vmatprep.subr.mxu0 0.0
        %2381 = vmatpush1.msra.mxu0 0.0
        %2382 = vmatprep.subr.mxu0 0.0
        %2383 = vmatpush1.msra.mxu0 0.0
        %2384 = vmatprep.subr.mxu0 0.0
        %2385 = vmatpush1.msra.mxu0 0.0
        %2386 = vmatprep.subr.mxu0 0.0
        %2387 = vmatpush1.msra.mxu0 0.0
        %2388 = vmatprep.subr.mxu0 0.0
        %2389 = vmatpush1.msra.mxu0 0.0
        %2390 = vmatprep.subr.mxu0 0.0
        %2391 = vmatpush1.msra.mxu0 0.0
        %2392 = vmatprep.subr.mxu0 0.0
        %2393 = vmatpush1.msra.mxu0 0.0
        %2394 = vmatprep.subr.mxu0 0.0
        %2395 = vmatpush1.msra.mxu0 0.0
        %2396 = vmatprep.subr.mxu0 0.0
        %2397 = vmatpush1.msra.mxu0 0.0
        %2398 = vmatprep.subr.mxu0 0.0
        %2399 = vmatpush1.msra.mxu0 0.0
        %2400 = vmatprep.subr.mxu0 0.0
        %2401 = vmatpush1.msra.mxu0 0.0
        %2402 = vmatprep.subr.mxu0 0.0
        %2403 = vmatpush1.msra.mxu0 0.0
        %2404 = vmatprep.subr.mxu0 0.0
        %2405 = vmatpush1.msra.mxu0 0.0
        %2406 = vmatprep.subr.mxu0 0.0
        %2407 = vmatpush1.msra.mxu0 0.0
        %2408 = vmatprep.subr.mxu0 0.0
        %2409 = vmatpush1.msra.mxu0 0.0
        %2410 = vmatprep.mubr.f32.mxu0 0.0
        %2411 = vmatmul.mubr.f32.gmra.mrb[0].mxu0 %v2342
        %v2412 = vpop.f32.mrb[0].mxu0
        %v2413 = vadd.f32 0.0, %v2412
        %v2414 = vpop.f32.mrb[0].mxu0
        %2415 = vdwg.mxu0
        %2416 = vrot.lane.b32.xlu0 %v1911, 64
        %v2417 = vpop.permute.xlu0 %2416
        %v2419 = vsel %vm1160, %v2260, 0
        %v2421 = vsel %vm1164, %v2417, 0
        %2423 = vmatprep.subr.mxu0 0.0
        %2424 = vmatpush1.msra.mxu0 %v2421
        %2425 = vmatprep.subr.mxu0 0.0
        %2426 = vmatpush1.msra.mxu0 0.0
        %2427 = vmatprep.subr.mxu0 0.0
        %2428 = vmatpush1.msra.mxu0 0.0
        %2429 = vmatprep.subr.mxu0 0.0
        %2430 = vmatpush1.msra.mxu0 0.0
        %2431 = vmatprep.subr.mxu0 0.0
        %2432 = vmatpush1.msra.mxu0 0.0
        %2433 = vmatprep.subr.mxu0 0.0
        %2434 = vmatpush1.msra.mxu0 0.0
        %2435 = vmatprep.subr.mxu0 0.0
        %2436 = vmatpush1.msra.mxu0 0.0
        %2437 = vmatprep.subr.mxu0 0.0
        %2438 = vmatpush1.msra.mxu0 0.0
        %2439 = vmatprep.subr.mxu0 0.0
        %2440 = vmatpush1.msra.mxu0 0.0
        %2441 = vmatprep.subr.mxu0 0.0
        %2442 = vmatpush1.msra.mxu0 0.0
        %2443 = vmatprep.subr.mxu0 0.0
        %2444 = vmatpush1.msra.mxu0 0.0
        %2445 = vmatprep.subr.mxu0 0.0
        %2446 = vmatpush1.msra.mxu0 0.0
        %2447 = vmatprep.subr.mxu0 0.0
        %2448 = vmatpush1.msra.mxu0 0.0
        %2449 = vmatprep.subr.mxu0 0.0
        %2450 = vmatpush1.msra.mxu0 0.0
        %2451 = vmatprep.subr.mxu0 0.0
        %2452 = vmatpush1.msra.mxu0 0.0
        %2453 = vmatprep.subr.mxu0 0.0
        %2454 = vmatpush1.msra.mxu0 0.0
        %2455 = vmatprep.subr.mxu0 0.0
        %2456 = vmatpush1.msra.mxu0 0.0
        %2457 = vmatprep.subr.mxu0 0.0
        %2458 = vmatpush1.msra.mxu0 0.0
        %2459 = vmatprep.subr.mxu0 0.0
        %2460 = vmatpush1.msra.mxu0 0.0
        %2461 = vmatprep.subr.mxu0 0.0
        %2462 = vmatpush1.msra.mxu0 0.0
        %2463 = vmatprep.subr.mxu0 0.0
        %2464 = vmatpush1.msra.mxu0 0.0
        %2465 = vmatprep.subr.mxu0 0.0
        %2466 = vmatpush1.msra.mxu0 0.0
        %2467 = vmatprep.subr.mxu0 0.0
        %2468 = vmatpush1.msra.mxu0 0.0
        %2469 = vmatprep.subr.mxu0 0.0
        %2470 = vmatpush1.msra.mxu0 0.0
        %2471 = vmatprep.subr.mxu0 0.0
        %2472 = vmatpush1.msra.mxu0 0.0
        %2473 = vmatprep.subr.mxu0 0.0
        %2474 = vmatpush1.msra.mxu0 0.0
        %2475 = vmatprep.subr.mxu0 0.0
        %2476 = vmatpush1.msra.mxu0 0.0
        %2477 = vmatprep.subr.mxu0 0.0
        %2478 = vmatpush1.msra.mxu0 0.0
        %2479 = vmatprep.subr.mxu0 0.0
        %2480 = vmatpush1.msra.mxu0 0.0
        %2481 = vmatprep.subr.mxu0 0.0
        %2482 = vmatpush1.msra.mxu0 0.0
        %2483 = vmatprep.subr.mxu0 0.0
        %2484 = vmatpush1.msra.mxu0 0.0
        %2485 = vmatprep.subr.mxu0 0.0
        %2486 = vmatpush1.msra.mxu0 0.0
        %2487 = vmatprep.mubr.f32.mxu0 0.0
        %2488 = vmatmul.mubr.f32.gmra.mrb[0].mxu0 %v2419
        %v2489 = vpop.f32.mrb[0].mxu0
        %v2490 = vadd.f32 0.0, %v2489
        %v2491 = vpop.f32.mrb[0].mxu0
        %2492 = vdwg.mxu0
        %2493 = vrot.lane.b32.xlu0 %v1913, 64
        %v2494 = vpop.permute.xlu0 %2493
        %v2496 = vsel %vm1160, %v2261, 0
        %v2498 = vsel %vm1164, %v2494, 0
        %2500 = vmatprep.subr.mxu0 0.0
        %2501 = vmatpush1.msra.mxu0 %v2498
        %2502 = vmatprep.subr.mxu0 0.0
        %2503 = vmatpush1.msra.mxu0 0.0
        %2504 = vmatprep.subr.mxu0 0.0
        %2505 = vmatpush1.msra.mxu0 0.0
        %2506 = vmatprep.subr.mxu0 0.0
        %2507 = vmatpush1.msra.mxu0 0.0
        %2508 = vmatprep.subr.mxu0 0.0
        %2509 = vmatpush1.msra.mxu0 0.0
        %2510 = vmatprep.subr.mxu0 0.0
        %2511 = vmatpush1.msra.mxu0 0.0
        %2512 = vmatprep.subr.mxu0 0.0
        %2513 = vmatpush1.msra.mxu0 0.0
        %2514 = vmatprep.subr.mxu0 0.0
        %2515 = vmatpush1.msra.mxu0 0.0
        %2516 = vmatprep.subr.mxu0 0.0
        %2517 = vmatpush1.msra.mxu0 0.0
        %2518 = vmatprep.subr.mxu0 0.0
        %2519 = vmatpush1.msra.mxu0 0.0
        %2520 = vmatprep.subr.mxu0 0.0
        %2521 = vmatpush1.msra.mxu0 0.0
        %2522 = vmatprep.subr.mxu0 0.0
        %2523 = vmatpush1.msra.mxu0 0.0
        %2524 = vmatprep.subr.mxu0 0.0
        %2525 = vmatpush1.msra.mxu0 0.0
        %2526 = vmatprep.subr.mxu0 0.0
        %2527 = vmatpush1.msra.mxu0 0.0
        %2528 = vmatprep.subr.mxu0 0.0
        %2529 = vmatpush1.msra.mxu0 0.0
        %2530 = vmatprep.subr.mxu0 0.0
        %2531 = vmatpush1.msra.mxu0 0.0
        %2532 = vmatprep.subr.mxu0 0.0
        %2533 = vmatpush1.msra.mxu0 0.0
        %2534 = vmatprep.subr.mxu0 0.0
        %2535 = vmatpush1.msra.mxu0 0.0
        %2536 = vmatprep.subr.mxu0 0.0
        %2537 = vmatpush1.msra.mxu0 0.0
        %2538 = vmatprep.subr.mxu0 0.0
        %2539 = vmatpush1.msra.mxu0 0.0
        %2540 = vmatprep.subr.mxu0 0.0
        %2541 = vmatpush1.msra.mxu0 0.0
        %2542 = vmatprep.subr.mxu0 0.0
        %2543 = vmatpush1.msra.mxu0 0.0
        %2544 = vmatprep.subr.mxu0 0.0
        %2545 = vmatpush1.msra.mxu0 0.0
        %2546 = vmatprep.subr.mxu0 0.0
        %2547 = vmatpush1.msra.mxu0 0.0
        %2548 = vmatprep.subr.mxu0 0.0
        %2549 = vmatpush1.msra.mxu0 0.0
        %2550 = vmatprep.subr.mxu0 0.0
        %2551 = vmatpush1.msra.mxu0 0.0
        %2552 = vmatprep.subr.mxu0 0.0
        %2553 = vmatpush1.msra.mxu0 0.0
        %2554 = vmatprep.subr.mxu0 0.0
        %2555 = vmatpush1.msra.mxu0 0.0
        %2556 = vmatprep.subr.mxu0 0.0
        %2557 = vmatpush1.msra.mxu0 0.0
        %2558 = vmatprep.subr.mxu0 0.0
        %2559 = vmatpush1.msra.mxu0 0.0
        %2560 = vmatprep.subr.mxu0 0.0
        %2561 = vmatpush1.msra.mxu0 0.0
        %2562 = vmatprep.subr.mxu0 0.0
        %2563 = vmatpush1.msra.mxu0 0.0
        %2564 = vmatprep.mubr.f32.mxu0 0.0
        %2565 = vmatmul.mubr.f32.gmra.mrb[0].mxu0 %v2496
        %v2566 = vpop.f32.mrb[0].mxu0
        %v2567 = vadd.f32 0.0, %v2566
        %v2568 = vpop.f32.mrb[0].mxu0
        %2569 = vdwg.mxu0
        %2571 = vrot.lane.b32.xlu0 %v2413, 8
        %v2572 = vpop.permute.xlu0 %2571
        %2575 = vrot.lane.b32.xlu0 %v2490, 16
        %v2576 = vpop.permute.xlu0 %2575
        %2579 = vrot.lane.b32.xlu0 %v2567, 24
        %v2580 = vpop.permute.xlu0 %2579
        %v2582 = vsel %vm810, %v2336, %v2572
        %v2583 = vsel %vm1481, %v2582, %v2576
        %v2584 = vsel %vm1483, %v2583, %v2580
        %s2585 = scalar_lea.vmem %s9, 32
        %v2586 = vld [vmem:[%s2585] sm:$0xff]
        %v2587 = vld [vmem:[%s2585 + $0x8] sm:$0xff]
        %v2588 = vld [vmem:[%s2585 + $0x10] sm:$0xff]
        %v2589 = vld [vmem:[%s2585 + $0x18] sm:$0xff]
        %v2591 = vsel %vm719, %v2584, 0
        %2593 = vmatprep.subr.mxu0 0.0
        %2594 = vmatpush1.msra.mxu0 %v2586
        %2595 = vmatprep.subr.mxu0 0.0
        %2596 = vmatpush1.msra.mxu0 %v2587
        %2597 = vmatprep.subr.mxu0 0.0
        %2598 = vmatpush1.msra.mxu0 %v2588
        %2599 = vmatprep.subr.mxu0 0.0
        %2600 = vmatpush1.msra.mxu0 %v2589
        %2601 = vmatprep.subr.mxu0 0.0
        %2602 = vmatpush1.msra.mxu0 0.0
        %2603 = vmatprep.subr.mxu0 0.0
        %2604 = vmatpush1.msra.mxu0 0.0
        %2605 = vmatprep.subr.mxu0 0.0
        %2606 = vmatpush1.msra.mxu0 0.0
        %2607 = vmatprep.subr.mxu0 0.0
        %2608 = vmatpush1.msra.mxu0 0.0
        %2609 = vmatprep.subr.mxu0 0.0
        %2610 = vmatpush1.msra.mxu0 0.0
        %2611 = vmatprep.subr.mxu0 0.0
        %2612 = vmatpush1.msra.mxu0 0.0
        %2613 = vmatprep.subr.mxu0 0.0
        %2614 = vmatpush1.msra.mxu0 0.0
        %2615 = vmatprep.subr.mxu0 0.0
        %2616 = vmatpush1.msra.mxu0 0.0
        %2617 = vmatprep.subr.mxu0 0.0
        %2618 = vmatpush1.msra.mxu0 0.0
        %2619 = vmatprep.subr.mxu0 0.0
        %2620 = vmatpush1.msra.mxu0 0.0
        %2621 = vmatprep.subr.mxu0 0.0
        %2622 = vmatpush1.msra.mxu0 0.0
        %2623 = vmatprep.subr.mxu0 0.0
        %2624 = vmatpush1.msra.mxu0 0.0
        %2625 = vmatprep.subr.mxu0 0.0
        %2626 = vmatpush1.msra.mxu0 0.0
        %2627 = vmatprep.subr.mxu0 0.0
        %2628 = vmatpush1.msra.mxu0 0.0
        %2629 = vmatprep.subr.mxu0 0.0
        %2630 = vmatpush1.msra.mxu0 0.0
        %2631 = vmatprep.subr.mxu0 0.0
        %2632 = vmatpush1.msra.mxu0 0.0
        %2633 = vmatprep.subr.mxu0 0.0
        %2634 = vmatpush1.msra.mxu0 0.0
        %2635 = vmatprep.subr.mxu0 0.0
        %2636 = vmatpush1.msra.mxu0 0.0
        %2637 = vmatprep.subr.mxu0 0.0
        %2638 = vmatpush1.msra.mxu0 0.0
        %2639 = vmatprep.subr.mxu0 0.0
        %2640 = vmatpush1.msra.mxu0 0.0
        %2641 = vmatprep.subr.mxu0 0.0
        %2642 = vmatpush1.msra.mxu0 0.0
        %2643 = vmatprep.subr.mxu0 0.0
        %2644 = vmatpush1.msra.mxu0 0.0
        %2645 = vmatprep.subr.mxu0 0.0
        %2646 = vmatpush1.msra.mxu0 0.0
        %2647 = vmatprep.subr.mxu0 0.0
        %2648 = vmatpush1.msra.mxu0 0.0
        %2649 = vmatprep.subr.mxu0 0.0
        %2650 = vmatpush1.msra.mxu0 0.0
        %2651 = vmatprep.subr.mxu0 0.0
        %2652 = vmatpush1.msra.mxu0 0.0
        %2653 = vmatprep.subr.mxu0 0.0
        %2654 = vmatpush1.msra.mxu0 0.0
        %2655 = vmatprep.subr.mxu0 0.0
        %2656 = vmatpush1.msra.mxu0 0.0
        %2657 = vmatprep.mubr.f32.mxu0 0.0
        %2658 = vmatmul.mubr.f32.gmra.mrb[0].mxu0 %v2591
        %v2659 = vpop.f32.mrb[0].mxu0
        %v2660 = vadd.f32 0.0, %v2659
        %v2661 = vpop.f32.mrb[0].mxu0
        %2662 = vdwg.mxu0
        %v2663 = vadd.f32 %v1781, %v2660
        %s2664 = scalar_lea.vmem %s10, 1
        %v2665 = vld [vmem:[%s2664] sm:$0x1]
        %v2667 = vlaneseq
        %v2668 = vshrl.u32 %v2667, 7
        %v2669 = vsub.s32 0, %v2668
        %v2670 = vrot.slane %v2665, %v2669
        %v2672 = vadd.f32 %v2663, %v2670
        %s2673 = scalar_lea.vmem %s11, 1
        %v2674 = vld [vmem:[%s2673] sm:$0x1]
        %s2675 = scalar_lea.vmem %s12, 1
        %v2676 = vld [vmem:[%s2675] sm:$0x1]
        %v2677 = vsel %vm650, %v2672, 0.0
        %2678 = vadd.xlane.f32.xlu0 %v2677
        %v2679 = vpop.xlane.xlu0 %2678
        %v2680 = vmul.f32 %v2679, %v654
        %v2681 = vsub.f32 %v2672, %v2680
        %v2682 = vmul.f32 %v2681, %v2681
        %v2683 = vsel %vm650, %v2682, 0.0
        %2684 = vadd.xlane.f32.xlu0 %v2683
        %v2685 = vpop.xlane.xlu0 %2684
        %v2686 = vmul.f32 %v2685, %v654
        %v2687 = vadd.f32 %v2686, 1e-05
        %v2688 = vrsqrt.pop %v2687
        %v2689 = vmul.f32 %v2681, %v2688
        %v2691 = vlaneseq
        %v2692 = vshrl.u32 %v2691, 7
        %v2693 = vsub.s32 0, %v2692
        %v2694 = vrot.slane %v2674, %v2693
        %v2696 = vmul.f32 %v2689, %v2694
        %v2698 = vlaneseq
        %v2699 = vshrl.u32 %v2698, 7
        %v2700 = vsub.s32 0, %v2699
        %v2701 = vrot.slane %v2676, %v2700
        %v2703 = vadd.f32 %v2696, %v2701
        %s2704 = scalar_lea.vmem %s13, 32
        %v2705 = vld [vmem:[%s2704] sm:$0xff]
        %v2706 = vld [vmem:[%s2704 + $0x8] sm:$0xff]
        %v2707 = vld [vmem:[%s2704 + $0x10] sm:$0xff]
        %v2708 = vld [vmem:[%s2704 + $0x18] sm:$0xff]
        %s2709 = scalar_lea.vmem %s14, 1
        %v2710 = vld [vmem:[%s2709] sm:$0x1]
        %v2712 = vlaneseq
        %v2713 = vshrl.u32 %v2712, 7
        %v2714 = vsub.s32 0, %v2713
        %v2715 = vrot.slane %v2710, %v2714
        %v2718 = vsel %vm719, %v2703, 0
        %2720 = vmatprep.subr.mxu0 0.0
        %2721 = vmatpush1.msra.mxu0 %v2705
        %2722 = vmatprep.subr.mxu0 0.0
        %2723 = vmatpush1.msra.mxu0 %v2706
        %2724 = vmatprep.subr.mxu0 0.0
        %2725 = vmatpush1.msra.mxu0 %v2707
        %2726 = vmatprep.subr.mxu0 0.0
        %2727 = vmatpush1.msra.mxu0 %v2708
        %2728 = vmatprep.subr.mxu0 0.0
        %2729 = vmatpush1.msra.mxu0 0.0
        %2730 = vmatprep.subr.mxu0 0.0
        %2731 = vmatpush1.msra.mxu0 0.0
        %2732 = vmatprep.subr.mxu0 0.0
        %2733 = vmatpush1.msra.mxu0 0.0
        %2734 = vmatprep.subr.mxu0 0.0
        %2735 = vmatpush1.msra.mxu0 0.0
        %2736 = vmatprep.subr.mxu0 0.0
        %2737 = vmatpush1.msra.mxu0 0.0
        %2738 = vmatprep.subr.mxu0 0.0
        %2739 = vmatpush1.msra.mxu0 0.0
        %2740 = vmatprep.subr.mxu0 0.0
        %2741 = vmatpush1.msra.mxu0 0.0
        %2742 = vmatprep.subr.mxu0 0.0
        %2743 = vmatpush1.msra.mxu0 0.0
        %2744 = vmatprep.subr.mxu0 0.0
        %2745 = vmatpush1.msra.mxu0 0.0
        %2746 = vmatprep.subr.mxu0 0.0
        %2747 = vmatpush1.msra.mxu0 0.0
        %2748 = vmatprep.subr.mxu0 0.0
        %2749 = vmatpush1.msra.mxu0 0.0
        %2750 = vmatprep.subr.mxu0 0.0
        %2751 = vmatpush1.msra.mxu0 0.0
        %2752 = vmatprep.subr.mxu0 0.0
        %2753 = vmatpush1.msra.mxu0 0.0
        %2754 = vmatprep.subr.mxu0 0.0
        %2755 = vmatpush1.msra.mxu0 0.0
        %2756 = vmatprep.subr.mxu0 0.0
        %2757 = vmatpush1.msra.mxu0 0.0
        %2758 = vmatprep.subr.mxu0 0.0
        %2759 = vmatpush1.msra.mxu0 0.0
        %2760 = vmatprep.subr.mxu0 0.0
        %2761 = vmatpush1.msra.mxu0 0.0
        %2762 = vmatprep.subr.mxu0 0.0
        %2763 = vmatpush1.msra.mxu0 0.0
        %2764 = vmatprep.subr.mxu0 0.0
        %2765 = vmatpush1.msra.mxu0 0.0
        %2766 = vmatprep.subr.mxu0 0.0
        %2767 = vmatpush1.msra.mxu0 0.0
        %2768 = vmatprep.subr.mxu0 0.0
        %2769 = vmatpush1.msra.mxu0 0.0
        %2770 = vmatprep.subr.mxu0 0.0
        %2771 = vmatpush1.msra.mxu0 0.0
        %2772 = vmatprep.subr.mxu0 0.0
        %2773 = vmatpush1.msra.mxu0 0.0
        %2774 = vmatprep.subr.mxu0 0.0
        %2775 = vmatpush1.msra.mxu0 0.0
        %2776 = vmatprep.subr.mxu0 0.0
        %2777 = vmatpush1.msra.mxu0 0.0
        %2778 = vmatprep.subr.mxu0 0.0
        %2779 = vmatpush1.msra.mxu0 0.0
        %2780 = vmatprep.subr.mxu0 0.0
        %2781 = vmatpush1.msra.mxu0 0.0
        %2782 = vmatprep.subr.mxu0 0.0
        %2783 = vmatpush1.msra.mxu0 0.0
        %2784 = vmatprep.mubr.f32.mxu0 0.0
        %2785 = vmatmul.mubr.f32.gmra.mrb[0].mxu0 %v2718
        %v2786 = vpop.f32.mrb[0].mxu0
        %v2787 = vadd.f32 %v2715, %v2786
        %v2788 = vpop.f32.mrb[0].mxu0
        %2789 = vdwg.mxu0
        %v2790 = vmul.f32 %v2787, 1.702
        %v2791 = vxor.u32 %v2790, 2147483648
        %v2792 = vmul.f32 %v2791, 1.442695
        %v2793 = vpow.pop %v2792
        %v2794 = vadd.f32 %v2793, 1.0
        %v2795 = vrcp.pop %v2794
        %v2796 = vmul.f32 1.0, %v2795
        %v2797 = vmul.f32 %v2787, %v2796
        %s2798 = scalar_lea.vmem %s15, 64
        %v2799 = vld [vmem:[%s2798] sm:$0xff]
        %v2800 = vld [vmem:[%s2798 + $0x8] sm:$0xff]
        %v2801 = vld [vmem:[%s2798 + $0x10] sm:$0xff]
        %v2802 = vld [vmem:[%s2798 + $0x18] sm:$0xff]
        %v2803 = vld [vmem:[%s2798 + $0x20] sm:$0xff]
        %v2804 = vld [vmem:[%s2798 + $0x28] sm:$0xff]
        %v2805 = vld [vmem:[%s2798 + $0x30] sm:$0xff]
        %v2806 = vld [vmem:[%s2798 + $0x38] sm:$0xff]
        %v2808 = vsel %vm574, %v2797, 0
        %2810 = vmatprep.subr.mxu0 0.0
        %2811 = vmatpush1.msra.mxu0 %v2799
        %2812 = vmatprep.subr.mxu0 0.0
        %2813 = vmatpush1.msra.mxu0 %v2800
        %2814 = vmatprep.subr.mxu0 0.0
        %2815 = vmatpush1.msra.mxu0 %v2801
        %2816 = vmatprep.subr.mxu0 0.0
        %2817 = vmatpush1.msra.mxu0 %v2802
        %2818 = vmatprep.subr.mxu0 0.0
        %2819 = vmatpush1.msra.mxu0 %v2803
        %2820 = vmatprep.subr.mxu0 0.0
        %2821 = vmatpush1.msra.mxu0 %v2804
        %2822 = vmatprep.subr.mxu0 0.0
        %2823 = vmatpush1.msra.mxu0 %v2805
        %2824 = vmatprep.subr.mxu0 0.0
        %2825 = vmatpush1.msra.mxu0 %v2806
        %2826 = vmatprep.subr.mxu0 0.0
        %2827 = vmatpush1.msra.mxu0 0.0
        %2828 = vmatprep.subr.mxu0 0.0
        %2829 = vmatpush1.msra.mxu0 0.0
        %2830 = vmatprep.subr.mxu0 0.0
        %2831 = vmatpush1.msra.mxu0 0.0
        %2832 = vmatprep.subr.mxu0 0.0
        %2833 = vmatpush1.msra.mxu0 0.0
        %2834 = vmatprep.subr.mxu0 0.0
        %2835 = vmatpush1.msra.mxu0 0.0
        %2836 = vmatprep.subr.mxu0 0.0
        %2837 = vmatpush1.msra.mxu0 0.0
        %2838 = vmatprep.subr.mxu0 0.0
        %2839 = vmatpush1.msra.mxu0 0.0
        %2840 = vmatprep.subr.mxu0 0.0
        %2841 = vmatpush1.msra.mxu0 0.0
        %2842 = vmatprep.subr.mxu0 0.0
        %2843 = vmatpush1.msra.mxu0 0.0
        %2844 = vmatprep.subr.mxu0 0.0
        %2845 = vmatpush1.msra.mxu0 0.0
        %2846 = vmatprep.subr.mxu0 0.0
        %2847 = vmatpush1.msra.mxu0 0.0
        %2848 = vmatprep.subr.mxu0 0.0
        %2849 = vmatpush1.msra.mxu0 0.0
        %2850 = vmatprep.subr.mxu0 0.0
        %2851 = vmatpush1.msra.mxu0 0.0
        %2852 = vmatprep.subr.mxu0 0.0
        %2853 = vmatpush1.msra.mxu0 0.0
        %2854 = vmatprep.subr.mxu0 0.0
        %2855 = vmatpush1.msra.mxu0 0.0
        %2856 = vmatprep.subr.mxu0 0.0
        %2857 = vmatpush1.msra.mxu0 0.0
        %2858 = vmatprep.subr.mxu0 0.0
        %2859 = vmatpush1.msra.mxu0 0.0
        %2860 = vmatprep.subr.mxu0 0.0
        %2861 = vmatpush1.msra.mxu0 0.0
        %2862 = vmatprep.subr.mxu0 0.0
        %2863 = vmatpush1.msra.mxu0 0.0
        %2864 = vmatprep.subr.mxu0 0.0
        %2865 = vmatpush1.msra.mxu0 0.0
        %2866 = vmatprep.subr.mxu0 0.0
        %2867 = vmatpush1.msra.mxu0 0.0
        %2868 = vmatprep.subr.mxu0 0.0
        %2869 = vmatpush1.msra.mxu0 0.0
        %2870 = vmatprep.subr.mxu0 0.0
        %2871 = vmatpush1.msra.mxu0 0.0
        %2872 = vmatprep.subr.mxu0 0.0
        %2873 = vmatpush1.msra.mxu0 0.0
        %2874 = vmatprep.mubr.f32.mxu0 0.0
        %2875 = vmatmul.mubr.f32.gmra.mrb[0].mxu0 %v2808
        %v2876 = vpop.f32.mrb[0].mxu0
        %v2877 = vadd.f32 0.0, %v2876
        %v2878 = vpop.f32.mrb[0].mxu0
        %2879 = vdwg.mxu0
        %v2880 = vadd.f32 %v2672, %v2877
        %s2881 = scalar_lea.vmem %s16, 1
        %v2882 = vld [vmem:[%s2881] sm:$0x1]
        %v2884 = vlaneseq
        %v2885 = vshrl.u32 %v2884, 7
        %v2886 = vsub.s32 0, %v2885
        %v2887 = vrot.slane %v2882, %v2886
        %v2889 = vadd.f32 %v2880, %v2887
        %vm2890 = vcmask 258049
        %2891 = vst.msk [vmem:[%s541 - $0x1] sm:$0x1e] %vm2890, %v2889
        %s2892 = sand.u32 %s401, 1
        %s2893 = scalar_lea.sflag [#allocation3], %s2892
        %s2894 = sand.u32 %s401, 1
        %s2895 = smul.addr %s2894, 4
        %s2896 = scalar_lea.vmem [#allocation2], %s2895
        // Predicated region
        $region89: #{tpu_custom_call.1} parent=87 // pred_check
          %p2897 = pneg %p411
        $region90: #{tpu_custom_call.1} parent=87 // pred_check_branch
          %2899 = sbr.rel (%p2897) target = $region92
        $region91: #{tpu_custom_call.1} parent=87 // pred_region
          %s2901 = ssub.s32 64, 64
          %2902 = vsyncadd %s2893, %s2901
          %s2903 = smul.addr %s31, 64
          %s2904 = scalar_lea.hbm %s17, %s2903
          %s2906 = sshll.u32 %s2896, 4
          %s2907 = int_to_ptr.vmem [resolvable:$true] %s2906
          %2909 = dma.vmem_to_hbm [thread:$0]  %s2907, 64, %s2904, %s2893
        $region92: #{tpu_custom_call.1} parent=87 // pred_fallthru
          _
      $region88: #{tpu_custom_call.1} parent=5 // pred_fallthru
        _
      %p2910 = scmp.le.s32.totalorder 2, %s26
      // Predicated region
      $region93: #{tpu_custom_call.1} parent=5 // pred_check
        %p2911 = pneg %p2910
      $region94: #{tpu_custom_call.1} parent=5 // pred_check_branch
        %2913 = sbr.rel (%p2911) target = $region96
      $region95: #{tpu_custom_call.1} parent=5 // pred_region
        %s2914 = ssub.s32 %s26, 2
        // Predicated region
        $region97: #{tpu_custom_call.1} parent=95 // pred_check
          %p2915 = pneg %p417
        $region98: #{tpu_custom_call.1} parent=95 // pred_check_branch
          %2917 = sbr.rel (%p2915) target = $region100
        $region99: #{tpu_custom_call.1} parent=95 // pred_region
          %s2918 = sand.u32 %s402, 1
          %s2919 = scalar_lea.sflag [#allocation3], %s2918
          %s2920 = sand.u32 %s402, 1
          %s2921 = smul.addr %s2920, 4
          %s2922 = scalar_lea.vmem [#allocation2], %s2921
          %2923 = dma.done %s2919, 64
        $region100: #{tpu_custom_call.1} parent=95 // pred_fallthru
          _
      $region96: #{tpu_custom_call.1} parent=5 // pred_fallthru
        _
    $region6: #{tpu_custom_call.1} parent=1 // loop_footer
      %s30 = sadd.s32 1, %s26
    $region7: #{tpu_custom_call.1} parent=1 // loop_footer_branch
      %25 = sbr.rel target = $region3
    $region8: #{tpu_custom_call.1} parent=1 // loop_exit
      _
    %2924 = vsyncpa [#allocation3], 1
    %s2925 = scalar_lea.sflag [#allocation3], 1
    %2926 = vsyncpa %s2925, 1

</llo_original>
